<compile_context>
chip_gen: v7x
topology: tpu7x:2x2x1
jax: 0.10.0
libtpu: 0.0.40
codegen_flags: <defaults>
</compile_context>

<pallas_src>
import functools

import jax
import jax.numpy as jnp
from jax.experimental import pallas as pl
from jax.experimental.pallas import tpu as pltpu


def _census_loss_kernel(g0_ref, g1_ref, out_ref, acc_ref, *, H, W, patch, inv_denom):
    """g0_ref/g1_ref: (1, H+2p, W+2p) padded grayscale frames for one batch item."""
    b = pl.program_id(0)
    pad = patch // 2

    @pl.when(b == 0)
    def _():
        acc_ref[...] = jnp.zeros_like(acc_ref)

    # Center (unshifted) grayscale values.
    c0 = g0_ref[0, pad:pad + H, pad:pad + W]
    c1 = g1_ref[0, pad:pad + H, pad:pad + W]

    ham = jnp.zeros((H, W), jnp.float32)
    # Statically unrolled loop over the 49 patch offsets (the census "conv").
    for k in range(patch * patch):
        dy = k // patch
        dx = k % patch
        p0 = g0_ref[0, dy:dy + H, dx:dx + W]
        p1 = g1_ref[0, dy:dy + H, dx:dx + W]
        d0 = p0 - c0
        d1 = p1 - c1
        # census transform: d / sqrt(0.81 + d^2)  ->  d * rsqrt(0.81 + d^2)
        t0 = d0 * jax.lax.rsqrt(0.81 + d0 * d0)
        t1 = d1 * jax.lax.rsqrt(0.81 + d1 * d1)
        dt = t0 - t1
        dd = dt * dt
        ham = ham + dd / (0.1 + dd)

    # Accumulate across batch in a vreg-shaped VMEM scratch (VPU add only).
    acc_ref[...] += ham

    @pl.when(b == pl.num_programs(0) - 1)
    def _():
        # valid_mask(_, padding=1) zeroes a 1-pixel border -> sum interior only.
        interior = acc_ref[1:H - 1, 1:W - 1]
        out_ref[...] = jnp.sum(interior).reshape(1, 1) * inv_denom


def census_loss(x0, x1, patch_size=7, to_grayscale=False):
    assert x0.shape == x1.shape
    B, C, H, W = x0.shape
    pad = patch_size // 2
    Hp, Wp = H + 2 * pad, W + 2 * pad

    def gray_pad(x):
        x = x.astype(jnp.float32)
        if to_grayscale:
            g = 0.2989 * x[:, 0] + 0.587 * x[:, 1] + 0.114 * x[:, 2]
        else:
            g = jnp.mean(x, axis=1)
        # zero padding (matches conv2d padding + census_transform semantics)
        return jnp.pad(g, ((0, 0), (pad, pad), (pad, pad)))

    g0 = gray_pad(x0)  # (B, Hp, Wp)
    g1 = gray_pad(x1)

    # loss = sum_{b, interior(y,x), k} dn / (49 * B * H * W)
    inv_denom = 1.0 / float(patch_size * patch_size * B * H * W)

    kernel = functools.partial(
        _census_loss_kernel, H=H, W=W, patch=patch_size, inv_denom=inv_denom
    )

    out = pl.pallas_call(
        kernel,
        out_shape=jax.ShapeDtypeStruct((1, 1), jnp.float32),
        grid_spec=pltpu.PrefetchScalarGridSpec(
            num_scalar_prefetch=0,
            grid=(B,),
            in_specs=[
                pl.BlockSpec((1, Hp, Wp), lambda b: (b, 0, 0)),
                pl.BlockSpec((1, Hp, Wp), lambda b: (b, 0, 0)),
            ],
            out_specs=pl.BlockSpec((1, 1), lambda b: (0, 0)),
            scratch_shapes=[pltpu.VMEM((H, W), jnp.float32)],
        ),
        compiler_params=pltpu.CompilerParams(
            dimension_semantics=("arbitrary",),  # batch axis feeds one accumulator
        ),
    )(g0, g1)

    return out[0, 0]


def census_loss_ref(x0, x1, patch_size=7, to_grayscale=False):
    """Pure-JAX reference mirroring the PyTorch module."""
    pad = patch_size // 2

    def gray(x):
        x = x.astype(jnp.float32)
        if to_grayscale:
            g = 0.2989 * x[:, 0] + 0.587 * x[:, 1] + 0.114 * x[:, 2]
            return g[:, None]
        return jnp.mean(x, axis=1, keepdims=True)

    def census(x):
        B, _, H, W = x.shape
        xp = jnp.pad(x, ((0, 0), (0, 0), (pad, pad), (pad, pad)))
        patches = jnp.stack(
            [xp[:, 0, dy:dy + H, dx:dx + W]
             for dy in range(patch_size) for dx in range(patch_size)],
            axis=1,
        )
        t = patches - x
        return t / jnp.sqrt(0.81 + t * t)

    t0 = census(gray(x0))
    t1 = census(gray(x1))
    d = (t0 - t1) ** 2
    ham = jnp.mean(d / (0.1 + d), axis=1, keepdims=True)  # (B,1,H,W)
    B, _, H, W = ham.shape
    mask = jnp.zeros((H, W), jnp.float32).at[1:H - 1, 1:W - 1].set(1.0)
    return jnp.mean(ham * mask[None, None])


if __name__ == "__main__":
    key = jax.random.PRNGKey(0)
    k0, k1 = jax.random.split(key)
    # NCHW image-like inputs, consistent with the PyTorch module's usage.
    x0 = jax.random.uniform(k0, (2, 3, 16, 16), dtype=jnp.float32)
    x1 = jax.random.uniform(k1, (2, 3, 16, 16), dtype=jnp.float32)

    loss = census_loss(x0, x1)
    jax.block_until_ready(loss)

    ref = census_loss_ref(x0, x1)
    assert jnp.allclose(loss, ref, rtol=1e-4, atol=1e-5), (loss, ref)
    print("KERNEL_OK")
</pallas_src>

<mosaic_0001>
module attributes {stable_mosaic.version = 11 : i64} {
  func.func @_census_loss_kernel(%arg0: i32, %arg1: memref<1x22x22xf32, #tpu.memory_space<vmem>>, %arg2: memref<1x22x22xf32, #tpu.memory_space<vmem>>, %arg3: memref<1x1xf32, #tpu.memory_space<vmem>>, %arg4: memref<16x16xf32, #tpu.memory_space<vmem>>) attributes {dimension_semantics = [#tpu.dimension_semantics<arbitrary>], iteration_bounds = array<i64: 2>, scalar_prefetch = 0 : i64, scratch_operands = 1 : i64, tpu.core_type = #tpu.core_type<tc>, window_params = [{transform_indices = @transform_0, window_bounds = array<i64: 1, 22, 22>}, {transform_indices = @transform_1, window_bounds = array<i64: 1, 22, 22>}, {pipeline_mode = #tpu.pipeline_mode<synchronous>, transform_indices = @transform_2, window_bounds = array<i64: 1, 1>}]} {
    %c0_i32 = arith.constant 0 : i32
    %0 = arith.cmpi eq, %arg0, %c0_i32 : i32
    %1 = arith.extui %0 : i1 to i32
    %c0_i32_0 = arith.constant 0 : i32
    %2 = arith.cmpi ne, %1, %c0_i32_0 : i32
    scf.if %2 {
      %cst_446 = arith.constant 0.000000e+00 : f32
      %1092 = vector.broadcast %cst_446 : f32 to vector<16x16xf32>
      %c0_447 = arith.constant 0 : index
      %c0_448 = arith.constant 0 : index
      %1093 = vector.load %arg4[%c0_447, %c0_448] : memref<16x16xf32, #tpu.memory_space<vmem>>, vector<16x16xf32>
      tpu.vector_store %arg4[%c0_447, %c0_448], %1092 {strides = array<i32>} : memref<16x16xf32, #tpu.memory_space<vmem>>, vector<16x16xf32>,
    } else {
    }
    %c0 = arith.constant 0 : index
    %c3 = arith.constant 3 : index
    %c3_1 = arith.constant 3 : index
    %3 = vector.load %arg1[%c0, %c3, %c3_1] : memref<1x22x22xf32, #tpu.memory_space<vmem>>, vector<1x16x16xf32>
    %4 = vector.shape_cast %3 : vector<1x16x16xf32> to vector<16x16xf32>
    %c0_2 = arith.constant 0 : index
    %c3_3 = arith.constant 3 : index
    %c3_4 = arith.constant 3 : index
    %5 = vector.load %arg2[%c0_2, %c3_3, %c3_4] : memref<1x22x22xf32, #tpu.memory_space<vmem>>, vector<1x16x16xf32>
    %6 = vector.shape_cast %5 : vector<1x16x16xf32> to vector<16x16xf32>
    %cst = arith.constant 0.000000e+00 : f32
    %7 = vector.broadcast %cst : f32 to vector<16x16xf32>
    %c0_5 = arith.constant 0 : index
    %c0_6 = arith.constant 0 : index
    %c0_7 = arith.constant 0 : index
    %8 = vector.load %arg1[%c0_5, %c0_6, %c0_7] : memref<1x22x22xf32, #tpu.memory_space<vmem>>, vector<1x16x16xf32>
    %9 = vector.shape_cast %8 : vector<1x16x16xf32> to vector<16x16xf32>
    %c0_8 = arith.constant 0 : index
    %c0_9 = arith.constant 0 : index
    %c0_10 = arith.constant 0 : index
    %10 = vector.load %arg2[%c0_8, %c0_9, %c0_10] : memref<1x22x22xf32, #tpu.memory_space<vmem>>, vector<1x16x16xf32>
    %11 = vector.shape_cast %10 : vector<1x16x16xf32> to vector<16x16xf32>
    %12 = arith.subf %9, %4 : vector<16x16xf32>
    %13 = arith.subf %11, %6 : vector<16x16xf32>
    %14 = arith.mulf %12, %12 : vector<16x16xf32>
    %cst_11 = arith.constant 8.100000e-01 : f32
    %15 = vector.broadcast %cst_11 : f32 to vector<16x16xf32>
    %16 = arith.addf %15, %14 : vector<16x16xf32>
    %17 = math.rsqrt %16 : vector<16x16xf32>
    %18 = arith.mulf %12, %17 : vector<16x16xf32>
    %19 = arith.mulf %13, %13 : vector<16x16xf32>
    %cst_12 = arith.constant 8.100000e-01 : f32
    %20 = vector.broadcast %cst_12 : f32 to vector<16x16xf32>
    %21 = arith.addf %20, %19 : vector<16x16xf32>
    %22 = math.rsqrt %21 : vector<16x16xf32>
    %23 = arith.mulf %13, %22 : vector<16x16xf32>
    %24 = arith.subf %18, %23 : vector<16x16xf32>
    %25 = arith.mulf %24, %24 : vector<16x16xf32>
    %cst_13 = arith.constant 1.000000e-01 : f32
    %26 = vector.broadcast %cst_13 : f32 to vector<16x16xf32>
    %27 = arith.addf %26, %25 : vector<16x16xf32>
    %28 = arith.divf %25, %27 : vector<16x16xf32>
    %29 = arith.addf %7, %28 : vector<16x16xf32>
    %c0_14 = arith.constant 0 : index
    %c0_15 = arith.constant 0 : index
    %c1 = arith.constant 1 : index
    %30 = vector.load %arg1[%c0_14, %c0_15, %c1] : memref<1x22x22xf32, #tpu.memory_space<vmem>>, vector<1x16x16xf32>
    %31 = vector.shape_cast %30 : vector<1x16x16xf32> to vector<16x16xf32>
    %c0_16 = arith.constant 0 : index
    %c0_17 = arith.constant 0 : index
    %c1_18 = arith.constant 1 : index
    %32 = vector.load %arg2[%c0_16, %c0_17, %c1_18] : memref<1x22x22xf32, #tpu.memory_space<vmem>>, vector<1x16x16xf32>
    %33 = vector.shape_cast %32 : vector<1x16x16xf32> to vector<16x16xf32>
    %34 = arith.subf %31, %4 : vector<16x16xf32>
    %35 = arith.subf %33, %6 : vector<16x16xf32>
    %36 = arith.mulf %34, %34 : vector<16x16xf32>
    %cst_19 = arith.constant 8.100000e-01 : f32
    %37 = vector.broadcast %cst_19 : f32 to vector<16x16xf32>
    %38 = arith.addf %37, %36 : vector<16x16xf32>
    %39 = math.rsqrt %38 : vector<16x16xf32>
    %40 = arith.mulf %34, %39 : vector<16x16xf32>
    %41 = arith.mulf %35, %35 : vector<16x16xf32>
    %cst_20 = arith.constant 8.100000e-01 : f32
    %42 = vector.broadcast %cst_20 : f32 to vector<16x16xf32>
    %43 = arith.addf %42, %41 : vector<16x16xf32>
    %44 = math.rsqrt %43 : vector<16x16xf32>
    %45 = arith.mulf %35, %44 : vector<16x16xf32>
    %46 = arith.subf %40, %45 : vector<16x16xf32>
    %47 = arith.mulf %46, %46 : vector<16x16xf32>
    %cst_21 = arith.constant 1.000000e-01 : f32
    %48 = vector.broadcast %cst_21 : f32 to vector<16x16xf32>
    %49 = arith.addf %48, %47 : vector<16x16xf32>
    %50 = arith.divf %47, %49 : vector<16x16xf32>
    %51 = arith.addf %29, %50 : vector<16x16xf32>
    %c0_22 = arith.constant 0 : index
    %c0_23 = arith.constant 0 : index
    %c2 = arith.constant 2 : index
    %52 = vector.load %arg1[%c0_22, %c0_23, %c2] : memref<1x22x22xf32, #tpu.memory_space<vmem>>, vector<1x16x16xf32>
    %53 = vector.shape_cast %52 : vector<1x16x16xf32> to vector<16x16xf32>
    %c0_24 = arith.constant 0 : index
    %c0_25 = arith.constant 0 : index
    %c2_26 = arith.constant 2 : index
    %54 = vector.load %arg2[%c0_24, %c0_25, %c2_26] : memref<1x22x22xf32, #tpu.memory_space<vmem>>, vector<1x16x16xf32>
    %55 = vector.shape_cast %54 : vector<1x16x16xf32> to vector<16x16xf32>
    %56 = arith.subf %53, %4 : vector<16x16xf32>
    %57 = arith.subf %55, %6 : vector<16x16xf32>
    %58 = arith.mulf %56, %56 : vector<16x16xf32>
    %cst_27 = arith.constant 8.100000e-01 : f32
    %59 = vector.broadcast %cst_27 : f32 to vector<16x16xf32>
    %60 = arith.addf %59, %58 : vector<16x16xf32>
    %61 = math.rsqrt %60 : vector<16x16xf32>
    %62 = arith.mulf %56, %61 : vector<16x16xf32>
    %63 = arith.mulf %57, %57 : vector<16x16xf32>
    %cst_28 = arith.constant 8.100000e-01 : f32
    %64 = vector.broadcast %cst_28 : f32 to vector<16x16xf32>
    %65 = arith.addf %64, %63 : vector<16x16xf32>
    %66 = math.rsqrt %65 : vector<16x16xf32>
    %67 = arith.mulf %57, %66 : vector<16x16xf32>
    %68 = arith.subf %62, %67 : vector<16x16xf32>
    %69 = arith.mulf %68, %68 : vector<16x16xf32>
    %cst_29 = arith.constant 1.000000e-01 : f32
    %70 = vector.broadcast %cst_29 : f32 to vector<16x16xf32>
    %71 = arith.addf %70, %69 : vector<16x16xf32>
    %72 = arith.divf %69, %71 : vector<16x16xf32>
    %73 = arith.addf %51, %72 : vector<16x16xf32>
    %c0_30 = arith.constant 0 : index
    %c0_31 = arith.constant 0 : index
    %c3_32 = arith.constant 3 : index
    %74 = vector.load %arg1[%c0_30, %c0_31, %c3_32] : memref<1x22x22xf32, #tpu.memory_space<vmem>>, vector<1x16x16xf32>
    %75 = vector.shape_cast %74 : vector<1x16x16xf32> to vector<16x16xf32>
    %c0_33 = arith.constant 0 : index
    %c0_34 = arith.constant 0 : index
    %c3_35 = arith.constant 3 : index
    %76 = vector.load %arg2[%c0_33, %c0_34, %c3_35] : memref<1x22x22xf32, #tpu.memory_space<vmem>>, vector<1x16x16xf32>
    %77 = vector.shape_cast %76 : vector<1x16x16xf32> to vector<16x16xf32>
    %78 = arith.subf %75, %4 : vector<16x16xf32>
    %79 = arith.subf %77, %6 : vector<16x16xf32>
    %80 = arith.mulf %78, %78 : vector<16x16xf32>
    %cst_36 = arith.constant 8.100000e-01 : f32
    %81 = vector.broadcast %cst_36 : f32 to vector<16x16xf32>
    %82 = arith.addf %81, %80 : vector<16x16xf32>
    %83 = math.rsqrt %82 : vector<16x16xf32>
    %84 = arith.mulf %78, %83 : vector<16x16xf32>
    %85 = arith.mulf %79, %79 : vector<16x16xf32>
    %cst_37 = arith.constant 8.100000e-01 : f32
    %86 = vector.broadcast %cst_37 : f32 to vector<16x16xf32>
    %87 = arith.addf %86, %85 : vector<16x16xf32>
    %88 = math.rsqrt %87 : vector<16x16xf32>
    %89 = arith.mulf %79, %88 : vector<16x16xf32>
    %90 = arith.subf %84, %89 : vector<16x16xf32>
    %91 = arith.mulf %90, %90 : vector<16x16xf32>
    %cst_38 = arith.constant 1.000000e-01 : f32
    %92 = vector.broadcast %cst_38 : f32 to vector<16x16xf32>
    %93 = arith.addf %92, %91 : vector<16x16xf32>
    %94 = arith.divf %91, %93 : vector<16x16xf32>
    %95 = arith.addf %73, %94 : vector<16x16xf32>
    %c0_39 = arith.constant 0 : index
    %c0_40 = arith.constant 0 : index
    %c4 = arith.constant 4 : index
    %96 = vector.load %arg1[%c0_39, %c0_40, %c4] : memref<1x22x22xf32, #tpu.memory_space<vmem>>, vector<1x16x16xf32>
    %97 = vector.shape_cast %96 : vector<1x16x16xf32> to vector<16x16xf32>
    %c0_41 = arith.constant 0 : index
    %c0_42 = arith.constant 0 : index
    %c4_43 = arith.constant 4 : index
    %98 = vector.load %arg2[%c0_41, %c0_42, %c4_43] : memref<1x22x22xf32, #tpu.memory_space<vmem>>, vector<1x16x16xf32>
    %99 = vector.shape_cast %98 : vector<1x16x16xf32> to vector<16x16xf32>
    %100 = arith.subf %97, %4 : vector<16x16xf32>
    %101 = arith.subf %99, %6 : vector<16x16xf32>
    %102 = arith.mulf %100, %100 : vector<16x16xf32>
    %cst_44 = arith.constant 8.100000e-01 : f32
    %103 = vector.broadcast %cst_44 : f32 to vector<16x16xf32>
    %104 = arith.addf %103, %102 : vector<16x16xf32>
    %105 = math.rsqrt %104 : vector<16x16xf32>
    %106 = arith.mulf %100, %105 : vector<16x16xf32>
    %107 = arith.mulf %101, %101 : vector<16x16xf32>
    %cst_45 = arith.constant 8.100000e-01 : f32
    %108 = vector.broadcast %cst_45 : f32 to vector<16x16xf32>
    %109 = arith.addf %108, %107 : vector<16x16xf32>
    %110 = math.rsqrt %109 : vector<16x16xf32>
    %111 = arith.mulf %101, %110 : vector<16x16xf32>
    %112 = arith.subf %106, %111 : vector<16x16xf32>
    %113 = arith.mulf %112, %112 : vector<16x16xf32>
    %cst_46 = arith.constant 1.000000e-01 : f32
    %114 = vector.broadcast %cst_46 : f32 to vector<16x16xf32>
    %115 = arith.addf %114, %113 : vector<16x16xf32>
    %116 = arith.divf %113, %115 : vector<16x16xf32>
    %117 = arith.addf %95, %116 : vector<16x16xf32>
    %c0_47 = arith.constant 0 : index
    %c0_48 = arith.constant 0 : index
    %c5 = arith.constant 5 : index
    %118 = vector.load %arg1[%c0_47, %c0_48, %c5] : memref<1x22x22xf32, #tpu.memory_space<vmem>>, vector<1x16x16xf32>
    %119 = vector.shape_cast %118 : vector<1x16x16xf32> to vector<16x16xf32>
    %c0_49 = arith.constant 0 : index
    %c0_50 = arith.constant 0 : index
    %c5_51 = arith.constant 5 : index
    %120 = vector.load %arg2[%c0_49, %c0_50, %c5_51] : memref<1x22x22xf32, #tpu.memory_space<vmem>>, vector<1x16x16xf32>
    %121 = vector.shape_cast %120 : vector<1x16x16xf32> to vector<16x16xf32>
    %122 = arith.subf %119, %4 : vector<16x16xf32>
    %123 = arith.subf %121, %6 : vector<16x16xf32>
    %124 = arith.mulf %122, %122 : vector<16x16xf32>
    %cst_52 = arith.constant 8.100000e-01 : f32
    %125 = vector.broadcast %cst_52 : f32 to vector<16x16xf32>
    %126 = arith.addf %125, %124 : vector<16x16xf32>
    %127 = math.rsqrt %126 : vector<16x16xf32>
    %128 = arith.mulf %122, %127 : vector<16x16xf32>
    %129 = arith.mulf %123, %123 : vector<16x16xf32>
    %cst_53 = arith.constant 8.100000e-01 : f32
    %130 = vector.broadcast %cst_53 : f32 to vector<16x16xf32>
    %131 = arith.addf %130, %129 : vector<16x16xf32>
    %132 = math.rsqrt %131 : vector<16x16xf32>
    %133 = arith.mulf %123, %132 : vector<16x16xf32>
    %134 = arith.subf %128, %133 : vector<16x16xf32>
    %135 = arith.mulf %134, %134 : vector<16x16xf32>
    %cst_54 = arith.constant 1.000000e-01 : f32
    %136 = vector.broadcast %cst_54 : f32 to vector<16x16xf32>
    %137 = arith.addf %136, %135 : vector<16x16xf32>
    %138 = arith.divf %135, %137 : vector<16x16xf32>
    %139 = arith.addf %117, %138 : vector<16x16xf32>
    %c0_55 = arith.constant 0 : index
    %c0_56 = arith.constant 0 : index
    %c6 = arith.constant 6 : index
    %140 = vector.load %arg1[%c0_55, %c0_56, %c6] : memref<1x22x22xf32, #tpu.memory_space<vmem>>, vector<1x16x16xf32>
    %141 = vector.shape_cast %140 : vector<1x16x16xf32> to vector<16x16xf32>
    %c0_57 = arith.constant 0 : index
    %c0_58 = arith.constant 0 : index
    %c6_59 = arith.constant 6 : index
    %142 = vector.load %arg2[%c0_57, %c0_58, %c6_59] : memref<1x22x22xf32, #tpu.memory_space<vmem>>, vector<1x16x16xf32>
    %143 = vector.shape_cast %142 : vector<1x16x16xf32> to vector<16x16xf32>
    %144 = arith.subf %141, %4 : vector<16x16xf32>
    %145 = arith.subf %143, %6 : vector<16x16xf32>
    %146 = arith.mulf %144, %144 : vector<16x16xf32>
    %cst_60 = arith.constant 8.100000e-01 : f32
    %147 = vector.broadcast %cst_60 : f32 to vector<16x16xf32>
    %148 = arith.addf %147, %146 : vector<16x16xf32>
    %149 = math.rsqrt %148 : vector<16x16xf32>
    %150 = arith.mulf %144, %149 : vector<16x16xf32>
    %151 = arith.mulf %145, %145 : vector<16x16xf32>
    %cst_61 = arith.constant 8.100000e-01 : f32
    %152 = vector.broadcast %cst_61 : f32 to vector<16x16xf32>
    %153 = arith.addf %152, %151 : vector<16x16xf32>
    %154 = math.rsqrt %153 : vector<16x16xf32>
    %155 = arith.mulf %145, %154 : vector<16x16xf32>
    %156 = arith.subf %150, %155 : vector<16x16xf32>
    %157 = arith.mulf %156, %156 : vector<16x16xf32>
    %cst_62 = arith.constant 1.000000e-01 : f32
    %158 = vector.broadcast %cst_62 : f32 to vector<16x16xf32>
    %159 = arith.addf %158, %157 : vector<16x16xf32>
    %160 = arith.divf %157, %159 : vector<16x16xf32>
    %161 = arith.addf %139, %160 : vector<16x16xf32>
    %c0_63 = arith.constant 0 : index
    %c1_64 = arith.constant 1 : index
    %c0_65 = arith.constant 0 : index
    %162 = vector.load %arg1[%c0_63, %c1_64, %c0_65] : memref<1x22x22xf32, #tpu.memory_space<vmem>>, vector<1x16x16xf32>
    %163 = vector.shape_cast %162 : vector<1x16x16xf32> to vector<16x16xf32>
    %c0_66 = arith.constant 0 : index
    %c1_67 = arith.constant 1 : index
    %c0_68 = arith.constant 0 : index
    %164 = vector.load %arg2[%c0_66, %c1_67, %c0_68] : memref<1x22x22xf32, #tpu.memory_space<vmem>>, vector<1x16x16xf32>
    %165 = vector.shape_cast %164 : vector<1x16x16xf32> to vector<16x16xf32>
    %166 = arith.subf %163, %4 : vector<16x16xf32>
    %167 = arith.subf %165, %6 : vector<16x16xf32>
    %168 = arith.mulf %166, %166 : vector<16x16xf32>
    %cst_69 = arith.constant 8.100000e-01 : f32
    %169 = vector.broadcast %cst_69 : f32 to vector<16x16xf32>
    %170 = arith.addf %169, %168 : vector<16x16xf32>
    %171 = math.rsqrt %170 : vector<16x16xf32>
    %172 = arith.mulf %166, %171 : vector<16x16xf32>
    %173 = arith.mulf %167, %167 : vector<16x16xf32>
    %cst_70 = arith.constant 8.100000e-01 : f32
    %174 = vector.broadcast %cst_70 : f32 to vector<16x16xf32>
    %175 = arith.addf %174, %173 : vector<16x16xf32>
    %176 = math.rsqrt %175 : vector<16x16xf32>
    %177 = arith.mulf %167, %176 : vector<16x16xf32>
    %178 = arith.subf %172, %177 : vector<16x16xf32>
    %179 = arith.mulf %178, %178 : vector<16x16xf32>
    %cst_71 = arith.constant 1.000000e-01 : f32
    %180 = vector.broadcast %cst_71 : f32 to vector<16x16xf32>
    %181 = arith.addf %180, %179 : vector<16x16xf32>
    %182 = arith.divf %179, %181 : vector<16x16xf32>
    %183 = arith.addf %161, %182 : vector<16x16xf32>
    %c0_72 = arith.constant 0 : index
    %c1_73 = arith.constant 1 : index
    %c1_74 = arith.constant 1 : index
    %184 = vector.load %arg1[%c0_72, %c1_73, %c1_74] : memref<1x22x22xf32, #tpu.memory_space<vmem>>, vector<1x16x16xf32>
    %185 = vector.shape_cast %184 : vector<1x16x16xf32> to vector<16x16xf32>
    %c0_75 = arith.constant 0 : index
    %c1_76 = arith.constant 1 : index
    %c1_77 = arith.constant 1 : index
    %186 = vector.load %arg2[%c0_75, %c1_76, %c1_77] : memref<1x22x22xf32, #tpu.memory_space<vmem>>, vector<1x16x16xf32>
    %187 = vector.shape_cast %186 : vector<1x16x16xf32> to vector<16x16xf32>
    %188 = arith.subf %185, %4 : vector<16x16xf32>
    %189 = arith.subf %187, %6 : vector<16x16xf32>
    %190 = arith.mulf %188, %188 : vector<16x16xf32>
    %cst_78 = arith.constant 8.100000e-01 : f32
    %191 = vector.broadcast %cst_78 : f32 to vector<16x16xf32>
    %192 = arith.addf %191, %190 : vector<16x16xf32>
    %193 = math.rsqrt %192 : vector<16x16xf32>
    %194 = arith.mulf %188, %193 : vector<16x16xf32>
    %195 = arith.mulf %189, %189 : vector<16x16xf32>
    %cst_79 = arith.constant 8.100000e-01 : f32
    %196 = vector.broadcast %cst_79 : f32 to vector<16x16xf32>
    %197 = arith.addf %196, %195 : vector<16x16xf32>
    %198 = math.rsqrt %197 : vector<16x16xf32>
    %199 = arith.mulf %189, %198 : vector<16x16xf32>
    %200 = arith.subf %194, %199 : vector<16x16xf32>
    %201 = arith.mulf %200, %200 : vector<16x16xf32>
    %cst_80 = arith.constant 1.000000e-01 : f32
    %202 = vector.broadcast %cst_80 : f32 to vector<16x16xf32>
    %203 = arith.addf %202, %201 : vector<16x16xf32>
    %204 = arith.divf %201, %203 : vector<16x16xf32>
    %205 = arith.addf %183, %204 : vector<16x16xf32>
    %c0_81 = arith.constant 0 : index
    %c1_82 = arith.constant 1 : index
    %c2_83 = arith.constant 2 : index
    %206 = vector.load %arg1[%c0_81, %c1_82, %c2_83] : memref<1x22x22xf32, #tpu.memory_space<vmem>>, vector<1x16x16xf32>
    %207 = vector.shape_cast %206 : vector<1x16x16xf32> to vector<16x16xf32>
    %c0_84 = arith.constant 0 : index
    %c1_85 = arith.constant 1 : index
    %c2_86 = arith.constant 2 : index
    %208 = vector.load %arg2[%c0_84, %c1_85, %c2_86] : memref<1x22x22xf32, #tpu.memory_space<vmem>>, vector<1x16x16xf32>
    %209 = vector.shape_cast %208 : vector<1x16x16xf32> to vector<16x16xf32>
    %210 = arith.subf %207, %4 : vector<16x16xf32>
    %211 = arith.subf %209, %6 : vector<16x16xf32>
    %212 = arith.mulf %210, %210 : vector<16x16xf32>
    %cst_87 = arith.constant 8.100000e-01 : f32
    %213 = vector.broadcast %cst_87 : f32 to vector<16x16xf32>
    %214 = arith.addf %213, %212 : vector<16x16xf32>
    %215 = math.rsqrt %214 : vector<16x16xf32>
    %216 = arith.mulf %210, %215 : vector<16x16xf32>
    %217 = arith.mulf %211, %211 : vector<16x16xf32>
    %cst_88 = arith.constant 8.100000e-01 : f32
    %218 = vector.broadcast %cst_88 : f32 to vector<16x16xf32>
    %219 = arith.addf %218, %217 : vector<16x16xf32>
    %220 = math.rsqrt %219 : vector<16x16xf32>
    %221 = arith.mulf %211, %220 : vector<16x16xf32>
    %222 = arith.subf %216, %221 : vector<16x16xf32>
    %223 = arith.mulf %222, %222 : vector<16x16xf32>
    %cst_89 = arith.constant 1.000000e-01 : f32
    %224 = vector.broadcast %cst_89 : f32 to vector<16x16xf32>
    %225 = arith.addf %224, %223 : vector<16x16xf32>
    %226 = arith.divf %223, %225 : vector<16x16xf32>
    %227 = arith.addf %205, %226 : vector<16x16xf32>
    %c0_90 = arith.constant 0 : index
    %c1_91 = arith.constant 1 : index
    %c3_92 = arith.constant 3 : index
    %228 = vector.load %arg1[%c0_90, %c1_91, %c3_92] : memref<1x22x22xf32, #tpu.memory_space<vmem>>, vector<1x16x16xf32>
    %229 = vector.shape_cast %228 : vector<1x16x16xf32> to vector<16x16xf32>
    %c0_93 = arith.constant 0 : index
    %c1_94 = arith.constant 1 : index
    %c3_95 = arith.constant 3 : index
    %230 = vector.load %arg2[%c0_93, %c1_94, %c3_95] : memref<1x22x22xf32, #tpu.memory_space<vmem>>, vector<1x16x16xf32>
    %231 = vector.shape_cast %230 : vector<1x16x16xf32> to vector<16x16xf32>
    %232 = arith.subf %229, %4 : vector<16x16xf32>
    %233 = arith.subf %231, %6 : vector<16x16xf32>
    %234 = arith.mulf %232, %232 : vector<16x16xf32>
    %cst_96 = arith.constant 8.100000e-01 : f32
    %235 = vector.broadcast %cst_96 : f32 to vector<16x16xf32>
    %236 = arith.addf %235, %234 : vector<16x16xf32>
    %237 = math.rsqrt %236 : vector<16x16xf32>
    %238 = arith.mulf %232, %237 : vector<16x16xf32>
    %239 = arith.mulf %233, %233 : vector<16x16xf32>
    %cst_97 = arith.constant 8.100000e-01 : f32
    %240 = vector.broadcast %cst_97 : f32 to vector<16x16xf32>
    %241 = arith.addf %240, %239 : vector<16x16xf32>
    %242 = math.rsqrt %241 : vector<16x16xf32>
    %243 = arith.mulf %233, %242 : vector<16x16xf32>
    %244 = arith.subf %238, %243 : vector<16x16xf32>
    %245 = arith.mulf %244, %244 : vector<16x16xf32>
    %cst_98 = arith.constant 1.000000e-01 : f32
    %246 = vector.broadcast %cst_98 : f32 to vector<16x16xf32>
    %247 = arith.addf %246, %245 : vector<16x16xf32>
    %248 = arith.divf %245, %247 : vector<16x16xf32>
    %249 = arith.addf %227, %248 : vector<16x16xf32>
    %c0_99 = arith.constant 0 : index
    %c1_100 = arith.constant 1 : index
    %c4_101 = arith.constant 4 : index
    %250 = vector.load %arg1[%c0_99, %c1_100, %c4_101] : memref<1x22x22xf32, #tpu.memory_space<vmem>>, vector<1x16x16xf32>
    %251 = vector.shape_cast %250 : vector<1x16x16xf32> to vector<16x16xf32>
    %c0_102 = arith.constant 0 : index
    %c1_103 = arith.constant 1 : index
    %c4_104 = arith.constant 4 : index
    %252 = vector.load %arg2[%c0_102, %c1_103, %c4_104] : memref<1x22x22xf32, #tpu.memory_space<vmem>>, vector<1x16x16xf32>
    %253 = vector.shape_cast %252 : vector<1x16x16xf32> to vector<16x16xf32>
    %254 = arith.subf %251, %4 : vector<16x16xf32>
    %255 = arith.subf %253, %6 : vector<16x16xf32>
    %256 = arith.mulf %254, %254 : vector<16x16xf32>
    %cst_105 = arith.constant 8.100000e-01 : f32
    %257 = vector.broadcast %cst_105 : f32 to vector<16x16xf32>
    %258 = arith.addf %257, %256 : vector<16x16xf32>
    %259 = math.rsqrt %258 : vector<16x16xf32>
    %260 = arith.mulf %254, %259 : vector<16x16xf32>
    %261 = arith.mulf %255, %255 : vector<16x16xf32>
    %cst_106 = arith.constant 8.100000e-01 : f32
    %262 = vector.broadcast %cst_106 : f32 to vector<16x16xf32>
    %263 = arith.addf %262, %261 : vector<16x16xf32>
    %264 = math.rsqrt %263 : vector<16x16xf32>
    %265 = arith.mulf %255, %264 : vector<16x16xf32>
    %266 = arith.subf %260, %265 : vector<16x16xf32>
    %267 = arith.mulf %266, %266 : vector<16x16xf32>
    %cst_107 = arith.constant 1.000000e-01 : f32
    %268 = vector.broadcast %cst_107 : f32 to vector<16x16xf32>
    %269 = arith.addf %268, %267 : vector<16x16xf32>
    %270 = arith.divf %267, %269 : vector<16x16xf32>
    %271 = arith.addf %249, %270 : vector<16x16xf32>
    %c0_108 = arith.constant 0 : index
    %c1_109 = arith.constant 1 : index
    %c5_110 = arith.constant 5 : index
    %272 = vector.load %arg1[%c0_108, %c1_109, %c5_110] : memref<1x22x22xf32, #tpu.memory_space<vmem>>, vector<1x16x16xf32>
    %273 = vector.shape_cast %272 : vector<1x16x16xf32> to vector<16x16xf32>
    %c0_111 = arith.constant 0 : index
    %c1_112 = arith.constant 1 : index
    %c5_113 = arith.constant 5 : index
    %274 = vector.load %arg2[%c0_111, %c1_112, %c5_113] : memref<1x22x22xf32, #tpu.memory_space<vmem>>, vector<1x16x16xf32>
    %275 = vector.shape_cast %274 : vector<1x16x16xf32> to vector<16x16xf32>
    %276 = arith.subf %273, %4 : vector<16x16xf32>
    %277 = arith.subf %275, %6 : vector<16x16xf32>
    %278 = arith.mulf %276, %276 : vector<16x16xf32>
    %cst_114 = arith.constant 8.100000e-01 : f32
    %279 = vector.broadcast %cst_114 : f32 to vector<16x16xf32>
    %280 = arith.addf %279, %278 : vector<16x16xf32>
    %281 = math.rsqrt %280 : vector<16x16xf32>
    %282 = arith.mulf %276, %281 : vector<16x16xf32>
    %283 = arith.mulf %277, %277 : vector<16x16xf32>
    %cst_115 = arith.constant 8.100000e-01 : f32
    %284 = vector.broadcast %cst_115 : f32 to vector<16x16xf32>
    %285 = arith.addf %284, %283 : vector<16x16xf32>
    %286 = math.rsqrt %285 : vector<16x16xf32>
    %287 = arith.mulf %277, %286 : vector<16x16xf32>
    %288 = arith.subf %282, %287 : vector<16x16xf32>
    %289 = arith.mulf %288, %288 : vector<16x16xf32>
    %cst_116 = arith.constant 1.000000e-01 : f32
    %290 = vector.broadcast %cst_116 : f32 to vector<16x16xf32>
    %291 = arith.addf %290, %289 : vector<16x16xf32>
    %292 = arith.divf %289, %291 : vector<16x16xf32>
    %293 = arith.addf %271, %292 : vector<16x16xf32>
    %c0_117 = arith.constant 0 : index
    %c1_118 = arith.constant 1 : index
    %c6_119 = arith.constant 6 : index
    %294 = vector.load %arg1[%c0_117, %c1_118, %c6_119] : memref<1x22x22xf32, #tpu.memory_space<vmem>>, vector<1x16x16xf32>
    %295 = vector.shape_cast %294 : vector<1x16x16xf32> to vector<16x16xf32>
    %c0_120 = arith.constant 0 : index
    %c1_121 = arith.constant 1 : index
    %c6_122 = arith.constant 6 : index
    %296 = vector.load %arg2[%c0_120, %c1_121, %c6_122] : memref<1x22x22xf32, #tpu.memory_space<vmem>>, vector<1x16x16xf32>
    %297 = vector.shape_cast %296 : vector<1x16x16xf32> to vector<16x16xf32>
    %298 = arith.subf %295, %4 : vector<16x16xf32>
    %299 = arith.subf %297, %6 : vector<16x16xf32>
    %300 = arith.mulf %298, %298 : vector<16x16xf32>
    %cst_123 = arith.constant 8.100000e-01 : f32
    %301 = vector.broadcast %cst_123 : f32 to vector<16x16xf32>
    %302 = arith.addf %301, %300 : vector<16x16xf32>
    %303 = math.rsqrt %302 : vector<16x16xf32>
    %304 = arith.mulf %298, %303 : vector<16x16xf32>
    %305 = arith.mulf %299, %299 : vector<16x16xf32>
    %cst_124 = arith.constant 8.100000e-01 : f32
    %306 = vector.broadcast %cst_124 : f32 to vector<16x16xf32>
    %307 = arith.addf %306, %305 : vector<16x16xf32>
    %308 = math.rsqrt %307 : vector<16x16xf32>
    %309 = arith.mulf %299, %308 : vector<16x16xf32>
    %310 = arith.subf %304, %309 : vector<16x16xf32>
    %311 = arith.mulf %310, %310 : vector<16x16xf32>
    %cst_125 = arith.constant 1.000000e-01 : f32
    %312 = vector.broadcast %cst_125 : f32 to vector<16x16xf32>
    %313 = arith.addf %312, %311 : vector<16x16xf32>
    %314 = arith.divf %311, %313 : vector<16x16xf32>
    %315 = arith.addf %293, %314 : vector<16x16xf32>
    %c0_126 = arith.constant 0 : index
    %c2_127 = arith.constant 2 : index
    %c0_128 = arith.constant 0 : index
    %316 = vector.load %arg1[%c0_126, %c2_127, %c0_128] : memref<1x22x22xf32, #tpu.memory_space<vmem>>, vector<1x16x16xf32>
    %317 = vector.shape_cast %316 : vector<1x16x16xf32> to vector<16x16xf32>
    %c0_129 = arith.constant 0 : index
    %c2_130 = arith.constant 2 : index
    %c0_131 = arith.constant 0 : index
    %318 = vector.load %arg2[%c0_129, %c2_130, %c0_131] : memref<1x22x22xf32, #tpu.memory_space<vmem>>, vector<1x16x16xf32>
    %319 = vector.shape_cast %318 : vector<1x16x16xf32> to vector<16x16xf32>
    %320 = arith.subf %317, %4 : vector<16x16xf32>
    %321 = arith.subf %319, %6 : vector<16x16xf32>
    %322 = arith.mulf %320, %320 : vector<16x16xf32>
    %cst_132 = arith.constant 8.100000e-01 : f32
    %323 = vector.broadcast %cst_132 : f32 to vector<16x16xf32>
    %324 = arith.addf %323, %322 : vector<16x16xf32>
    %325 = math.rsqrt %324 : vector<16x16xf32>
    %326 = arith.mulf %320, %325 : vector<16x16xf32>
    %327 = arith.mulf %321, %321 : vector<16x16xf32>
    %cst_133 = arith.constant 8.100000e-01 : f32
    %328 = vector.broadcast %cst_133 : f32 to vector<16x16xf32>
    %329 = arith.addf %328, %327 : vector<16x16xf32>
    %330 = math.rsqrt %329 : vector<16x16xf32>
    %331 = arith.mulf %321, %330 : vector<16x16xf32>
    %332 = arith.subf %326, %331 : vector<16x16xf32>
    %333 = arith.mulf %332, %332 : vector<16x16xf32>
    %cst_134 = arith.constant 1.000000e-01 : f32
    %334 = vector.broadcast %cst_134 : f32 to vector<16x16xf32>
    %335 = arith.addf %334, %333 : vector<16x16xf32>
    %336 = arith.divf %333, %335 : vector<16x16xf32>
    %337 = arith.addf %315, %336 : vector<16x16xf32>
    %c0_135 = arith.constant 0 : index
    %c2_136 = arith.constant 2 : index
    %c1_137 = arith.constant 1 : index
    %338 = vector.load %arg1[%c0_135, %c2_136, %c1_137] : memref<1x22x22xf32, #tpu.memory_space<vmem>>, vector<1x16x16xf32>
    %339 = vector.shape_cast %338 : vector<1x16x16xf32> to vector<16x16xf32>
    %c0_138 = arith.constant 0 : index
    %c2_139 = arith.constant 2 : index
    %c1_140 = arith.constant 1 : index
    %340 = vector.load %arg2[%c0_138, %c2_139, %c1_140] : memref<1x22x22xf32, #tpu.memory_space<vmem>>, vector<1x16x16xf32>
    %341 = vector.shape_cast %340 : vector<1x16x16xf32> to vector<16x16xf32>
    %342 = arith.subf %339, %4 : vector<16x16xf32>
    %343 = arith.subf %341, %6 : vector<16x16xf32>
    %344 = arith.mulf %342, %342 : vector<16x16xf32>
    %cst_141 = arith.constant 8.100000e-01 : f32
    %345 = vector.broadcast %cst_141 : f32 to vector<16x16xf32>
    %346 = arith.addf %345, %344 : vector<16x16xf32>
    %347 = math.rsqrt %346 : vector<16x16xf32>
    %348 = arith.mulf %342, %347 : vector<16x16xf32>
    %349 = arith.mulf %343, %343 : vector<16x16xf32>
    %cst_142 = arith.constant 8.100000e-01 : f32
    %350 = vector.broadcast %cst_142 : f32 to vector<16x16xf32>
    %351 = arith.addf %350, %349 : vector<16x16xf32>
    %352 = math.rsqrt %351 : vector<16x16xf32>
    %353 = arith.mulf %343, %352 : vector<16x16xf32>
    %354 = arith.subf %348, %353 : vector<16x16xf32>
    %355 = arith.mulf %354, %354 : vector<16x16xf32>
    %cst_143 = arith.constant 1.000000e-01 : f32
    %356 = vector.broadcast %cst_143 : f32 to vector<16x16xf32>
    %357 = arith.addf %356, %355 : vector<16x16xf32>
    %358 = arith.divf %355, %357 : vector<16x16xf32>
    %359 = arith.addf %337, %358 : vector<16x16xf32>
    %c0_144 = arith.constant 0 : index
    %c2_145 = arith.constant 2 : index
    %c2_146 = arith.constant 2 : index
    %360 = vector.load %arg1[%c0_144, %c2_145, %c2_146] : memref<1x22x22xf32, #tpu.memory_space<vmem>>, vector<1x16x16xf32>
    %361 = vector.shape_cast %360 : vector<1x16x16xf32> to vector<16x16xf32>
    %c0_147 = arith.constant 0 : index
    %c2_148 = arith.constant 2 : index
    %c2_149 = arith.constant 2 : index
    %362 = vector.load %arg2[%c0_147, %c2_148, %c2_149] : memref<1x22x22xf32, #tpu.memory_space<vmem>>, vector<1x16x16xf32>
    %363 = vector.shape_cast %362 : vector<1x16x16xf32> to vector<16x16xf32>
    %364 = arith.subf %361, %4 : vector<16x16xf32>
    %365 = arith.subf %363, %6 : vector<16x16xf32>
    %366 = arith.mulf %364, %364 : vector<16x16xf32>
    %cst_150 = arith.constant 8.100000e-01 : f32
    %367 = vector.broadcast %cst_150 : f32 to vector<16x16xf32>
    %368 = arith.addf %367, %366 : vector<16x16xf32>
    %369 = math.rsqrt %368 : vector<16x16xf32>
    %370 = arith.mulf %364, %369 : vector<16x16xf32>
    %371 = arith.mulf %365, %365 : vector<16x16xf32>
    %cst_151 = arith.constant 8.100000e-01 : f32
    %372 = vector.broadcast %cst_151 : f32 to vector<16x16xf32>
    %373 = arith.addf %372, %371 : vector<16x16xf32>
    %374 = math.rsqrt %373 : vector<16x16xf32>
    %375 = arith.mulf %365, %374 : vector<16x16xf32>
    %376 = arith.subf %370, %375 : vector<16x16xf32>
    %377 = arith.mulf %376, %376 : vector<16x16xf32>
    %cst_152 = arith.constant 1.000000e-01 : f32
    %378 = vector.broadcast %cst_152 : f32 to vector<16x16xf32>
    %379 = arith.addf %378, %377 : vector<16x16xf32>
    %380 = arith.divf %377, %379 : vector<16x16xf32>
    %381 = arith.addf %359, %380 : vector<16x16xf32>
    %c0_153 = arith.constant 0 : index
    %c2_154 = arith.constant 2 : index
    %c3_155 = arith.constant 3 : index
    %382 = vector.load %arg1[%c0_153, %c2_154, %c3_155] : memref<1x22x22xf32, #tpu.memory_space<vmem>>, vector<1x16x16xf32>
    %383 = vector.shape_cast %382 : vector<1x16x16xf32> to vector<16x16xf32>
    %c0_156 = arith.constant 0 : index
    %c2_157 = arith.constant 2 : index
    %c3_158 = arith.constant 3 : index
    %384 = vector.load %arg2[%c0_156, %c2_157, %c3_158] : memref<1x22x22xf32, #tpu.memory_space<vmem>>, vector<1x16x16xf32>
    %385 = vector.shape_cast %384 : vector<1x16x16xf32> to vector<16x16xf32>
    %386 = arith.subf %383, %4 : vector<16x16xf32>
    %387 = arith.subf %385, %6 : vector<16x16xf32>
    %388 = arith.mulf %386, %386 : vector<16x16xf32>
    %cst_159 = arith.constant 8.100000e-01 : f32
    %389 = vector.broadcast %cst_159 : f32 to vector<16x16xf32>
    %390 = arith.addf %389, %388 : vector<16x16xf32>
    %391 = math.rsqrt %390 : vector<16x16xf32>
    %392 = arith.mulf %386, %391 : vector<16x16xf32>
    %393 = arith.mulf %387, %387 : vector<16x16xf32>
    %cst_160 = arith.constant 8.100000e-01 : f32
    %394 = vector.broadcast %cst_160 : f32 to vector<16x16xf32>
    %395 = arith.addf %394, %393 : vector<16x16xf32>
    %396 = math.rsqrt %395 : vector<16x16xf32>
    %397 = arith.mulf %387, %396 : vector<16x16xf32>
    %398 = arith.subf %392, %397 : vector<16x16xf32>
    %399 = arith.mulf %398, %398 : vector<16x16xf32>
    %cst_161 = arith.constant 1.000000e-01 : f32
    %400 = vector.broadcast %cst_161 : f32 to vector<16x16xf32>
    %401 = arith.addf %400, %399 : vector<16x16xf32>
    %402 = arith.divf %399, %401 : vector<16x16xf32>
    %403 = arith.addf %381, %402 : vector<16x16xf32>
    %c0_162 = arith.constant 0 : index
    %c2_163 = arith.constant 2 : index
    %c4_164 = arith.constant 4 : index
    %404 = vector.load %arg1[%c0_162, %c2_163, %c4_164] : memref<1x22x22xf32, #tpu.memory_space<vmem>>, vector<1x16x16xf32>
    %405 = vector.shape_cast %404 : vector<1x16x16xf32> to vector<16x16xf32>
    %c0_165 = arith.constant 0 : index
    %c2_166 = arith.constant 2 : index
    %c4_167 = arith.constant 4 : index
    %406 = vector.load %arg2[%c0_165, %c2_166, %c4_167] : memref<1x22x22xf32, #tpu.memory_space<vmem>>, vector<1x16x16xf32>
    %407 = vector.shape_cast %406 : vector<1x16x16xf32> to vector<16x16xf32>
    %408 = arith.subf %405, %4 : vector<16x16xf32>
    %409 = arith.subf %407, %6 : vector<16x16xf32>
    %410 = arith.mulf %408, %408 : vector<16x16xf32>
    %cst_168 = arith.constant 8.100000e-01 : f32
    %411 = vector.broadcast %cst_168 : f32 to vector<16x16xf32>
    %412 = arith.addf %411, %410 : vector<16x16xf32>
    %413 = math.rsqrt %412 : vector<16x16xf32>
    %414 = arith.mulf %408, %413 : vector<16x16xf32>
    %415 = arith.mulf %409, %409 : vector<16x16xf32>
    %cst_169 = arith.constant 8.100000e-01 : f32
    %416 = vector.broadcast %cst_169 : f32 to vector<16x16xf32>
    %417 = arith.addf %416, %415 : vector<16x16xf32>
    %418 = math.rsqrt %417 : vector<16x16xf32>
    %419 = arith.mulf %409, %418 : vector<16x16xf32>
    %420 = arith.subf %414, %419 : vector<16x16xf32>
    %421 = arith.mulf %420, %420 : vector<16x16xf32>
    %cst_170 = arith.constant 1.000000e-01 : f32
    %422 = vector.broadcast %cst_170 : f32 to vector<16x16xf32>
    %423 = arith.addf %422, %421 : vector<16x16xf32>
    %424 = arith.divf %421, %423 : vector<16x16xf32>
    %425 = arith.addf %403, %424 : vector<16x16xf32>
    %c0_171 = arith.constant 0 : index
    %c2_172 = arith.constant 2 : index
    %c5_173 = arith.constant 5 : index
    %426 = vector.load %arg1[%c0_171, %c2_172, %c5_173] : memref<1x22x22xf32, #tpu.memory_space<vmem>>, vector<1x16x16xf32>
    %427 = vector.shape_cast %426 : vector<1x16x16xf32> to vector<16x16xf32>
    %c0_174 = arith.constant 0 : index
    %c2_175 = arith.constant 2 : index
    %c5_176 = arith.constant 5 : index
    %428 = vector.load %arg2[%c0_174, %c2_175, %c5_176] : memref<1x22x22xf32, #tpu.memory_space<vmem>>, vector<1x16x16xf32>
    %429 = vector.shape_cast %428 : vector<1x16x16xf32> to vector<16x16xf32>
    %430 = arith.subf %427, %4 : vector<16x16xf32>
    %431 = arith.subf %429, %6 : vector<16x16xf32>
    %432 = arith.mulf %430, %430 : vector<16x16xf32>
    %cst_177 = arith.constant 8.100000e-01 : f32
    %433 = vector.broadcast %cst_177 : f32 to vector<16x16xf32>
    %434 = arith.addf %433, %432 : vector<16x16xf32>
    %435 = math.rsqrt %434 : vector<16x16xf32>
    %436 = arith.mulf %430, %435 : vector<16x16xf32>
    %437 = arith.mulf %431, %431 : vector<16x16xf32>
    %cst_178 = arith.constant 8.100000e-01 : f32
    %438 = vector.broadcast %cst_178 : f32 to vector<16x16xf32>
    %439 = arith.addf %438, %437 : vector<16x16xf32>
    %440 = math.rsqrt %439 : vector<16x16xf32>
    %441 = arith.mulf %431, %440 : vector<16x16xf32>
    %442 = arith.subf %436, %441 : vector<16x16xf32>
    %443 = arith.mulf %442, %442 : vector<16x16xf32>
    %cst_179 = arith.constant 1.000000e-01 : f32
    %444 = vector.broadcast %cst_179 : f32 to vector<16x16xf32>
    %445 = arith.addf %444, %443 : vector<16x16xf32>
    %446 = arith.divf %443, %445 : vector<16x16xf32>
    %447 = arith.addf %425, %446 : vector<16x16xf32>
    %c0_180 = arith.constant 0 : index
    %c2_181 = arith.constant 2 : index
    %c6_182 = arith.constant 6 : index
    %448 = vector.load %arg1[%c0_180, %c2_181, %c6_182] : memref<1x22x22xf32, #tpu.memory_space<vmem>>, vector<1x16x16xf32>
    %449 = vector.shape_cast %448 : vector<1x16x16xf32> to vector<16x16xf32>
    %c0_183 = arith.constant 0 : index
    %c2_184 = arith.constant 2 : index
    %c6_185 = arith.constant 6 : index
    %450 = vector.load %arg2[%c0_183, %c2_184, %c6_185] : memref<1x22x22xf32, #tpu.memory_space<vmem>>, vector<1x16x16xf32>
    %451 = vector.shape_cast %450 : vector<1x16x16xf32> to vector<16x16xf32>
    %452 = arith.subf %449, %4 : vector<16x16xf32>
    %453 = arith.subf %451, %6 : vector<16x16xf32>
    %454 = arith.mulf %452, %452 : vector<16x16xf32>
    %cst_186 = arith.constant 8.100000e-01 : f32
    %455 = vector.broadcast %cst_186 : f32 to vector<16x16xf32>
    %456 = arith.addf %455, %454 : vector<16x16xf32>
    %457 = math.rsqrt %456 : vector<16x16xf32>
    %458 = arith.mulf %452, %457 : vector<16x16xf32>
    %459 = arith.mulf %453, %453 : vector<16x16xf32>
    %cst_187 = arith.constant 8.100000e-01 : f32
    %460 = vector.broadcast %cst_187 : f32 to vector<16x16xf32>
    %461 = arith.addf %460, %459 : vector<16x16xf32>
    %462 = math.rsqrt %461 : vector<16x16xf32>
    %463 = arith.mulf %453, %462 : vector<16x16xf32>
    %464 = arith.subf %458, %463 : vector<16x16xf32>
    %465 = arith.mulf %464, %464 : vector<16x16xf32>
    %cst_188 = arith.constant 1.000000e-01 : f32
    %466 = vector.broadcast %cst_188 : f32 to vector<16x16xf32>
    %467 = arith.addf %466, %465 : vector<16x16xf32>
    %468 = arith.divf %465, %467 : vector<16x16xf32>
    %469 = arith.addf %447, %468 : vector<16x16xf32>
    %c0_189 = arith.constant 0 : index
    %c3_190 = arith.constant 3 : index
    %c0_191 = arith.constant 0 : index
    %470 = vector.load %arg1[%c0_189, %c3_190, %c0_191] : memref<1x22x22xf32, #tpu.memory_space<vmem>>, vector<1x16x16xf32>
    %471 = vector.shape_cast %470 : vector<1x16x16xf32> to vector<16x16xf32>
    %c0_192 = arith.constant 0 : index
    %c3_193 = arith.constant 3 : index
    %c0_194 = arith.constant 0 : index
    %472 = vector.load %arg2[%c0_192, %c3_193, %c0_194] : memref<1x22x22xf32, #tpu.memory_space<vmem>>, vector<1x16x16xf32>
    %473 = vector.shape_cast %472 : vector<1x16x16xf32> to vector<16x16xf32>
    %474 = arith.subf %471, %4 : vector<16x16xf32>
    %475 = arith.subf %473, %6 : vector<16x16xf32>
    %476 = arith.mulf %474, %474 : vector<16x16xf32>
    %cst_195 = arith.constant 8.100000e-01 : f32
    %477 = vector.broadcast %cst_195 : f32 to vector<16x16xf32>
    %478 = arith.addf %477, %476 : vector<16x16xf32>
    %479 = math.rsqrt %478 : vector<16x16xf32>
    %480 = arith.mulf %474, %479 : vector<16x16xf32>
    %481 = arith.mulf %475, %475 : vector<16x16xf32>
    %cst_196 = arith.constant 8.100000e-01 : f32
    %482 = vector.broadcast %cst_196 : f32 to vector<16x16xf32>
    %483 = arith.addf %482, %481 : vector<16x16xf32>
    %484 = math.rsqrt %483 : vector<16x16xf32>
    %485 = arith.mulf %475, %484 : vector<16x16xf32>
    %486 = arith.subf %480, %485 : vector<16x16xf32>
    %487 = arith.mulf %486, %486 : vector<16x16xf32>
    %cst_197 = arith.constant 1.000000e-01 : f32
    %488 = vector.broadcast %cst_197 : f32 to vector<16x16xf32>
    %489 = arith.addf %488, %487 : vector<16x16xf32>
    %490 = arith.divf %487, %489 : vector<16x16xf32>
    %491 = arith.addf %469, %490 : vector<16x16xf32>
    %c0_198 = arith.constant 0 : index
    %c3_199 = arith.constant 3 : index
    %c1_200 = arith.constant 1 : index
    %492 = vector.load %arg1[%c0_198, %c3_199, %c1_200] : memref<1x22x22xf32, #tpu.memory_space<vmem>>, vector<1x16x16xf32>
    %493 = vector.shape_cast %492 : vector<1x16x16xf32> to vector<16x16xf32>
    %c0_201 = arith.constant 0 : index
    %c3_202 = arith.constant 3 : index
    %c1_203 = arith.constant 1 : index
    %494 = vector.load %arg2[%c0_201, %c3_202, %c1_203] : memref<1x22x22xf32, #tpu.memory_space<vmem>>, vector<1x16x16xf32>
    %495 = vector.shape_cast %494 : vector<1x16x16xf32> to vector<16x16xf32>
    %496 = arith.subf %493, %4 : vector<16x16xf32>
    %497 = arith.subf %495, %6 : vector<16x16xf32>
    %498 = arith.mulf %496, %496 : vector<16x16xf32>
    %cst_204 = arith.constant 8.100000e-01 : f32
    %499 = vector.broadcast %cst_204 : f32 to vector<16x16xf32>
    %500 = arith.addf %499, %498 : vector<16x16xf32>
    %501 = math.rsqrt %500 : vector<16x16xf32>
    %502 = arith.mulf %496, %501 : vector<16x16xf32>
    %503 = arith.mulf %497, %497 : vector<16x16xf32>
    %cst_205 = arith.constant 8.100000e-01 : f32
    %504 = vector.broadcast %cst_205 : f32 to vector<16x16xf32>
    %505 = arith.addf %504, %503 : vector<16x16xf32>
    %506 = math.rsqrt %505 : vector<16x16xf32>
    %507 = arith.mulf %497, %506 : vector<16x16xf32>
    %508 = arith.subf %502, %507 : vector<16x16xf32>
    %509 = arith.mulf %508, %508 : vector<16x16xf32>
    %cst_206 = arith.constant 1.000000e-01 : f32
    %510 = vector.broadcast %cst_206 : f32 to vector<16x16xf32>
    %511 = arith.addf %510, %509 : vector<16x16xf32>
    %512 = arith.divf %509, %511 : vector<16x16xf32>
    %513 = arith.addf %491, %512 : vector<16x16xf32>
    %c0_207 = arith.constant 0 : index
    %c3_208 = arith.constant 3 : index
    %c2_209 = arith.constant 2 : index
    %514 = vector.load %arg1[%c0_207, %c3_208, %c2_209] : memref<1x22x22xf32, #tpu.memory_space<vmem>>, vector<1x16x16xf32>
    %515 = vector.shape_cast %514 : vector<1x16x16xf32> to vector<16x16xf32>
    %c0_210 = arith.constant 0 : index
    %c3_211 = arith.constant 3 : index
    %c2_212 = arith.constant 2 : index
    %516 = vector.load %arg2[%c0_210, %c3_211, %c2_212] : memref<1x22x22xf32, #tpu.memory_space<vmem>>, vector<1x16x16xf32>
    %517 = vector.shape_cast %516 : vector<1x16x16xf32> to vector<16x16xf32>
    %518 = arith.subf %515, %4 : vector<16x16xf32>
    %519 = arith.subf %517, %6 : vector<16x16xf32>
    %520 = arith.mulf %518, %518 : vector<16x16xf32>
    %cst_213 = arith.constant 8.100000e-01 : f32
    %521 = vector.broadcast %cst_213 : f32 to vector<16x16xf32>
    %522 = arith.addf %521, %520 : vector<16x16xf32>
    %523 = math.rsqrt %522 : vector<16x16xf32>
    %524 = arith.mulf %518, %523 : vector<16x16xf32>
    %525 = arith.mulf %519, %519 : vector<16x16xf32>
    %cst_214 = arith.constant 8.100000e-01 : f32
    %526 = vector.broadcast %cst_214 : f32 to vector<16x16xf32>
    %527 = arith.addf %526, %525 : vector<16x16xf32>
    %528 = math.rsqrt %527 : vector<16x16xf32>
    %529 = arith.mulf %519, %528 : vector<16x16xf32>
    %530 = arith.subf %524, %529 : vector<16x16xf32>
    %531 = arith.mulf %530, %530 : vector<16x16xf32>
    %cst_215 = arith.constant 1.000000e-01 : f32
    %532 = vector.broadcast %cst_215 : f32 to vector<16x16xf32>
    %533 = arith.addf %532, %531 : vector<16x16xf32>
    %534 = arith.divf %531, %533 : vector<16x16xf32>
    %535 = arith.addf %513, %534 : vector<16x16xf32>
    %c0_216 = arith.constant 0 : index
    %c3_217 = arith.constant 3 : index
    %c3_218 = arith.constant 3 : index
    %536 = vector.load %arg1[%c0_216, %c3_217, %c3_218] : memref<1x22x22xf32, #tpu.memory_space<vmem>>, vector<1x16x16xf32>
    %537 = vector.shape_cast %536 : vector<1x16x16xf32> to vector<16x16xf32>
    %c0_219 = arith.constant 0 : index
    %c3_220 = arith.constant 3 : index
    %c3_221 = arith.constant 3 : index
    %538 = vector.load %arg2[%c0_219, %c3_220, %c3_221] : memref<1x22x22xf32, #tpu.memory_space<vmem>>, vector<1x16x16xf32>
    %539 = vector.shape_cast %538 : vector<1x16x16xf32> to vector<16x16xf32>
    %540 = arith.subf %537, %4 : vector<16x16xf32>
    %541 = arith.subf %539, %6 : vector<16x16xf32>
    %542 = arith.mulf %540, %540 : vector<16x16xf32>
    %cst_222 = arith.constant 8.100000e-01 : f32
    %543 = vector.broadcast %cst_222 : f32 to vector<16x16xf32>
    %544 = arith.addf %543, %542 : vector<16x16xf32>
    %545 = math.rsqrt %544 : vector<16x16xf32>
    %546 = arith.mulf %540, %545 : vector<16x16xf32>
    %547 = arith.mulf %541, %541 : vector<16x16xf32>
    %cst_223 = arith.constant 8.100000e-01 : f32
    %548 = vector.broadcast %cst_223 : f32 to vector<16x16xf32>
    %549 = arith.addf %548, %547 : vector<16x16xf32>
    %550 = math.rsqrt %549 : vector<16x16xf32>
    %551 = arith.mulf %541, %550 : vector<16x16xf32>
    %552 = arith.subf %546, %551 : vector<16x16xf32>
    %553 = arith.mulf %552, %552 : vector<16x16xf32>
    %cst_224 = arith.constant 1.000000e-01 : f32
    %554 = vector.broadcast %cst_224 : f32 to vector<16x16xf32>
    %555 = arith.addf %554, %553 : vector<16x16xf32>
    %556 = arith.divf %553, %555 : vector<16x16xf32>
    %557 = arith.addf %535, %556 : vector<16x16xf32>
    %c0_225 = arith.constant 0 : index
    %c3_226 = arith.constant 3 : index
    %c4_227 = arith.constant 4 : index
    %558 = vector.load %arg1[%c0_225, %c3_226, %c4_227] : memref<1x22x22xf32, #tpu.memory_space<vmem>>, vector<1x16x16xf32>
    %559 = vector.shape_cast %558 : vector<1x16x16xf32> to vector<16x16xf32>
    %c0_228 = arith.constant 0 : index
    %c3_229 = arith.constant 3 : index
    %c4_230 = arith.constant 4 : index
    %560 = vector.load %arg2[%c0_228, %c3_229, %c4_230] : memref<1x22x22xf32, #tpu.memory_space<vmem>>, vector<1x16x16xf32>
    %561 = vector.shape_cast %560 : vector<1x16x16xf32> to vector<16x16xf32>
    %562 = arith.subf %559, %4 : vector<16x16xf32>
    %563 = arith.subf %561, %6 : vector<16x16xf32>
    %564 = arith.mulf %562, %562 : vector<16x16xf32>
    %cst_231 = arith.constant 8.100000e-01 : f32
    %565 = vector.broadcast %cst_231 : f32 to vector<16x16xf32>
    %566 = arith.addf %565, %564 : vector<16x16xf32>
    %567 = math.rsqrt %566 : vector<16x16xf32>
    %568 = arith.mulf %562, %567 : vector<16x16xf32>
    %569 = arith.mulf %563, %563 : vector<16x16xf32>
    %cst_232 = arith.constant 8.100000e-01 : f32
    %570 = vector.broadcast %cst_232 : f32 to vector<16x16xf32>
    %571 = arith.addf %570, %569 : vector<16x16xf32>
    %572 = math.rsqrt %571 : vector<16x16xf32>
    %573 = arith.mulf %563, %572 : vector<16x16xf32>
    %574 = arith.subf %568, %573 : vector<16x16xf32>
    %575 = arith.mulf %574, %574 : vector<16x16xf32>
    %cst_233 = arith.constant 1.000000e-01 : f32
    %576 = vector.broadcast %cst_233 : f32 to vector<16x16xf32>
    %577 = arith.addf %576, %575 : vector<16x16xf32>
    %578 = arith.divf %575, %577 : vector<16x16xf32>
    %579 = arith.addf %557, %578 : vector<16x16xf32>
    %c0_234 = arith.constant 0 : index
    %c3_235 = arith.constant 3 : index
    %c5_236 = arith.constant 5 : index
    %580 = vector.load %arg1[%c0_234, %c3_235, %c5_236] : memref<1x22x22xf32, #tpu.memory_space<vmem>>, vector<1x16x16xf32>
    %581 = vector.shape_cast %580 : vector<1x16x16xf32> to vector<16x16xf32>
    %c0_237 = arith.constant 0 : index
    %c3_238 = arith.constant 3 : index
    %c5_239 = arith.constant 5 : index
    %582 = vector.load %arg2[%c0_237, %c3_238, %c5_239] : memref<1x22x22xf32, #tpu.memory_space<vmem>>, vector<1x16x16xf32>
    %583 = vector.shape_cast %582 : vector<1x16x16xf32> to vector<16x16xf32>
    %584 = arith.subf %581, %4 : vector<16x16xf32>
    %585 = arith.subf %583, %6 : vector<16x16xf32>
    %586 = arith.mulf %584, %584 : vector<16x16xf32>
    %cst_240 = arith.constant 8.100000e-01 : f32
    %587 = vector.broadcast %cst_240 : f32 to vector<16x16xf32>
    %588 = arith.addf %587, %586 : vector<16x16xf32>
    %589 = math.rsqrt %588 : vector<16x16xf32>
    %590 = arith.mulf %584, %589 : vector<16x16xf32>
    %591 = arith.mulf %585, %585 : vector<16x16xf32>
    %cst_241 = arith.constant 8.100000e-01 : f32
    %592 = vector.broadcast %cst_241 : f32 to vector<16x16xf32>
    %593 = arith.addf %592, %591 : vector<16x16xf32>
    %594 = math.rsqrt %593 : vector<16x16xf32>
    %595 = arith.mulf %585, %594 : vector<16x16xf32>
    %596 = arith.subf %590, %595 : vector<16x16xf32>
    %597 = arith.mulf %596, %596 : vector<16x16xf32>
    %cst_242 = arith.constant 1.000000e-01 : f32
    %598 = vector.broadcast %cst_242 : f32 to vector<16x16xf32>
    %599 = arith.addf %598, %597 : vector<16x16xf32>
    %600 = arith.divf %597, %599 : vector<16x16xf32>
    %601 = arith.addf %579, %600 : vector<16x16xf32>
    %c0_243 = arith.constant 0 : index
    %c3_244 = arith.constant 3 : index
    %c6_245 = arith.constant 6 : index
    %602 = vector.load %arg1[%c0_243, %c3_244, %c6_245] : memref<1x22x22xf32, #tpu.memory_space<vmem>>, vector<1x16x16xf32>
    %603 = vector.shape_cast %602 : vector<1x16x16xf32> to vector<16x16xf32>
    %c0_246 = arith.constant 0 : index
    %c3_247 = arith.constant 3 : index
    %c6_248 = arith.constant 6 : index
    %604 = vector.load %arg2[%c0_246, %c3_247, %c6_248] : memref<1x22x22xf32, #tpu.memory_space<vmem>>, vector<1x16x16xf32>
    %605 = vector.shape_cast %604 : vector<1x16x16xf32> to vector<16x16xf32>
    %606 = arith.subf %603, %4 : vector<16x16xf32>
    %607 = arith.subf %605, %6 : vector<16x16xf32>
    %608 = arith.mulf %606, %606 : vector<16x16xf32>
    %cst_249 = arith.constant 8.100000e-01 : f32
    %609 = vector.broadcast %cst_249 : f32 to vector<16x16xf32>
    %610 = arith.addf %609, %608 : vector<16x16xf32>
    %611 = math.rsqrt %610 : vector<16x16xf32>
    %612 = arith.mulf %606, %611 : vector<16x16xf32>
    %613 = arith.mulf %607, %607 : vector<16x16xf32>
    %cst_250 = arith.constant 8.100000e-01 : f32
    %614 = vector.broadcast %cst_250 : f32 to vector<16x16xf32>
    %615 = arith.addf %614, %613 : vector<16x16xf32>
    %616 = math.rsqrt %615 : vector<16x16xf32>
    %617 = arith.mulf %607, %616 : vector<16x16xf32>
    %618 = arith.subf %612, %617 : vector<16x16xf32>
    %619 = arith.mulf %618, %618 : vector<16x16xf32>
    %cst_251 = arith.constant 1.000000e-01 : f32
    %620 = vector.broadcast %cst_251 : f32 to vector<16x16xf32>
    %621 = arith.addf %620, %619 : vector<16x16xf32>
    %622 = arith.divf %619, %621 : vector<16x16xf32>
    %623 = arith.addf %601, %622 : vector<16x16xf32>
    %c0_252 = arith.constant 0 : index
    %c4_253 = arith.constant 4 : index
    %c0_254 = arith.constant 0 : index
    %624 = vector.load %arg1[%c0_252, %c4_253, %c0_254] : memref<1x22x22xf32, #tpu.memory_space<vmem>>, vector<1x16x16xf32>
    %625 = vector.shape_cast %624 : vector<1x16x16xf32> to vector<16x16xf32>
    %c0_255 = arith.constant 0 : index
    %c4_256 = arith.constant 4 : index
    %c0_257 = arith.constant 0 : index
    %626 = vector.load %arg2[%c0_255, %c4_256, %c0_257] : memref<1x22x22xf32, #tpu.memory_space<vmem>>, vector<1x16x16xf32>
    %627 = vector.shape_cast %626 : vector<1x16x16xf32> to vector<16x16xf32>
    %628 = arith.subf %625, %4 : vector<16x16xf32>
    %629 = arith.subf %627, %6 : vector<16x16xf32>
    %630 = arith.mulf %628, %628 : vector<16x16xf32>
    %cst_258 = arith.constant 8.100000e-01 : f32
    %631 = vector.broadcast %cst_258 : f32 to vector<16x16xf32>
    %632 = arith.addf %631, %630 : vector<16x16xf32>
    %633 = math.rsqrt %632 : vector<16x16xf32>
    %634 = arith.mulf %628, %633 : vector<16x16xf32>
    %635 = arith.mulf %629, %629 : vector<16x16xf32>
    %cst_259 = arith.constant 8.100000e-01 : f32
    %636 = vector.broadcast %cst_259 : f32 to vector<16x16xf32>
    %637 = arith.addf %636, %635 : vector<16x16xf32>
    %638 = math.rsqrt %637 : vector<16x16xf32>
    %639 = arith.mulf %629, %638 : vector<16x16xf32>
    %640 = arith.subf %634, %639 : vector<16x16xf32>
    %641 = arith.mulf %640, %640 : vector<16x16xf32>
    %cst_260 = arith.constant 1.000000e-01 : f32
    %642 = vector.broadcast %cst_260 : f32 to vector<16x16xf32>
    %643 = arith.addf %642, %641 : vector<16x16xf32>
    %644 = arith.divf %641, %643 : vector<16x16xf32>
    %645 = arith.addf %623, %644 : vector<16x16xf32>
    %c0_261 = arith.constant 0 : index
    %c4_262 = arith.constant 4 : index
    %c1_263 = arith.constant 1 : index
    %646 = vector.load %arg1[%c0_261, %c4_262, %c1_263] : memref<1x22x22xf32, #tpu.memory_space<vmem>>, vector<1x16x16xf32>
    %647 = vector.shape_cast %646 : vector<1x16x16xf32> to vector<16x16xf32>
    %c0_264 = arith.constant 0 : index
    %c4_265 = arith.constant 4 : index
    %c1_266 = arith.constant 1 : index
    %648 = vector.load %arg2[%c0_264, %c4_265, %c1_266] : memref<1x22x22xf32, #tpu.memory_space<vmem>>, vector<1x16x16xf32>
    %649 = vector.shape_cast %648 : vector<1x16x16xf32> to vector<16x16xf32>
    %650 = arith.subf %647, %4 : vector<16x16xf32>
    %651 = arith.subf %649, %6 : vector<16x16xf32>
    %652 = arith.mulf %650, %650 : vector<16x16xf32>
    %cst_267 = arith.constant 8.100000e-01 : f32
    %653 = vector.broadcast %cst_267 : f32 to vector<16x16xf32>
    %654 = arith.addf %653, %652 : vector<16x16xf32>
    %655 = math.rsqrt %654 : vector<16x16xf32>
    %656 = arith.mulf %650, %655 : vector<16x16xf32>
    %657 = arith.mulf %651, %651 : vector<16x16xf32>
    %cst_268 = arith.constant 8.100000e-01 : f32
    %658 = vector.broadcast %cst_268 : f32 to vector<16x16xf32>
    %659 = arith.addf %658, %657 : vector<16x16xf32>
    %660 = math.rsqrt %659 : vector<16x16xf32>
    %661 = arith.mulf %651, %660 : vector<16x16xf32>
    %662 = arith.subf %656, %661 : vector<16x16xf32>
    %663 = arith.mulf %662, %662 : vector<16x16xf32>
    %cst_269 = arith.constant 1.000000e-01 : f32
    %664 = vector.broadcast %cst_269 : f32 to vector<16x16xf32>
    %665 = arith.addf %664, %663 : vector<16x16xf32>
    %666 = arith.divf %663, %665 : vector<16x16xf32>
    %667 = arith.addf %645, %666 : vector<16x16xf32>
    %c0_270 = arith.constant 0 : index
    %c4_271 = arith.constant 4 : index
    %c2_272 = arith.constant 2 : index
    %668 = vector.load %arg1[%c0_270, %c4_271, %c2_272] : memref<1x22x22xf32, #tpu.memory_space<vmem>>, vector<1x16x16xf32>
    %669 = vector.shape_cast %668 : vector<1x16x16xf32> to vector<16x16xf32>
    %c0_273 = arith.constant 0 : index
    %c4_274 = arith.constant 4 : index
    %c2_275 = arith.constant 2 : index
    %670 = vector.load %arg2[%c0_273, %c4_274, %c2_275] : memref<1x22x22xf32, #tpu.memory_space<vmem>>, vector<1x16x16xf32>
    %671 = vector.shape_cast %670 : vector<1x16x16xf32> to vector<16x16xf32>
    %672 = arith.subf %669, %4 : vector<16x16xf32>
    %673 = arith.subf %671, %6 : vector<16x16xf32>
    %674 = arith.mulf %672, %672 : vector<16x16xf32>
    %cst_276 = arith.constant 8.100000e-01 : f32
    %675 = vector.broadcast %cst_276 : f32 to vector<16x16xf32>
    %676 = arith.addf %675, %674 : vector<16x16xf32>
    %677 = math.rsqrt %676 : vector<16x16xf32>
    %678 = arith.mulf %672, %677 : vector<16x16xf32>
    %679 = arith.mulf %673, %673 : vector<16x16xf32>
    %cst_277 = arith.constant 8.100000e-01 : f32
    %680 = vector.broadcast %cst_277 : f32 to vector<16x16xf32>
    %681 = arith.addf %680, %679 : vector<16x16xf32>
    %682 = math.rsqrt %681 : vector<16x16xf32>
    %683 = arith.mulf %673, %682 : vector<16x16xf32>
    %684 = arith.subf %678, %683 : vector<16x16xf32>
    %685 = arith.mulf %684, %684 : vector<16x16xf32>
    %cst_278 = arith.constant 1.000000e-01 : f32
    %686 = vector.broadcast %cst_278 : f32 to vector<16x16xf32>
    %687 = arith.addf %686, %685 : vector<16x16xf32>
    %688 = arith.divf %685, %687 : vector<16x16xf32>
    %689 = arith.addf %667, %688 : vector<16x16xf32>
    %c0_279 = arith.constant 0 : index
    %c4_280 = arith.constant 4 : index
    %c3_281 = arith.constant 3 : index
    %690 = vector.load %arg1[%c0_279, %c4_280, %c3_281] : memref<1x22x22xf32, #tpu.memory_space<vmem>>, vector<1x16x16xf32>
    %691 = vector.shape_cast %690 : vector<1x16x16xf32> to vector<16x16xf32>
    %c0_282 = arith.constant 0 : index
    %c4_283 = arith.constant 4 : index
    %c3_284 = arith.constant 3 : index
    %692 = vector.load %arg2[%c0_282, %c4_283, %c3_284] : memref<1x22x22xf32, #tpu.memory_space<vmem>>, vector<1x16x16xf32>
    %693 = vector.shape_cast %692 : vector<1x16x16xf32> to vector<16x16xf32>
    %694 = arith.subf %691, %4 : vector<16x16xf32>
    %695 = arith.subf %693, %6 : vector<16x16xf32>
    %696 = arith.mulf %694, %694 : vector<16x16xf32>
    %cst_285 = arith.constant 8.100000e-01 : f32
    %697 = vector.broadcast %cst_285 : f32 to vector<16x16xf32>
    %698 = arith.addf %697, %696 : vector<16x16xf32>
    %699 = math.rsqrt %698 : vector<16x16xf32>
    %700 = arith.mulf %694, %699 : vector<16x16xf32>
    %701 = arith.mulf %695, %695 : vector<16x16xf32>
    %cst_286 = arith.constant 8.100000e-01 : f32
    %702 = vector.broadcast %cst_286 : f32 to vector<16x16xf32>
    %703 = arith.addf %702, %701 : vector<16x16xf32>
    %704 = math.rsqrt %703 : vector<16x16xf32>
    %705 = arith.mulf %695, %704 : vector<16x16xf32>
    %706 = arith.subf %700, %705 : vector<16x16xf32>
    %707 = arith.mulf %706, %706 : vector<16x16xf32>
    %cst_287 = arith.constant 1.000000e-01 : f32
    %708 = vector.broadcast %cst_287 : f32 to vector<16x16xf32>
    %709 = arith.addf %708, %707 : vector<16x16xf32>
    %710 = arith.divf %707, %709 : vector<16x16xf32>
    %711 = arith.addf %689, %710 : vector<16x16xf32>
    %c0_288 = arith.constant 0 : index
    %c4_289 = arith.constant 4 : index
    %c4_290 = arith.constant 4 : index
    %712 = vector.load %arg1[%c0_288, %c4_289, %c4_290] : memref<1x22x22xf32, #tpu.memory_space<vmem>>, vector<1x16x16xf32>
    %713 = vector.shape_cast %712 : vector<1x16x16xf32> to vector<16x16xf32>
    %c0_291 = arith.constant 0 : index
    %c4_292 = arith.constant 4 : index
    %c4_293 = arith.constant 4 : index
    %714 = vector.load %arg2[%c0_291, %c4_292, %c4_293] : memref<1x22x22xf32, #tpu.memory_space<vmem>>, vector<1x16x16xf32>
    %715 = vector.shape_cast %714 : vector<1x16x16xf32> to vector<16x16xf32>
    %716 = arith.subf %713, %4 : vector<16x16xf32>
    %717 = arith.subf %715, %6 : vector<16x16xf32>
    %718 = arith.mulf %716, %716 : vector<16x16xf32>
    %cst_294 = arith.constant 8.100000e-01 : f32
    %719 = vector.broadcast %cst_294 : f32 to vector<16x16xf32>
    %720 = arith.addf %719, %718 : vector<16x16xf32>
    %721 = math.rsqrt %720 : vector<16x16xf32>
    %722 = arith.mulf %716, %721 : vector<16x16xf32>
    %723 = arith.mulf %717, %717 : vector<16x16xf32>
    %cst_295 = arith.constant 8.100000e-01 : f32
    %724 = vector.broadcast %cst_295 : f32 to vector<16x16xf32>
    %725 = arith.addf %724, %723 : vector<16x16xf32>
    %726 = math.rsqrt %725 : vector<16x16xf32>
    %727 = arith.mulf %717, %726 : vector<16x16xf32>
    %728 = arith.subf %722, %727 : vector<16x16xf32>
    %729 = arith.mulf %728, %728 : vector<16x16xf32>
    %cst_296 = arith.constant 1.000000e-01 : f32
    %730 = vector.broadcast %cst_296 : f32 to vector<16x16xf32>
    %731 = arith.addf %730, %729 : vector<16x16xf32>
    %732 = arith.divf %729, %731 : vector<16x16xf32>
    %733 = arith.addf %711, %732 : vector<16x16xf32>
    %c0_297 = arith.constant 0 : index
    %c4_298 = arith.constant 4 : index
    %c5_299 = arith.constant 5 : index
    %734 = vector.load %arg1[%c0_297, %c4_298, %c5_299] : memref<1x22x22xf32, #tpu.memory_space<vmem>>, vector<1x16x16xf32>
    %735 = vector.shape_cast %734 : vector<1x16x16xf32> to vector<16x16xf32>
    %c0_300 = arith.constant 0 : index
    %c4_301 = arith.constant 4 : index
    %c5_302 = arith.constant 5 : index
    %736 = vector.load %arg2[%c0_300, %c4_301, %c5_302] : memref<1x22x22xf32, #tpu.memory_space<vmem>>, vector<1x16x16xf32>
    %737 = vector.shape_cast %736 : vector<1x16x16xf32> to vector<16x16xf32>
    %738 = arith.subf %735, %4 : vector<16x16xf32>
    %739 = arith.subf %737, %6 : vector<16x16xf32>
    %740 = arith.mulf %738, %738 : vector<16x16xf32>
    %cst_303 = arith.constant 8.100000e-01 : f32
    %741 = vector.broadcast %cst_303 : f32 to vector<16x16xf32>
    %742 = arith.addf %741, %740 : vector<16x16xf32>
    %743 = math.rsqrt %742 : vector<16x16xf32>
    %744 = arith.mulf %738, %743 : vector<16x16xf32>
    %745 = arith.mulf %739, %739 : vector<16x16xf32>
    %cst_304 = arith.constant 8.100000e-01 : f32
    %746 = vector.broadcast %cst_304 : f32 to vector<16x16xf32>
    %747 = arith.addf %746, %745 : vector<16x16xf32>
    %748 = math.rsqrt %747 : vector<16x16xf32>
    %749 = arith.mulf %739, %748 : vector<16x16xf32>
    %750 = arith.subf %744, %749 : vector<16x16xf32>
    %751 = arith.mulf %750, %750 : vector<16x16xf32>
    %cst_305 = arith.constant 1.000000e-01 : f32
    %752 = vector.broadcast %cst_305 : f32 to vector<16x16xf32>
    %753 = arith.addf %752, %751 : vector<16x16xf32>
    %754 = arith.divf %751, %753 : vector<16x16xf32>
    %755 = arith.addf %733, %754 : vector<16x16xf32>
    %c0_306 = arith.constant 0 : index
    %c4_307 = arith.constant 4 : index
    %c6_308 = arith.constant 6 : index
    %756 = vector.load %arg1[%c0_306, %c4_307, %c6_308] : memref<1x22x22xf32, #tpu.memory_space<vmem>>, vector<1x16x16xf32>
    %757 = vector.shape_cast %756 : vector<1x16x16xf32> to vector<16x16xf32>
    %c0_309 = arith.constant 0 : index
    %c4_310 = arith.constant 4 : index
    %c6_311 = arith.constant 6 : index
    %758 = vector.load %arg2[%c0_309, %c4_310, %c6_311] : memref<1x22x22xf32, #tpu.memory_space<vmem>>, vector<1x16x16xf32>
    %759 = vector.shape_cast %758 : vector<1x16x16xf32> to vector<16x16xf32>
    %760 = arith.subf %757, %4 : vector<16x16xf32>
    %761 = arith.subf %759, %6 : vector<16x16xf32>
    %762 = arith.mulf %760, %760 : vector<16x16xf32>
    %cst_312 = arith.constant 8.100000e-01 : f32
    %763 = vector.broadcast %cst_312 : f32 to vector<16x16xf32>
    %764 = arith.addf %763, %762 : vector<16x16xf32>
    %765 = math.rsqrt %764 : vector<16x16xf32>
    %766 = arith.mulf %760, %765 : vector<16x16xf32>
    %767 = arith.mulf %761, %761 : vector<16x16xf32>
    %cst_313 = arith.constant 8.100000e-01 : f32
    %768 = vector.broadcast %cst_313 : f32 to vector<16x16xf32>
    %769 = arith.addf %768, %767 : vector<16x16xf32>
    %770 = math.rsqrt %769 : vector<16x16xf32>
    %771 = arith.mulf %761, %770 : vector<16x16xf32>
    %772 = arith.subf %766, %771 : vector<16x16xf32>
    %773 = arith.mulf %772, %772 : vector<16x16xf32>
    %cst_314 = arith.constant 1.000000e-01 : f32
    %774 = vector.broadcast %cst_314 : f32 to vector<16x16xf32>
    %775 = arith.addf %774, %773 : vector<16x16xf32>
    %776 = arith.divf %773, %775 : vector<16x16xf32>
    %777 = arith.addf %755, %776 : vector<16x16xf32>
    %c0_315 = arith.constant 0 : index
    %c5_316 = arith.constant 5 : index
    %c0_317 = arith.constant 0 : index
    %778 = vector.load %arg1[%c0_315, %c5_316, %c0_317] : memref<1x22x22xf32, #tpu.memory_space<vmem>>, vector<1x16x16xf32>
    %779 = vector.shape_cast %778 : vector<1x16x16xf32> to vector<16x16xf32>
    %c0_318 = arith.constant 0 : index
    %c5_319 = arith.constant 5 : index
    %c0_320 = arith.constant 0 : index
    %780 = vector.load %arg2[%c0_318, %c5_319, %c0_320] : memref<1x22x22xf32, #tpu.memory_space<vmem>>, vector<1x16x16xf32>
    %781 = vector.shape_cast %780 : vector<1x16x16xf32> to vector<16x16xf32>
    %782 = arith.subf %779, %4 : vector<16x16xf32>
    %783 = arith.subf %781, %6 : vector<16x16xf32>
    %784 = arith.mulf %782, %782 : vector<16x16xf32>
    %cst_321 = arith.constant 8.100000e-01 : f32
    %785 = vector.broadcast %cst_321 : f32 to vector<16x16xf32>
    %786 = arith.addf %785, %784 : vector<16x16xf32>
    %787 = math.rsqrt %786 : vector<16x16xf32>
    %788 = arith.mulf %782, %787 : vector<16x16xf32>
    %789 = arith.mulf %783, %783 : vector<16x16xf32>
    %cst_322 = arith.constant 8.100000e-01 : f32
    %790 = vector.broadcast %cst_322 : f32 to vector<16x16xf32>
    %791 = arith.addf %790, %789 : vector<16x16xf32>
    %792 = math.rsqrt %791 : vector<16x16xf32>
    %793 = arith.mulf %783, %792 : vector<16x16xf32>
    %794 = arith.subf %788, %793 : vector<16x16xf32>
    %795 = arith.mulf %794, %794 : vector<16x16xf32>
    %cst_323 = arith.constant 1.000000e-01 : f32
    %796 = vector.broadcast %cst_323 : f32 to vector<16x16xf32>
    %797 = arith.addf %796, %795 : vector<16x16xf32>
    %798 = arith.divf %795, %797 : vector<16x16xf32>
    %799 = arith.addf %777, %798 : vector<16x16xf32>
    %c0_324 = arith.constant 0 : index
    %c5_325 = arith.constant 5 : index
    %c1_326 = arith.constant 1 : index
    %800 = vector.load %arg1[%c0_324, %c5_325, %c1_326] : memref<1x22x22xf32, #tpu.memory_space<vmem>>, vector<1x16x16xf32>
    %801 = vector.shape_cast %800 : vector<1x16x16xf32> to vector<16x16xf32>
    %c0_327 = arith.constant 0 : index
    %c5_328 = arith.constant 5 : index
    %c1_329 = arith.constant 1 : index
    %802 = vector.load %arg2[%c0_327, %c5_328, %c1_329] : memref<1x22x22xf32, #tpu.memory_space<vmem>>, vector<1x16x16xf32>
    %803 = vector.shape_cast %802 : vector<1x16x16xf32> to vector<16x16xf32>
    %804 = arith.subf %801, %4 : vector<16x16xf32>
    %805 = arith.subf %803, %6 : vector<16x16xf32>
    %806 = arith.mulf %804, %804 : vector<16x16xf32>
    %cst_330 = arith.constant 8.100000e-01 : f32
    %807 = vector.broadcast %cst_330 : f32 to vector<16x16xf32>
    %808 = arith.addf %807, %806 : vector<16x16xf32>
    %809 = math.rsqrt %808 : vector<16x16xf32>
    %810 = arith.mulf %804, %809 : vector<16x16xf32>
    %811 = arith.mulf %805, %805 : vector<16x16xf32>
    %cst_331 = arith.constant 8.100000e-01 : f32
    %812 = vector.broadcast %cst_331 : f32 to vector<16x16xf32>
    %813 = arith.addf %812, %811 : vector<16x16xf32>
    %814 = math.rsqrt %813 : vector<16x16xf32>
    %815 = arith.mulf %805, %814 : vector<16x16xf32>
    %816 = arith.subf %810, %815 : vector<16x16xf32>
    %817 = arith.mulf %816, %816 : vector<16x16xf32>
    %cst_332 = arith.constant 1.000000e-01 : f32
    %818 = vector.broadcast %cst_332 : f32 to vector<16x16xf32>
    %819 = arith.addf %818, %817 : vector<16x16xf32>
    %820 = arith.divf %817, %819 : vector<16x16xf32>
    %821 = arith.addf %799, %820 : vector<16x16xf32>
    %c0_333 = arith.constant 0 : index
    %c5_334 = arith.constant 5 : index
    %c2_335 = arith.constant 2 : index
    %822 = vector.load %arg1[%c0_333, %c5_334, %c2_335] : memref<1x22x22xf32, #tpu.memory_space<vmem>>, vector<1x16x16xf32>
    %823 = vector.shape_cast %822 : vector<1x16x16xf32> to vector<16x16xf32>
    %c0_336 = arith.constant 0 : index
    %c5_337 = arith.constant 5 : index
    %c2_338 = arith.constant 2 : index
    %824 = vector.load %arg2[%c0_336, %c5_337, %c2_338] : memref<1x22x22xf32, #tpu.memory_space<vmem>>, vector<1x16x16xf32>
    %825 = vector.shape_cast %824 : vector<1x16x16xf32> to vector<16x16xf32>
    %826 = arith.subf %823, %4 : vector<16x16xf32>
    %827 = arith.subf %825, %6 : vector<16x16xf32>
    %828 = arith.mulf %826, %826 : vector<16x16xf32>
    %cst_339 = arith.constant 8.100000e-01 : f32
    %829 = vector.broadcast %cst_339 : f32 to vector<16x16xf32>
    %830 = arith.addf %829, %828 : vector<16x16xf32>
    %831 = math.rsqrt %830 : vector<16x16xf32>
    %832 = arith.mulf %826, %831 : vector<16x16xf32>
    %833 = arith.mulf %827, %827 : vector<16x16xf32>
    %cst_340 = arith.constant 8.100000e-01 : f32
    %834 = vector.broadcast %cst_340 : f32 to vector<16x16xf32>
    %835 = arith.addf %834, %833 : vector<16x16xf32>
    %836 = math.rsqrt %835 : vector<16x16xf32>
    %837 = arith.mulf %827, %836 : vector<16x16xf32>
    %838 = arith.subf %832, %837 : vector<16x16xf32>
    %839 = arith.mulf %838, %838 : vector<16x16xf32>
    %cst_341 = arith.constant 1.000000e-01 : f32
    %840 = vector.broadcast %cst_341 : f32 to vector<16x16xf32>
    %841 = arith.addf %840, %839 : vector<16x16xf32>
    %842 = arith.divf %839, %841 : vector<16x16xf32>
    %843 = arith.addf %821, %842 : vector<16x16xf32>
    %c0_342 = arith.constant 0 : index
    %c5_343 = arith.constant 5 : index
    %c3_344 = arith.constant 3 : index
    %844 = vector.load %arg1[%c0_342, %c5_343, %c3_344] : memref<1x22x22xf32, #tpu.memory_space<vmem>>, vector<1x16x16xf32>
    %845 = vector.shape_cast %844 : vector<1x16x16xf32> to vector<16x16xf32>
    %c0_345 = arith.constant 0 : index
    %c5_346 = arith.constant 5 : index
    %c3_347 = arith.constant 3 : index
    %846 = vector.load %arg2[%c0_345, %c5_346, %c3_347] : memref<1x22x22xf32, #tpu.memory_space<vmem>>, vector<1x16x16xf32>
    %847 = vector.shape_cast %846 : vector<1x16x16xf32> to vector<16x16xf32>
    %848 = arith.subf %845, %4 : vector<16x16xf32>
    %849 = arith.subf %847, %6 : vector<16x16xf32>
    %850 = arith.mulf %848, %848 : vector<16x16xf32>
    %cst_348 = arith.constant 8.100000e-01 : f32
    %851 = vector.broadcast %cst_348 : f32 to vector<16x16xf32>
    %852 = arith.addf %851, %850 : vector<16x16xf32>
    %853 = math.rsqrt %852 : vector<16x16xf32>
    %854 = arith.mulf %848, %853 : vector<16x16xf32>
    %855 = arith.mulf %849, %849 : vector<16x16xf32>
    %cst_349 = arith.constant 8.100000e-01 : f32
    %856 = vector.broadcast %cst_349 : f32 to vector<16x16xf32>
    %857 = arith.addf %856, %855 : vector<16x16xf32>
    %858 = math.rsqrt %857 : vector<16x16xf32>
    %859 = arith.mulf %849, %858 : vector<16x16xf32>
    %860 = arith.subf %854, %859 : vector<16x16xf32>
    %861 = arith.mulf %860, %860 : vector<16x16xf32>
    %cst_350 = arith.constant 1.000000e-01 : f32
    %862 = vector.broadcast %cst_350 : f32 to vector<16x16xf32>
    %863 = arith.addf %862, %861 : vector<16x16xf32>
    %864 = arith.divf %861, %863 : vector<16x16xf32>
    %865 = arith.addf %843, %864 : vector<16x16xf32>
    %c0_351 = arith.constant 0 : index
    %c5_352 = arith.constant 5 : index
    %c4_353 = arith.constant 4 : index
    %866 = vector.load %arg1[%c0_351, %c5_352, %c4_353] : memref<1x22x22xf32, #tpu.memory_space<vmem>>, vector<1x16x16xf32>
    %867 = vector.shape_cast %866 : vector<1x16x16xf32> to vector<16x16xf32>
    %c0_354 = arith.constant 0 : index
    %c5_355 = arith.constant 5 : index
    %c4_356 = arith.constant 4 : index
    %868 = vector.load %arg2[%c0_354, %c5_355, %c4_356] : memref<1x22x22xf32, #tpu.memory_space<vmem>>, vector<1x16x16xf32>
    %869 = vector.shape_cast %868 : vector<1x16x16xf32> to vector<16x16xf32>
    %870 = arith.subf %867, %4 : vector<16x16xf32>
    %871 = arith.subf %869, %6 : vector<16x16xf32>
    %872 = arith.mulf %870, %870 : vector<16x16xf32>
    %cst_357 = arith.constant 8.100000e-01 : f32
    %873 = vector.broadcast %cst_357 : f32 to vector<16x16xf32>
    %874 = arith.addf %873, %872 : vector<16x16xf32>
    %875 = math.rsqrt %874 : vector<16x16xf32>
    %876 = arith.mulf %870, %875 : vector<16x16xf32>
    %877 = arith.mulf %871, %871 : vector<16x16xf32>
    %cst_358 = arith.constant 8.100000e-01 : f32
    %878 = vector.broadcast %cst_358 : f32 to vector<16x16xf32>
    %879 = arith.addf %878, %877 : vector<16x16xf32>
    %880 = math.rsqrt %879 : vector<16x16xf32>
    %881 = arith.mulf %871, %880 : vector<16x16xf32>
    %882 = arith.subf %876, %881 : vector<16x16xf32>
    %883 = arith.mulf %882, %882 : vector<16x16xf32>
    %cst_359 = arith.constant 1.000000e-01 : f32
    %884 = vector.broadcast %cst_359 : f32 to vector<16x16xf32>
    %885 = arith.addf %884, %883 : vector<16x16xf32>
    %886 = arith.divf %883, %885 : vector<16x16xf32>
    %887 = arith.addf %865, %886 : vector<16x16xf32>
    %c0_360 = arith.constant 0 : index
    %c5_361 = arith.constant 5 : index
    %c5_362 = arith.constant 5 : index
    %888 = vector.load %arg1[%c0_360, %c5_361, %c5_362] : memref<1x22x22xf32, #tpu.memory_space<vmem>>, vector<1x16x16xf32>
    %889 = vector.shape_cast %888 : vector<1x16x16xf32> to vector<16x16xf32>
    %c0_363 = arith.constant 0 : index
    %c5_364 = arith.constant 5 : index
    %c5_365 = arith.constant 5 : index
    %890 = vector.load %arg2[%c0_363, %c5_364, %c5_365] : memref<1x22x22xf32, #tpu.memory_space<vmem>>, vector<1x16x16xf32>
    %891 = vector.shape_cast %890 : vector<1x16x16xf32> to vector<16x16xf32>
    %892 = arith.subf %889, %4 : vector<16x16xf32>
    %893 = arith.subf %891, %6 : vector<16x16xf32>
    %894 = arith.mulf %892, %892 : vector<16x16xf32>
    %cst_366 = arith.constant 8.100000e-01 : f32
    %895 = vector.broadcast %cst_366 : f32 to vector<16x16xf32>
    %896 = arith.addf %895, %894 : vector<16x16xf32>
    %897 = math.rsqrt %896 : vector<16x16xf32>
    %898 = arith.mulf %892, %897 : vector<16x16xf32>
    %899 = arith.mulf %893, %893 : vector<16x16xf32>
    %cst_367 = arith.constant 8.100000e-01 : f32
    %900 = vector.broadcast %cst_367 : f32 to vector<16x16xf32>
    %901 = arith.addf %900, %899 : vector<16x16xf32>
    %902 = math.rsqrt %901 : vector<16x16xf32>
    %903 = arith.mulf %893, %902 : vector<16x16xf32>
    %904 = arith.subf %898, %903 : vector<16x16xf32>
    %905 = arith.mulf %904, %904 : vector<16x16xf32>
    %cst_368 = arith.constant 1.000000e-01 : f32
    %906 = vector.broadcast %cst_368 : f32 to vector<16x16xf32>
    %907 = arith.addf %906, %905 : vector<16x16xf32>
    %908 = arith.divf %905, %907 : vector<16x16xf32>
    %909 = arith.addf %887, %908 : vector<16x16xf32>
    %c0_369 = arith.constant 0 : index
    %c5_370 = arith.constant 5 : index
    %c6_371 = arith.constant 6 : index
    %910 = vector.load %arg1[%c0_369, %c5_370, %c6_371] : memref<1x22x22xf32, #tpu.memory_space<vmem>>, vector<1x16x16xf32>
    %911 = vector.shape_cast %910 : vector<1x16x16xf32> to vector<16x16xf32>
    %c0_372 = arith.constant 0 : index
    %c5_373 = arith.constant 5 : index
    %c6_374 = arith.constant 6 : index
    %912 = vector.load %arg2[%c0_372, %c5_373, %c6_374] : memref<1x22x22xf32, #tpu.memory_space<vmem>>, vector<1x16x16xf32>
    %913 = vector.shape_cast %912 : vector<1x16x16xf32> to vector<16x16xf32>
    %914 = arith.subf %911, %4 : vector<16x16xf32>
    %915 = arith.subf %913, %6 : vector<16x16xf32>
    %916 = arith.mulf %914, %914 : vector<16x16xf32>
    %cst_375 = arith.constant 8.100000e-01 : f32
    %917 = vector.broadcast %cst_375 : f32 to vector<16x16xf32>
    %918 = arith.addf %917, %916 : vector<16x16xf32>
    %919 = math.rsqrt %918 : vector<16x16xf32>
    %920 = arith.mulf %914, %919 : vector<16x16xf32>
    %921 = arith.mulf %915, %915 : vector<16x16xf32>
    %cst_376 = arith.constant 8.100000e-01 : f32
    %922 = vector.broadcast %cst_376 : f32 to vector<16x16xf32>
    %923 = arith.addf %922, %921 : vector<16x16xf32>
    %924 = math.rsqrt %923 : vector<16x16xf32>
    %925 = arith.mulf %915, %924 : vector<16x16xf32>
    %926 = arith.subf %920, %925 : vector<16x16xf32>
    %927 = arith.mulf %926, %926 : vector<16x16xf32>
    %cst_377 = arith.constant 1.000000e-01 : f32
    %928 = vector.broadcast %cst_377 : f32 to vector<16x16xf32>
    %929 = arith.addf %928, %927 : vector<16x16xf32>
    %930 = arith.divf %927, %929 : vector<16x16xf32>
    %931 = arith.addf %909, %930 : vector<16x16xf32>
    %c0_378 = arith.constant 0 : index
    %c6_379 = arith.constant 6 : index
    %c0_380 = arith.constant 0 : index
    %932 = vector.load %arg1[%c0_378, %c6_379, %c0_380] : memref<1x22x22xf32, #tpu.memory_space<vmem>>, vector<1x16x16xf32>
    %933 = vector.shape_cast %932 : vector<1x16x16xf32> to vector<16x16xf32>
    %c0_381 = arith.constant 0 : index
    %c6_382 = arith.constant 6 : index
    %c0_383 = arith.constant 0 : index
    %934 = vector.load %arg2[%c0_381, %c6_382, %c0_383] : memref<1x22x22xf32, #tpu.memory_space<vmem>>, vector<1x16x16xf32>
    %935 = vector.shape_cast %934 : vector<1x16x16xf32> to vector<16x16xf32>
    %936 = arith.subf %933, %4 : vector<16x16xf32>
    %937 = arith.subf %935, %6 : vector<16x16xf32>
    %938 = arith.mulf %936, %936 : vector<16x16xf32>
    %cst_384 = arith.constant 8.100000e-01 : f32
    %939 = vector.broadcast %cst_384 : f32 to vector<16x16xf32>
    %940 = arith.addf %939, %938 : vector<16x16xf32>
    %941 = math.rsqrt %940 : vector<16x16xf32>
    %942 = arith.mulf %936, %941 : vector<16x16xf32>
    %943 = arith.mulf %937, %937 : vector<16x16xf32>
    %cst_385 = arith.constant 8.100000e-01 : f32
    %944 = vector.broadcast %cst_385 : f32 to vector<16x16xf32>
    %945 = arith.addf %944, %943 : vector<16x16xf32>
    %946 = math.rsqrt %945 : vector<16x16xf32>
    %947 = arith.mulf %937, %946 : vector<16x16xf32>
    %948 = arith.subf %942, %947 : vector<16x16xf32>
    %949 = arith.mulf %948, %948 : vector<16x16xf32>
    %cst_386 = arith.constant 1.000000e-01 : f32
    %950 = vector.broadcast %cst_386 : f32 to vector<16x16xf32>
    %951 = arith.addf %950, %949 : vector<16x16xf32>
    %952 = arith.divf %949, %951 : vector<16x16xf32>
    %953 = arith.addf %931, %952 : vector<16x16xf32>
    %c0_387 = arith.constant 0 : index
    %c6_388 = arith.constant 6 : index
    %c1_389 = arith.constant 1 : index
    %954 = vector.load %arg1[%c0_387, %c6_388, %c1_389] : memref<1x22x22xf32, #tpu.memory_space<vmem>>, vector<1x16x16xf32>
    %955 = vector.shape_cast %954 : vector<1x16x16xf32> to vector<16x16xf32>
    %c0_390 = arith.constant 0 : index
    %c6_391 = arith.constant 6 : index
    %c1_392 = arith.constant 1 : index
    %956 = vector.load %arg2[%c0_390, %c6_391, %c1_392] : memref<1x22x22xf32, #tpu.memory_space<vmem>>, vector<1x16x16xf32>
    %957 = vector.shape_cast %956 : vector<1x16x16xf32> to vector<16x16xf32>
    %958 = arith.subf %955, %4 : vector<16x16xf32>
    %959 = arith.subf %957, %6 : vector<16x16xf32>
    %960 = arith.mulf %958, %958 : vector<16x16xf32>
    %cst_393 = arith.constant 8.100000e-01 : f32
    %961 = vector.broadcast %cst_393 : f32 to vector<16x16xf32>
    %962 = arith.addf %961, %960 : vector<16x16xf32>
    %963 = math.rsqrt %962 : vector<16x16xf32>
    %964 = arith.mulf %958, %963 : vector<16x16xf32>
    %965 = arith.mulf %959, %959 : vector<16x16xf32>
    %cst_394 = arith.constant 8.100000e-01 : f32
    %966 = vector.broadcast %cst_394 : f32 to vector<16x16xf32>
    %967 = arith.addf %966, %965 : vector<16x16xf32>
    %968 = math.rsqrt %967 : vector<16x16xf32>
    %969 = arith.mulf %959, %968 : vector<16x16xf32>
    %970 = arith.subf %964, %969 : vector<16x16xf32>
    %971 = arith.mulf %970, %970 : vector<16x16xf32>
    %cst_395 = arith.constant 1.000000e-01 : f32
    %972 = vector.broadcast %cst_395 : f32 to vector<16x16xf32>
    %973 = arith.addf %972, %971 : vector<16x16xf32>
    %974 = arith.divf %971, %973 : vector<16x16xf32>
    %975 = arith.addf %953, %974 : vector<16x16xf32>
    %c0_396 = arith.constant 0 : index
    %c6_397 = arith.constant 6 : index
    %c2_398 = arith.constant 2 : index
    %976 = vector.load %arg1[%c0_396, %c6_397, %c2_398] : memref<1x22x22xf32, #tpu.memory_space<vmem>>, vector<1x16x16xf32>
    %977 = vector.shape_cast %976 : vector<1x16x16xf32> to vector<16x16xf32>
    %c0_399 = arith.constant 0 : index
    %c6_400 = arith.constant 6 : index
    %c2_401 = arith.constant 2 : index
    %978 = vector.load %arg2[%c0_399, %c6_400, %c2_401] : memref<1x22x22xf32, #tpu.memory_space<vmem>>, vector<1x16x16xf32>
    %979 = vector.shape_cast %978 : vector<1x16x16xf32> to vector<16x16xf32>
    %980 = arith.subf %977, %4 : vector<16x16xf32>
    %981 = arith.subf %979, %6 : vector<16x16xf32>
    %982 = arith.mulf %980, %980 : vector<16x16xf32>
    %cst_402 = arith.constant 8.100000e-01 : f32
    %983 = vector.broadcast %cst_402 : f32 to vector<16x16xf32>
    %984 = arith.addf %983, %982 : vector<16x16xf32>
    %985 = math.rsqrt %984 : vector<16x16xf32>
    %986 = arith.mulf %980, %985 : vector<16x16xf32>
    %987 = arith.mulf %981, %981 : vector<16x16xf32>
    %cst_403 = arith.constant 8.100000e-01 : f32
    %988 = vector.broadcast %cst_403 : f32 to vector<16x16xf32>
    %989 = arith.addf %988, %987 : vector<16x16xf32>
    %990 = math.rsqrt %989 : vector<16x16xf32>
    %991 = arith.mulf %981, %990 : vector<16x16xf32>
    %992 = arith.subf %986, %991 : vector<16x16xf32>
    %993 = arith.mulf %992, %992 : vector<16x16xf32>
    %cst_404 = arith.constant 1.000000e-01 : f32
    %994 = vector.broadcast %cst_404 : f32 to vector<16x16xf32>
    %995 = arith.addf %994, %993 : vector<16x16xf32>
    %996 = arith.divf %993, %995 : vector<16x16xf32>
    %997 = arith.addf %975, %996 : vector<16x16xf32>
    %c0_405 = arith.constant 0 : index
    %c6_406 = arith.constant 6 : index
    %c3_407 = arith.constant 3 : index
    %998 = vector.load %arg1[%c0_405, %c6_406, %c3_407] : memref<1x22x22xf32, #tpu.memory_space<vmem>>, vector<1x16x16xf32>
    %999 = vector.shape_cast %998 : vector<1x16x16xf32> to vector<16x16xf32>
    %c0_408 = arith.constant 0 : index
    %c6_409 = arith.constant 6 : index
    %c3_410 = arith.constant 3 : index
    %1000 = vector.load %arg2[%c0_408, %c6_409, %c3_410] : memref<1x22x22xf32, #tpu.memory_space<vmem>>, vector<1x16x16xf32>
    %1001 = vector.shape_cast %1000 : vector<1x16x16xf32> to vector<16x16xf32>
    %1002 = arith.subf %999, %4 : vector<16x16xf32>
    %1003 = arith.subf %1001, %6 : vector<16x16xf32>
    %1004 = arith.mulf %1002, %1002 : vector<16x16xf32>
    %cst_411 = arith.constant 8.100000e-01 : f32
    %1005 = vector.broadcast %cst_411 : f32 to vector<16x16xf32>
    %1006 = arith.addf %1005, %1004 : vector<16x16xf32>
    %1007 = math.rsqrt %1006 : vector<16x16xf32>
    %1008 = arith.mulf %1002, %1007 : vector<16x16xf32>
    %1009 = arith.mulf %1003, %1003 : vector<16x16xf32>
    %cst_412 = arith.constant 8.100000e-01 : f32
    %1010 = vector.broadcast %cst_412 : f32 to vector<16x16xf32>
    %1011 = arith.addf %1010, %1009 : vector<16x16xf32>
    %1012 = math.rsqrt %1011 : vector<16x16xf32>
    %1013 = arith.mulf %1003, %1012 : vector<16x16xf32>
    %1014 = arith.subf %1008, %1013 : vector<16x16xf32>
    %1015 = arith.mulf %1014, %1014 : vector<16x16xf32>
    %cst_413 = arith.constant 1.000000e-01 : f32
    %1016 = vector.broadcast %cst_413 : f32 to vector<16x16xf32>
    %1017 = arith.addf %1016, %1015 : vector<16x16xf32>
    %1018 = arith.divf %1015, %1017 : vector<16x16xf32>
    %1019 = arith.addf %997, %1018 : vector<16x16xf32>
    %c0_414 = arith.constant 0 : index
    %c6_415 = arith.constant 6 : index
    %c4_416 = arith.constant 4 : index
    %1020 = vector.load %arg1[%c0_414, %c6_415, %c4_416] : memref<1x22x22xf32, #tpu.memory_space<vmem>>, vector<1x16x16xf32>
    %1021 = vector.shape_cast %1020 : vector<1x16x16xf32> to vector<16x16xf32>
    %c0_417 = arith.constant 0 : index
    %c6_418 = arith.constant 6 : index
    %c4_419 = arith.constant 4 : index
    %1022 = vector.load %arg2[%c0_417, %c6_418, %c4_419] : memref<1x22x22xf32, #tpu.memory_space<vmem>>, vector<1x16x16xf32>
    %1023 = vector.shape_cast %1022 : vector<1x16x16xf32> to vector<16x16xf32>
    %1024 = arith.subf %1021, %4 : vector<16x16xf32>
    %1025 = arith.subf %1023, %6 : vector<16x16xf32>
    %1026 = arith.mulf %1024, %1024 : vector<16x16xf32>
    %cst_420 = arith.constant 8.100000e-01 : f32
    %1027 = vector.broadcast %cst_420 : f32 to vector<16x16xf32>
    %1028 = arith.addf %1027, %1026 : vector<16x16xf32>
    %1029 = math.rsqrt %1028 : vector<16x16xf32>
    %1030 = arith.mulf %1024, %1029 : vector<16x16xf32>
    %1031 = arith.mulf %1025, %1025 : vector<16x16xf32>
    %cst_421 = arith.constant 8.100000e-01 : f32
    %1032 = vector.broadcast %cst_421 : f32 to vector<16x16xf32>
    %1033 = arith.addf %1032, %1031 : vector<16x16xf32>
    %1034 = math.rsqrt %1033 : vector<16x16xf32>
    %1035 = arith.mulf %1025, %1034 : vector<16x16xf32>
    %1036 = arith.subf %1030, %1035 : vector<16x16xf32>
    %1037 = arith.mulf %1036, %1036 : vector<16x16xf32>
    %cst_422 = arith.constant 1.000000e-01 : f32
    %1038 = vector.broadcast %cst_422 : f32 to vector<16x16xf32>
    %1039 = arith.addf %1038, %1037 : vector<16x16xf32>
    %1040 = arith.divf %1037, %1039 : vector<16x16xf32>
    %1041 = arith.addf %1019, %1040 : vector<16x16xf32>
    %c0_423 = arith.constant 0 : index
    %c6_424 = arith.constant 6 : index
    %c5_425 = arith.constant 5 : index
    %1042 = vector.load %arg1[%c0_423, %c6_424, %c5_425] : memref<1x22x22xf32, #tpu.memory_space<vmem>>, vector<1x16x16xf32>
    %1043 = vector.shape_cast %1042 : vector<1x16x16xf32> to vector<16x16xf32>
    %c0_426 = arith.constant 0 : index
    %c6_427 = arith.constant 6 : index
    %c5_428 = arith.constant 5 : index
    %1044 = vector.load %arg2[%c0_426, %c6_427, %c5_428] : memref<1x22x22xf32, #tpu.memory_space<vmem>>, vector<1x16x16xf32>
    %1045 = vector.shape_cast %1044 : vector<1x16x16xf32> to vector<16x16xf32>
    %1046 = arith.subf %1043, %4 : vector<16x16xf32>
    %1047 = arith.subf %1045, %6 : vector<16x16xf32>
    %1048 = arith.mulf %1046, %1046 : vector<16x16xf32>
    %cst_429 = arith.constant 8.100000e-01 : f32
    %1049 = vector.broadcast %cst_429 : f32 to vector<16x16xf32>
    %1050 = arith.addf %1049, %1048 : vector<16x16xf32>
    %1051 = math.rsqrt %1050 : vector<16x16xf32>
    %1052 = arith.mulf %1046, %1051 : vector<16x16xf32>
    %1053 = arith.mulf %1047, %1047 : vector<16x16xf32>
    %cst_430 = arith.constant 8.100000e-01 : f32
    %1054 = vector.broadcast %cst_430 : f32 to vector<16x16xf32>
    %1055 = arith.addf %1054, %1053 : vector<16x16xf32>
    %1056 = math.rsqrt %1055 : vector<16x16xf32>
    %1057 = arith.mulf %1047, %1056 : vector<16x16xf32>
    %1058 = arith.subf %1052, %1057 : vector<16x16xf32>
    %1059 = arith.mulf %1058, %1058 : vector<16x16xf32>
    %cst_431 = arith.constant 1.000000e-01 : f32
    %1060 = vector.broadcast %cst_431 : f32 to vector<16x16xf32>
    %1061 = arith.addf %1060, %1059 : vector<16x16xf32>
    %1062 = arith.divf %1059, %1061 : vector<16x16xf32>
    %1063 = arith.addf %1041, %1062 : vector<16x16xf32>
    %c0_432 = arith.constant 0 : index
    %c6_433 = arith.constant 6 : index
    %c6_434 = arith.constant 6 : index
    %1064 = vector.load %arg1[%c0_432, %c6_433, %c6_434] : memref<1x22x22xf32, #tpu.memory_space<vmem>>, vector<1x16x16xf32>
    %1065 = vector.shape_cast %1064 : vector<1x16x16xf32> to vector<16x16xf32>
    %c0_435 = arith.constant 0 : index
    %c6_436 = arith.constant 6 : index
    %c6_437 = arith.constant 6 : index
    %1066 = vector.load %arg2[%c0_435, %c6_436, %c6_437] : memref<1x22x22xf32, #tpu.memory_space<vmem>>, vector<1x16x16xf32>
    %1067 = vector.shape_cast %1066 : vector<1x16x16xf32> to vector<16x16xf32>
    %1068 = arith.subf %1065, %4 : vector<16x16xf32>
    %1069 = arith.subf %1067, %6 : vector<16x16xf32>
    %1070 = arith.mulf %1068, %1068 : vector<16x16xf32>
    %cst_438 = arith.constant 8.100000e-01 : f32
    %1071 = vector.broadcast %cst_438 : f32 to vector<16x16xf32>
    %1072 = arith.addf %1071, %1070 : vector<16x16xf32>
    %1073 = math.rsqrt %1072 : vector<16x16xf32>
    %1074 = arith.mulf %1068, %1073 : vector<16x16xf32>
    %1075 = arith.mulf %1069, %1069 : vector<16x16xf32>
    %cst_439 = arith.constant 8.100000e-01 : f32
    %1076 = vector.broadcast %cst_439 : f32 to vector<16x16xf32>
    %1077 = arith.addf %1076, %1075 : vector<16x16xf32>
    %1078 = math.rsqrt %1077 : vector<16x16xf32>
    %1079 = arith.mulf %1069, %1078 : vector<16x16xf32>
    %1080 = arith.subf %1074, %1079 : vector<16x16xf32>
    %1081 = arith.mulf %1080, %1080 : vector<16x16xf32>
    %cst_440 = arith.constant 1.000000e-01 : f32
    %1082 = vector.broadcast %cst_440 : f32 to vector<16x16xf32>
    %1083 = arith.addf %1082, %1081 : vector<16x16xf32>
    %1084 = arith.divf %1081, %1083 : vector<16x16xf32>
    %1085 = arith.addf %1063, %1084 : vector<16x16xf32>
    %c0_441 = arith.constant 0 : index
    %c0_442 = arith.constant 0 : index
    %1086 = vector.load %arg4[%c0_441, %c0_442] : memref<16x16xf32, #tpu.memory_space<vmem>>, vector<16x16xf32>
    %1087 = arith.addf %1086, %1085 : vector<16x16xf32>
    %c0_443 = arith.constant 0 : index
    %c0_444 = arith.constant 0 : index
    %1088 = vector.load %arg4[%c0_443, %c0_444] : memref<16x16xf32, #tpu.memory_space<vmem>>, vector<16x16xf32>
    tpu.vector_store %arg4[%c0_443, %c0_444], %1087 {strides = array<i32>} : memref<16x16xf32, #tpu.memory_space<vmem>>, vector<16x16xf32>,
    %c1_i32 = arith.constant 1 : i32
    %1089 = arith.cmpi eq, %arg0, %c1_i32 : i32
    %1090 = arith.extui %1089 : i1 to i32
    %c0_i32_445 = arith.constant 0 : i32
    %1091 = arith.cmpi ne, %1090, %c0_i32_445 : i32
    scf.if %1091 {
      %c1_446 = arith.constant 1 : index
      %c1_447 = arith.constant 1 : index
      %1092 = vector.load %arg4[%c1_446, %c1_447] : memref<16x16xf32, #tpu.memory_space<vmem>>, vector<14x14xf32>
      %1093 = vector.shape_cast %1092 : vector<14x14xf32> to vector<1x14x14xf32>
      %cst_448 = arith.constant dense<0.000000e+00> : vector<1xf32>
      %1094 = vector.multi_reduction <add>, %1093, %cst_448 [1, 2] : vector<1x14x14xf32> to vector<1xf32>
      %1095 = vector.shape_cast %1094 : vector<1xf32> to vector<1x1x1xf32>
      %1096 = vector.extract %1095[0, 0, 0] : f32 from vector<1x1x1xf32>
      %1097 = vector.broadcast %1096 : f32 to vector<1x1xf32>
      %cst_449 = arith.constant 3.98596931E-5 : f32
      %1098 = vector.broadcast %cst_449 : f32 to vector<1x1xf32>
      %1099 = arith.mulf %1097, %1098 : vector<1x1xf32>
      %c0_450 = arith.constant 0 : index
      %c0_451 = arith.constant 0 : index
      %1100 = vector.load %arg3[%c0_450, %c0_451] : memref<1x1xf32, #tpu.memory_space<vmem>>, vector<1x1xf32>
      tpu.vector_store %arg3[%c0_450, %c0_451], %1099 {strides = array<i32>} : memref<1x1xf32, #tpu.memory_space<vmem>>, vector<1x1xf32>,
    } else {
    }
    return
  }
  func.func @transform_0(%arg0: i32) -> (i32, i32, i32) {
    %c0_i32 = arith.constant 0 : i32
    %c0_i32_0 = arith.constant 0 : i32
    %c0_i32_1 = arith.constant 0 : i32
    return %arg0, %c0_i32, %c0_i32_0 : i32, i32, i32
  }
  func.func @transform_1(%arg0: i32) -> (i32, i32, i32) {
    %c0_i32 = arith.constant 0 : i32
    %c0_i32_0 = arith.constant 0 : i32
    %c0_i32_1 = arith.constant 0 : i32
    return %arg0, %c0_i32, %c0_i32_0 : i32, i32, i32
  }
  func.func @transform_2(%arg0: i32) -> (i32, i32) {
    %c0_i32 = arith.constant 0 : i32
    %c0_i32_0 = arith.constant 0 : i32
    %c0_i32_1 = arith.constant 0 : i32
    return %c0_i32, %c0_i32_0 : i32, i32
  }
}

</mosaic_0001>

<llo_original>
// kernel: tpu_custom_call.1
$region0: #{tpu_custom_call.1}
  #allocation0 [shape = 'u32[]', space=smem, size = 0x4, offset = 0x4, fixed_abs, tag = 'smem constant byte address 0x4 - core index']
  #allocation1 [shape = 'u32[144,128]{1,0:T(1,128)}', space=vmem, size = 0x12000, scoped, tag = 'internal scratch']
  #allocation2 [shape = 'f32[16,16]{1,0:T(8,128)}', space=vmem, size = 0x2000, scoped, tag = 'scratch operand']
  %s0 = inlined_call_operand.vmem [shape: f32[2,22,22], index: 0, kind: input, shape index: {}]
  %s1 = inlined_call_operand.vmem [shape: f32[2,22,22], index: 1, kind: input, shape index: {}]
  %s2 = inlined_call_operand.hbm [shape: f32[1,1], index: 2, kind: output, shape index: {}]
  %s3 = sld [smem:[#allocation0]]
  $region49: #{tpu_custom_call.1} parent=0
    _
  %s5 = ssub.s32 1, %s3
  %s6 = scalar_select 0, %s5, %s3
  $region1: #{tpu_custom_call.1} parent=0
    #allocation3 [shape = 'u8[512]{0}', space=vmem, size = 0x400, scoped, tag = 'output window, operand 0, single buffered']
    #allocation4 [shape = 's32[2]{0}', space=sflag, size = 0x8, scoped, tag = 'scoped memory for tpu_custom_call.1']
    %7 = vsyncpa [#allocation4], 0
    loop: start=0, step=1, limit=4
    $region2: #{tpu_custom_call.1} parent=1 // loop_pre_header
      _
    $region3: #{tpu_custom_call.1} parent=1 // loop_header
      %s9 = sphi 0, %s13
      %p10 = scmp.ge.s32.totalorder %s9, 4
      %s19 = sphi 0, %s21
      %s22 = sphi 0, %s19
      %s23 = sphi 0, %s22
      %s39 = sphi 0, %s23
      %s45 = sphi 0, %s47
      %s48 = sphi 0, %s45
      %s49 = sphi 0, %s48
      %s65 = sphi 0, %s49
      %s69 = sphi 0, %s69
      %s71 = sphi 0, %s69
      %s72 = sphi 0, %s71
      %s86 = sphi 0, %s72
    $region4: #{tpu_custom_call.1} parent=1 // loop_header_branch
      %12 = sbr.rel (%p10) target = $region8
    $region5: #{tpu_custom_call.1} parent=1 // loop_body
      %s14 = ssub.s32 %s9, 1
      %s15 = ssub.s32 %s9, 2
      %s16 = sadd.s32 %s9, 1
      %s17 = ssub.s32 %s9, %s16
      %p18 = scmp.eq.s32.totalorder %s17, 0
      %s20 = sadd.s32 %s19, 1
      %s21 = scalar_select %p18, %s19, %s20
      %p24 = pneg %p18
      %p25 = scmp.eq.s32.totalorder %s9, 1
      %p26 = por %p24, %p25
      %p27 = scmp.ne.s32.totalorder %s19, %s22
      %p28 = scmp.eq.s32.totalorder %s9, 0
      %p29 = por %p27, %p28
      %p30 = scmp.ne.s32.totalorder %s19, %s22
      %p31 = scmp.eq.s32.totalorder %s14, 1
      %p32 = por %p30, %p31
      %p33 = scmp.ne.s32.totalorder %s22, %s23
      %p34 = scmp.eq.s32.totalorder %s14, 0
      %p35 = por %p33, %p34
      %p36 = scmp.ne.s32.totalorder %s22, %s23
      %p37 = scmp.eq.s32.totalorder %s15, 1
      %p38 = por %p36, %p37
      %p40 = scmp.ne.s32.totalorder %s23, %s39
      %p41 = scmp.eq.s32.totalorder %s15, 0
      %p42 = por %p40, %p41
      %s43 = ssub.s32 %s9, %s16
      %p44 = scmp.eq.s32.totalorder %s43, 0
      %s46 = sadd.s32 %s45, 1
      %s47 = scalar_select %p44, %s45, %s46
      %p50 = pneg %p44
      %p51 = scmp.eq.s32.totalorder %s9, 1
      %p52 = por %p50, %p51
      %p53 = scmp.ne.s32.totalorder %s45, %s48
      %p54 = scmp.eq.s32.totalorder %s9, 0
      %p55 = por %p53, %p54
      %p56 = scmp.ne.s32.totalorder %s45, %s48
      %p57 = scmp.eq.s32.totalorder %s14, 1
      %p58 = por %p56, %p57
      %p59 = scmp.ne.s32.totalorder %s48, %s49
      %p60 = scmp.eq.s32.totalorder %s14, 0
      %p61 = por %p59, %p60
      %p62 = scmp.ne.s32.totalorder %s48, %s49
      %p63 = scmp.eq.s32.totalorder %s15, 1
      %p64 = por %p62, %p63
      %p66 = scmp.ne.s32.totalorder %s49, %s65
      %p67 = scmp.eq.s32.totalorder %s15, 0
      %p68 = por %p66, %p67
      %s70 = sadd.s32 %s69, 1
      %p73 = scmp.eq.s32.totalorder %s9, 1
      %p74 = scmp.ne.s32.totalorder %s69, %s71
      %p75 = scmp.eq.s32.totalorder %s9, 0
      %p76 = por %p74, %p75
      %p77 = scmp.ne.s32.totalorder %s69, %s71
      %p78 = scmp.eq.s32.totalorder %s14, 1
      %p79 = por %p77, %p78
      %p80 = scmp.ne.s32.totalorder %s71, %s72
      %p81 = scmp.eq.s32.totalorder %s14, 0
      %p82 = por %p80, %p81
      %p83 = scmp.ne.s32.totalorder %s71, %s72
      %p84 = scmp.eq.s32.totalorder %s15, 1
      %p85 = por %p83, %p84
      %p87 = scmp.ne.s32.totalorder %s72, %s86
      %p88 = scmp.eq.s32.totalorder %s15, 0
      %p89 = por %p87, %p88
      %p90 = scmp.le.s32.totalorder 1, %s9
      %p91 = scmp.lt.s32.totalorder %s9, 3
      %p92 = pnand %p90, %p91
      %p93 = pneg %p92
      // Predicated region
      $region9: #{tpu_custom_call.1} parent=5 // pred_check
        _
      $region10: #{tpu_custom_call.1} parent=5 // pred_check_branch
        %95 = sbr.rel (%p92) target = $region12
      $region11: #{tpu_custom_call.1} parent=5 // pred_region
        %s96 = ssub.s32 %s9, 1
      $region12: #{tpu_custom_call.1} parent=5 // pred_fallthru
        _
      %p97 = scmp.lt.s32.totalorder %s9, 2
      // Predicated region
      $region13: #{tpu_custom_call.1} parent=5 // pred_check
        %p98 = pneg %p97
      $region14: #{tpu_custom_call.1} parent=5 // pred_check_branch
        %100 = sbr.rel (%p98) target = $region16
      $region15: #{tpu_custom_call.1} parent=5 // pred_region
        // Predicated region
        $region17: #{tpu_custom_call.1} parent=15 // pred_check
          %p101 = pneg %p29
        $region18: #{tpu_custom_call.1} parent=15 // pred_check_branch
          %103 = sbr.rel (%p101) target = $region20
        $region19: #{tpu_custom_call.1} parent=15 // pred_region
          %p104 = scmp.lt.s32.totalorder %s9, 1
          %s105 = scalar_select %p104, %s9, 1
          %s106 = smul.addr %s105, 3
          %s107 = smul.addr %s106, 8
          %s108 = scalar_lea.vmem %s0, %s107
        $region20: #{tpu_custom_call.1} parent=15 // pred_fallthru
          _
        // Predicated region
        $region21: #{tpu_custom_call.1} parent=15 // pred_check
          %p109 = pneg %p55
        $region22: #{tpu_custom_call.1} parent=15 // pred_check_branch
          %111 = sbr.rel (%p109) target = $region24
        $region23: #{tpu_custom_call.1} parent=15 // pred_region
          %p112 = scmp.lt.s32.totalorder %s9, 1
          %s113 = scalar_select %p112, %s9, 1
          %s114 = smul.addr %s113, 3
          %s115 = smul.addr %s114, 8
          %s116 = scalar_lea.vmem %s1, %s115
        $region24: #{tpu_custom_call.1} parent=15 // pred_fallthru
          _
      $region16: #{tpu_custom_call.1} parent=5 // pred_fallthru
        _
      %p117 = scmp.le.s32.totalorder 1, %s9
      %p118 = scmp.lt.s32.totalorder %s9, 3
      %p119 = pnand %p117, %p118
      %p120 = pneg %p119
      // Predicated region
      $region25: #{tpu_custom_call.1} parent=5 // pred_check
        _
      $region26: #{tpu_custom_call.1} parent=5 // pred_check_branch
        %122 = sbr.rel (%p119) target = $region28
      $region27: #{tpu_custom_call.1} parent=5 // pred_region
        %s123 = ssub.s32 %s9, 1
        %p124 = scmp.lt.s32.totalorder %s14, 1
        %s125 = scalar_select %p124, %s14, 1
        %s126 = smul.addr %s125, 3
        %s127 = smul.addr %s126, 8
        %s128 = scalar_lea.vmem %s0, %s127
        %p129 = pneg %p35
        %p130 = pneg %p32
        %p131 = scmp.lt.s32.totalorder %s14, 1
        %s132 = scalar_select %p131, %s14, 1
        %s133 = smul.addr %s132, 3
        %s134 = smul.addr %s133, 8
        %s135 = scalar_lea.vmem %s1, %s134
        %p136 = pneg %p61
        %p137 = pneg %p58
        %p138 = pneg %p82
        %p139 = pneg %p79
        %p140 = scmp.lt.s32.totalorder %s14, 1
        %s141 = scalar_select %p140, %s14, 1
        %s142 = smul.addr %s141, 3
        %s143 = smul.addr %s142, 8
        %s144 = scalar_lea.vmem %s0, %s143
        %p145 = scmp.lt.s32.totalorder %s14, 1
        %s146 = scalar_select %p145, %s14, 1
        %s147 = smul.addr %s146, 3
        %s148 = smul.addr %s147, 8
        %s149 = scalar_lea.vmem %s1, %s148
        %p150 = scmp.eq.s32.totalorder %s14, 0
        // Predicated region
        $region29: #{tpu_custom_call.1} parent=27 // pred_check
          %p151 = pneg %p150
        $region30: #{tpu_custom_call.1} parent=27 // pred_check_branch
          %153 = sbr.rel (%p151) target = $region32
        $region31: #{tpu_custom_call.1} parent=27 // pred_region
          %vm154 = vcmask 130048
          %155 = vst.msk [vmem:[#allocation2] sm:$0xff] %vm154, 0.0
          %156 = vst.msk [vmem:[#allocation2 + $0x8] sm:$0xff] %vm154, 0.0
        $region32: #{tpu_custom_call.1} parent=27 // pred_fallthru
          _
        %v157 = vld [vmem:[%s144 + $0x3] sm:$0xff]
        %v158 = vld [vmem:[%s144 + $0xb] sm:$0xff]
        %v159 = vld [vmem:[%s149 + $0x3] sm:$0xff]
        %v160 = vld [vmem:[%s149 + $0xb] sm:$0xff]
        %v161 = vld [vmem:[%s144] sm:$0xff]
        %v162 = vld [vmem:[%s144 + $0x8] sm:$0xff]
        %v163 = vld [vmem:[%s149] sm:$0xff]
        %v164 = vld [vmem:[%s149 + $0x8] sm:$0xff]
        %167 = vrot.lane.b32.xlu0 %v157, 125
        %v168 = vpop.permute.xlu0 %167
        %169 = vrot.lane.b32.xlu0 %v158, 125
        %v170 = vpop.permute.xlu0 %169
        %v173 = vsub.f32 %v161, %v168
        %v174 = vsub.f32 %v162, %v170
        %177 = vrot.lane.b32.xlu0 %v159, 125
        %v178 = vpop.permute.xlu0 %177
        %179 = vrot.lane.b32.xlu0 %v160, 125
        %v180 = vpop.permute.xlu0 %179
        %v183 = vsub.f32 %v163, %v178
        %v184 = vsub.f32 %v164, %v180
        %v185 = vmul.f32 %v173, %v173
        %v186 = vmul.f32 %v174, %v174
        %v187 = vadd.f32 %v185, 0.81
        %v188 = vadd.f32 %v186, 0.81
        %v189 = vrsqrt.pop %v187
        %v190 = vrsqrt.pop %v188
        %v191 = vmul.f32 %v173, %v189
        %v192 = vmul.f32 %v174, %v190
        %v193 = vmul.f32 %v183, %v183
        %v194 = vmul.f32 %v184, %v184
        %v195 = vadd.f32 %v193, 0.81
        %v196 = vadd.f32 %v194, 0.81
        %v197 = vrsqrt.pop %v195
        %v198 = vrsqrt.pop %v196
        %v199 = vmul.f32 %v183, %v197
        %v200 = vmul.f32 %v184, %v198
        %v201 = vsub.f32 %v191, %v199
        %v202 = vsub.f32 %v192, %v200
        %v203 = vmul.f32 %v201, %v201
        %v204 = vmul.f32 %v202, %v202
        %v205 = vadd.f32 %v203, 0.1
        %v206 = vadd.f32 %v204, 0.1
        %v207 = vrcp.pop %v205
        %v208 = vmul.f32 %v203, %v207
        %v209 = vrcp.pop %v206
        %v210 = vmul.f32 %v204, %v209
        %v211 = vadd.f32 %v208, 0.0
        %v212 = vadd.f32 %v210, 0.0
        %213 = vrot.lane.b32.xlu0 %v157, 126
        %v214 = vpop.permute.xlu0 %213
        %215 = vrot.lane.b32.xlu0 %v158, 126
        %v216 = vpop.permute.xlu0 %215
        %v219 = vsub.f32 %v161, %v214
        %v220 = vsub.f32 %v162, %v216
        %221 = vrot.lane.b32.xlu0 %v159, 126
        %v222 = vpop.permute.xlu0 %221
        %223 = vrot.lane.b32.xlu0 %v160, 126
        %v224 = vpop.permute.xlu0 %223
        %v227 = vsub.f32 %v163, %v222
        %v228 = vsub.f32 %v164, %v224
        %v229 = vmul.f32 %v219, %v219
        %v230 = vmul.f32 %v220, %v220
        %v231 = vadd.f32 %v229, 0.81
        %v232 = vadd.f32 %v230, 0.81
        %v233 = vrsqrt.pop %v231
        %v234 = vrsqrt.pop %v232
        %v235 = vmul.f32 %v219, %v233
        %v236 = vmul.f32 %v220, %v234
        %v237 = vmul.f32 %v227, %v227
        %v238 = vmul.f32 %v228, %v228
        %v239 = vadd.f32 %v237, 0.81
        %v240 = vadd.f32 %v238, 0.81
        %v241 = vrsqrt.pop %v239
        %v242 = vrsqrt.pop %v240
        %v243 = vmul.f32 %v227, %v241
        %v244 = vmul.f32 %v228, %v242
        %v245 = vsub.f32 %v235, %v243
        %v246 = vsub.f32 %v236, %v244
        %v247 = vmul.f32 %v245, %v245
        %v248 = vmul.f32 %v246, %v246
        %v249 = vadd.f32 %v247, 0.1
        %v250 = vadd.f32 %v248, 0.1
        %v251 = vrcp.pop %v249
        %v252 = vmul.f32 %v247, %v251
        %v253 = vrcp.pop %v250
        %v254 = vmul.f32 %v248, %v253
        %257 = vrot.lane.b32.xlu0 %v252, 127
        %v258 = vpop.permute.xlu0 %257
        %259 = vrot.lane.b32.xlu0 %v254, 127
        %v260 = vpop.permute.xlu0 %259
        %v263 = vadd.f32 %v211, %v258
        %v264 = vadd.f32 %v212, %v260
        %265 = vrot.lane.b32.xlu0 %v157, 127
        %v266 = vpop.permute.xlu0 %265
        %267 = vrot.lane.b32.xlu0 %v158, 127
        %v268 = vpop.permute.xlu0 %267
        %v271 = vsub.f32 %v161, %v266
        %v272 = vsub.f32 %v162, %v268
        %273 = vrot.lane.b32.xlu0 %v159, 127
        %v274 = vpop.permute.xlu0 %273
        %275 = vrot.lane.b32.xlu0 %v160, 127
        %v276 = vpop.permute.xlu0 %275
        %v279 = vsub.f32 %v163, %v274
        %v280 = vsub.f32 %v164, %v276
        %v281 = vmul.f32 %v271, %v271
        %v282 = vmul.f32 %v272, %v272
        %v283 = vadd.f32 %v281, 0.81
        %v284 = vadd.f32 %v282, 0.81
        %v285 = vrsqrt.pop %v283
        %v286 = vrsqrt.pop %v284
        %v287 = vmul.f32 %v271, %v285
        %v288 = vmul.f32 %v272, %v286
        %v289 = vmul.f32 %v279, %v279
        %v290 = vmul.f32 %v280, %v280
        %v291 = vadd.f32 %v289, 0.81
        %v292 = vadd.f32 %v290, 0.81
        %v293 = vrsqrt.pop %v291
        %v294 = vrsqrt.pop %v292
        %v295 = vmul.f32 %v279, %v293
        %v296 = vmul.f32 %v280, %v294
        %v297 = vsub.f32 %v287, %v295
        %v298 = vsub.f32 %v288, %v296
        %v299 = vmul.f32 %v297, %v297
        %v300 = vmul.f32 %v298, %v298
        %v301 = vadd.f32 %v299, 0.1
        %v302 = vadd.f32 %v300, 0.1
        %v303 = vrcp.pop %v301
        %v304 = vmul.f32 %v299, %v303
        %v305 = vrcp.pop %v302
        %v306 = vmul.f32 %v300, %v305
        %309 = vrot.lane.b32.xlu0 %v304, 126
        %v310 = vpop.permute.xlu0 %309
        %311 = vrot.lane.b32.xlu0 %v306, 126
        %v312 = vpop.permute.xlu0 %311
        %v315 = vadd.f32 %v263, %v310
        %v316 = vadd.f32 %v264, %v312
        %v317 = vsub.f32 %v161, %v157
        %v318 = vsub.f32 %v162, %v158
        %v319 = vsub.f32 %v163, %v159
        %v320 = vsub.f32 %v164, %v160
        %v321 = vmul.f32 %v317, %v317
        %v322 = vmul.f32 %v318, %v318
        %v323 = vadd.f32 %v321, 0.81
        %v324 = vadd.f32 %v322, 0.81
        %v325 = vrsqrt.pop %v323
        %v326 = vrsqrt.pop %v324
        %v327 = vmul.f32 %v317, %v325
        %v328 = vmul.f32 %v318, %v326
        %v329 = vmul.f32 %v319, %v319
        %v330 = vmul.f32 %v320, %v320
        %v331 = vadd.f32 %v329, 0.81
        %v332 = vadd.f32 %v330, 0.81
        %v333 = vrsqrt.pop %v331
        %v334 = vrsqrt.pop %v332
        %v335 = vmul.f32 %v319, %v333
        %v336 = vmul.f32 %v320, %v334
        %v337 = vsub.f32 %v327, %v335
        %v338 = vsub.f32 %v328, %v336
        %v339 = vmul.f32 %v337, %v337
        %v340 = vmul.f32 %v338, %v338
        %v341 = vadd.f32 %v339, 0.1
        %v342 = vadd.f32 %v340, 0.1
        %v343 = vrcp.pop %v341
        %v344 = vmul.f32 %v339, %v343
        %v345 = vrcp.pop %v342
        %v346 = vmul.f32 %v340, %v345
        %349 = vrot.lane.b32.xlu0 %v344, 125
        %v350 = vpop.permute.xlu0 %349
        %351 = vrot.lane.b32.xlu0 %v346, 125
        %v352 = vpop.permute.xlu0 %351
        %v355 = vadd.f32 %v315, %v350
        %v356 = vadd.f32 %v316, %v352
        %357 = vrot.lane.b32.xlu0 %v157, 1
        %v358 = vpop.permute.xlu0 %357
        %359 = vrot.lane.b32.xlu0 %v158, 1
        %v360 = vpop.permute.xlu0 %359
        %v363 = vsub.f32 %v161, %v358
        %v364 = vsub.f32 %v162, %v360
        %365 = vrot.lane.b32.xlu0 %v159, 1
        %v366 = vpop.permute.xlu0 %365
        %367 = vrot.lane.b32.xlu0 %v160, 1
        %v368 = vpop.permute.xlu0 %367
        %v371 = vsub.f32 %v163, %v366
        %v372 = vsub.f32 %v164, %v368
        %v373 = vmul.f32 %v363, %v363
        %v374 = vmul.f32 %v364, %v364
        %v375 = vadd.f32 %v373, 0.81
        %v376 = vadd.f32 %v374, 0.81
        %v377 = vrsqrt.pop %v375
        %v378 = vrsqrt.pop %v376
        %v379 = vmul.f32 %v363, %v377
        %v380 = vmul.f32 %v364, %v378
        %v381 = vmul.f32 %v371, %v371
        %v382 = vmul.f32 %v372, %v372
        %v383 = vadd.f32 %v381, 0.81
        %v384 = vadd.f32 %v382, 0.81
        %v385 = vrsqrt.pop %v383
        %v386 = vrsqrt.pop %v384
        %v387 = vmul.f32 %v371, %v385
        %v388 = vmul.f32 %v372, %v386
        %v389 = vsub.f32 %v379, %v387
        %v390 = vsub.f32 %v380, %v388
        %v391 = vmul.f32 %v389, %v389
        %v392 = vmul.f32 %v390, %v390
        %v393 = vadd.f32 %v391, 0.1
        %v394 = vadd.f32 %v392, 0.1
        %v395 = vrcp.pop %v393
        %v396 = vmul.f32 %v391, %v395
        %v397 = vrcp.pop %v394
        %v398 = vmul.f32 %v392, %v397
        %401 = vrot.lane.b32.xlu0 %v396, 124
        %v402 = vpop.permute.xlu0 %401
        %403 = vrot.lane.b32.xlu0 %v398, 124
        %v404 = vpop.permute.xlu0 %403
        %v407 = vadd.f32 %v355, %v402
        %v408 = vadd.f32 %v356, %v404
        %409 = vrot.lane.b32.xlu0 %v157, 2
        %v410 = vpop.permute.xlu0 %409
        %411 = vrot.lane.b32.xlu0 %v158, 2
        %v412 = vpop.permute.xlu0 %411
        %v415 = vsub.f32 %v161, %v410
        %v416 = vsub.f32 %v162, %v412
        %417 = vrot.lane.b32.xlu0 %v159, 2
        %v418 = vpop.permute.xlu0 %417
        %419 = vrot.lane.b32.xlu0 %v160, 2
        %v420 = vpop.permute.xlu0 %419
        %v423 = vsub.f32 %v163, %v418
        %v424 = vsub.f32 %v164, %v420
        %v425 = vmul.f32 %v415, %v415
        %v426 = vmul.f32 %v416, %v416
        %v427 = vadd.f32 %v425, 0.81
        %v428 = vadd.f32 %v426, 0.81
        %v429 = vrsqrt.pop %v427
        %v430 = vrsqrt.pop %v428
        %v431 = vmul.f32 %v415, %v429
        %v432 = vmul.f32 %v416, %v430
        %v433 = vmul.f32 %v423, %v423
        %v434 = vmul.f32 %v424, %v424
        %v435 = vadd.f32 %v433, 0.81
        %v436 = vadd.f32 %v434, 0.81
        %v437 = vrsqrt.pop %v435
        %v438 = vrsqrt.pop %v436
        %v439 = vmul.f32 %v423, %v437
        %v440 = vmul.f32 %v424, %v438
        %v441 = vsub.f32 %v431, %v439
        %v442 = vsub.f32 %v432, %v440
        %v443 = vmul.f32 %v441, %v441
        %v444 = vmul.f32 %v442, %v442
        %v445 = vadd.f32 %v443, 0.1
        %v446 = vadd.f32 %v444, 0.1
        %v447 = vrcp.pop %v445
        %v448 = vmul.f32 %v443, %v447
        %v449 = vrcp.pop %v446
        %v450 = vmul.f32 %v444, %v449
        %453 = vrot.lane.b32.xlu0 %v448, 123
        %v454 = vpop.permute.xlu0 %453
        %455 = vrot.lane.b32.xlu0 %v450, 123
        %v456 = vpop.permute.xlu0 %455
        %v459 = vadd.f32 %v407, %v454
        %v460 = vadd.f32 %v408, %v456
        %461 = vrot.lane.b32.xlu0 %v157, 3
        %v462 = vpop.permute.xlu0 %461
        %463 = vrot.lane.b32.xlu0 %v158, 3
        %v464 = vpop.permute.xlu0 %463
        %v467 = vsub.f32 %v161, %v462
        %v468 = vsub.f32 %v162, %v464
        %469 = vrot.lane.b32.xlu0 %v159, 3
        %v470 = vpop.permute.xlu0 %469
        %471 = vrot.lane.b32.xlu0 %v160, 3
        %v472 = vpop.permute.xlu0 %471
        %v475 = vsub.f32 %v163, %v470
        %v476 = vsub.f32 %v164, %v472
        %v477 = vmul.f32 %v467, %v467
        %v478 = vmul.f32 %v468, %v468
        %v479 = vadd.f32 %v477, 0.81
        %v480 = vadd.f32 %v478, 0.81
        %v481 = vrsqrt.pop %v479
        %v482 = vrsqrt.pop %v480
        %v483 = vmul.f32 %v467, %v481
        %v484 = vmul.f32 %v468, %v482
        %v485 = vmul.f32 %v475, %v475
        %v486 = vmul.f32 %v476, %v476
        %v487 = vadd.f32 %v485, 0.81
        %v488 = vadd.f32 %v486, 0.81
        %v489 = vrsqrt.pop %v487
        %v490 = vrsqrt.pop %v488
        %v491 = vmul.f32 %v475, %v489
        %v492 = vmul.f32 %v476, %v490
        %v493 = vsub.f32 %v483, %v491
        %v494 = vsub.f32 %v484, %v492
        %v495 = vmul.f32 %v493, %v493
        %v496 = vmul.f32 %v494, %v494
        %v497 = vadd.f32 %v495, 0.1
        %v498 = vadd.f32 %v496, 0.1
        %v499 = vrcp.pop %v497
        %v500 = vmul.f32 %v495, %v499
        %v501 = vrcp.pop %v498
        %v502 = vmul.f32 %v496, %v501
        %505 = vrot.lane.b32.xlu0 %v500, 122
        %v506 = vpop.permute.xlu0 %505
        %507 = vrot.lane.b32.xlu0 %v502, 122
        %v508 = vpop.permute.xlu0 %507
        %v511 = vadd.f32 %v459, %v506
        %v512 = vadd.f32 %v460, %v508
        %v513 = vld [vmem:[%s144 + $0x1] sm:$0xff]
        %v514 = vld [vmem:[%s144 + $0x9] sm:$0xff]
        %v515 = vld [vmem:[%s149 + $0x1] sm:$0xff]
        %v516 = vld [vmem:[%s149 + $0x9] sm:$0xff]
        %v517 = vsub.f32 %v513, %v168
        %v518 = vsub.f32 %v514, %v170
        %v519 = vsub.f32 %v515, %v178
        %v520 = vsub.f32 %v516, %v180
        %v521 = vmul.f32 %v517, %v517
        %v522 = vmul.f32 %v518, %v518
        %v523 = vadd.f32 %v521, 0.81
        %v524 = vadd.f32 %v522, 0.81
        %v525 = vrsqrt.pop %v523
        %v526 = vrsqrt.pop %v524
        %v527 = vmul.f32 %v517, %v525
        %v528 = vmul.f32 %v518, %v526
        %v529 = vmul.f32 %v519, %v519
        %v530 = vmul.f32 %v520, %v520
        %v531 = vadd.f32 %v529, 0.81
        %v532 = vadd.f32 %v530, 0.81
        %v533 = vrsqrt.pop %v531
        %v534 = vrsqrt.pop %v532
        %v535 = vmul.f32 %v519, %v533
        %v536 = vmul.f32 %v520, %v534
        %v537 = vsub.f32 %v527, %v535
        %v538 = vsub.f32 %v528, %v536
        %v539 = vmul.f32 %v537, %v537
        %v540 = vmul.f32 %v538, %v538
        %v541 = vadd.f32 %v539, 0.1
        %v542 = vadd.f32 %v540, 0.1
        %v543 = vrcp.pop %v541
        %v544 = vmul.f32 %v539, %v543
        %v545 = vrcp.pop %v542
        %v546 = vmul.f32 %v540, %v545
        %v547 = vadd.f32 %v511, %v544
        %v548 = vadd.f32 %v512, %v546
        %v549 = vsub.f32 %v513, %v214
        %v550 = vsub.f32 %v514, %v216
        %v551 = vsub.f32 %v515, %v222
        %v552 = vsub.f32 %v516, %v224
        %v553 = vmul.f32 %v549, %v549
        %v554 = vmul.f32 %v550, %v550
        %v555 = vadd.f32 %v553, 0.81
        %v556 = vadd.f32 %v554, 0.81
        %v557 = vrsqrt.pop %v555
        %v558 = vrsqrt.pop %v556
        %v559 = vmul.f32 %v549, %v557
        %v560 = vmul.f32 %v550, %v558
        %v561 = vmul.f32 %v551, %v551
        %v562 = vmul.f32 %v552, %v552
        %v563 = vadd.f32 %v561, 0.81
        %v564 = vadd.f32 %v562, 0.81
        %v565 = vrsqrt.pop %v563
        %v566 = vrsqrt.pop %v564
        %v567 = vmul.f32 %v551, %v565
        %v568 = vmul.f32 %v552, %v566
        %v569 = vsub.f32 %v559, %v567
        %v570 = vsub.f32 %v560, %v568
        %v571 = vmul.f32 %v569, %v569
        %v572 = vmul.f32 %v570, %v570
        %v573 = vadd.f32 %v571, 0.1
        %v574 = vadd.f32 %v572, 0.1
        %v575 = vrcp.pop %v573
        %v576 = vmul.f32 %v571, %v575
        %v577 = vrcp.pop %v574
        %v578 = vmul.f32 %v572, %v577
        %581 = vrot.lane.b32.xlu0 %v576, 127
        %v582 = vpop.permute.xlu0 %581
        %583 = vrot.lane.b32.xlu0 %v578, 127
        %v584 = vpop.permute.xlu0 %583
        %v587 = vadd.f32 %v547, %v582
        %v588 = vadd.f32 %v548, %v584
        %v589 = vsub.f32 %v513, %v266
        %v590 = vsub.f32 %v514, %v268
        %v591 = vsub.f32 %v515, %v274
        %v592 = vsub.f32 %v516, %v276
        %v593 = vmul.f32 %v589, %v589
        %v594 = vmul.f32 %v590, %v590
        %v595 = vadd.f32 %v593, 0.81
        %v596 = vadd.f32 %v594, 0.81
        %v597 = vrsqrt.pop %v595
        %v598 = vrsqrt.pop %v596
        %v599 = vmul.f32 %v589, %v597
        %v600 = vmul.f32 %v590, %v598
        %v601 = vmul.f32 %v591, %v591
        %v602 = vmul.f32 %v592, %v592
        %v603 = vadd.f32 %v601, 0.81
        %v604 = vadd.f32 %v602, 0.81
        %v605 = vrsqrt.pop %v603
        %v606 = vrsqrt.pop %v604
        %v607 = vmul.f32 %v591, %v605
        %v608 = vmul.f32 %v592, %v606
        %v609 = vsub.f32 %v599, %v607
        %v610 = vsub.f32 %v600, %v608
        %v611 = vmul.f32 %v609, %v609
        %v612 = vmul.f32 %v610, %v610
        %v613 = vadd.f32 %v611, 0.1
        %v614 = vadd.f32 %v612, 0.1
        %v615 = vrcp.pop %v613
        %v616 = vmul.f32 %v611, %v615
        %v617 = vrcp.pop %v614
        %v618 = vmul.f32 %v612, %v617
        %621 = vrot.lane.b32.xlu0 %v616, 126
        %v622 = vpop.permute.xlu0 %621
        %623 = vrot.lane.b32.xlu0 %v618, 126
        %v624 = vpop.permute.xlu0 %623
        %v627 = vadd.f32 %v587, %v622
        %v628 = vadd.f32 %v588, %v624
        %v629 = vsub.f32 %v513, %v157
        %v630 = vsub.f32 %v514, %v158
        %v631 = vsub.f32 %v515, %v159
        %v632 = vsub.f32 %v516, %v160
        %v633 = vmul.f32 %v629, %v629
        %v634 = vmul.f32 %v630, %v630
        %v635 = vadd.f32 %v633, 0.81
        %v636 = vadd.f32 %v634, 0.81
        %v637 = vrsqrt.pop %v635
        %v638 = vrsqrt.pop %v636
        %v639 = vmul.f32 %v629, %v637
        %v640 = vmul.f32 %v630, %v638
        %v641 = vmul.f32 %v631, %v631
        %v642 = vmul.f32 %v632, %v632
        %v643 = vadd.f32 %v641, 0.81
        %v644 = vadd.f32 %v642, 0.81
        %v645 = vrsqrt.pop %v643
        %v646 = vrsqrt.pop %v644
        %v647 = vmul.f32 %v631, %v645
        %v648 = vmul.f32 %v632, %v646
        %v649 = vsub.f32 %v639, %v647
        %v650 = vsub.f32 %v640, %v648
        %v651 = vmul.f32 %v649, %v649
        %v652 = vmul.f32 %v650, %v650
        %v653 = vadd.f32 %v651, 0.1
        %v654 = vadd.f32 %v652, 0.1
        %v655 = vrcp.pop %v653
        %v656 = vmul.f32 %v651, %v655
        %v657 = vrcp.pop %v654
        %v658 = vmul.f32 %v652, %v657
        %661 = vrot.lane.b32.xlu0 %v656, 125
        %v662 = vpop.permute.xlu0 %661
        %663 = vrot.lane.b32.xlu0 %v658, 125
        %v664 = vpop.permute.xlu0 %663
        %v667 = vadd.f32 %v627, %v662
        %v668 = vadd.f32 %v628, %v664
        %v669 = vsub.f32 %v513, %v358
        %v670 = vsub.f32 %v514, %v360
        %v671 = vsub.f32 %v515, %v366
        %v672 = vsub.f32 %v516, %v368
        %v673 = vmul.f32 %v669, %v669
        %v674 = vmul.f32 %v670, %v670
        %v675 = vadd.f32 %v673, 0.81
        %v676 = vadd.f32 %v674, 0.81
        %v677 = vrsqrt.pop %v675
        %v678 = vrsqrt.pop %v676
        %v679 = vmul.f32 %v669, %v677
        %v680 = vmul.f32 %v670, %v678
        %v681 = vmul.f32 %v671, %v671
        %v682 = vmul.f32 %v672, %v672
        %v683 = vadd.f32 %v681, 0.81
        %v684 = vadd.f32 %v682, 0.81
        %v685 = vrsqrt.pop %v683
        %v686 = vrsqrt.pop %v684
        %v687 = vmul.f32 %v671, %v685
        %v688 = vmul.f32 %v672, %v686
        %v689 = vsub.f32 %v679, %v687
        %v690 = vsub.f32 %v680, %v688
        %v691 = vmul.f32 %v689, %v689
        %v692 = vmul.f32 %v690, %v690
        %v693 = vadd.f32 %v691, 0.1
        %v694 = vadd.f32 %v692, 0.1
        %v695 = vrcp.pop %v693
        %v696 = vmul.f32 %v691, %v695
        %v697 = vrcp.pop %v694
        %v698 = vmul.f32 %v692, %v697
        %701 = vrot.lane.b32.xlu0 %v696, 124
        %v702 = vpop.permute.xlu0 %701
        %703 = vrot.lane.b32.xlu0 %v698, 124
        %v704 = vpop.permute.xlu0 %703
        %v707 = vadd.f32 %v667, %v702
        %v708 = vadd.f32 %v668, %v704
        %v709 = vsub.f32 %v513, %v410
        %v710 = vsub.f32 %v514, %v412
        %v711 = vsub.f32 %v515, %v418
        %v712 = vsub.f32 %v516, %v420
        %v713 = vmul.f32 %v709, %v709
        %v714 = vmul.f32 %v710, %v710
        %v715 = vadd.f32 %v713, 0.81
        %v716 = vadd.f32 %v714, 0.81
        %v717 = vrsqrt.pop %v715
        %v718 = vrsqrt.pop %v716
        %v719 = vmul.f32 %v709, %v717
        %v720 = vmul.f32 %v710, %v718
        %v721 = vmul.f32 %v711, %v711
        %v722 = vmul.f32 %v712, %v712
        %v723 = vadd.f32 %v721, 0.81
        %v724 = vadd.f32 %v722, 0.81
        %v725 = vrsqrt.pop %v723
        %v726 = vrsqrt.pop %v724
        %v727 = vmul.f32 %v711, %v725
        %v728 = vmul.f32 %v712, %v726
        %v729 = vsub.f32 %v719, %v727
        %v730 = vsub.f32 %v720, %v728
        %v731 = vmul.f32 %v729, %v729
        %v732 = vmul.f32 %v730, %v730
        %v733 = vadd.f32 %v731, 0.1
        %v734 = vadd.f32 %v732, 0.1
        %v735 = vrcp.pop %v733
        %v736 = vmul.f32 %v731, %v735
        %v737 = vrcp.pop %v734
        %v738 = vmul.f32 %v732, %v737
        %741 = vrot.lane.b32.xlu0 %v736, 123
        %v742 = vpop.permute.xlu0 %741
        %743 = vrot.lane.b32.xlu0 %v738, 123
        %v744 = vpop.permute.xlu0 %743
        %v747 = vadd.f32 %v707, %v742
        %v748 = vadd.f32 %v708, %v744
        %v749 = vsub.f32 %v513, %v462
        %v750 = vsub.f32 %v514, %v464
        %v751 = vsub.f32 %v515, %v470
        %v752 = vsub.f32 %v516, %v472
        %v753 = vmul.f32 %v749, %v749
        %v754 = vmul.f32 %v750, %v750
        %v755 = vadd.f32 %v753, 0.81
        %v756 = vadd.f32 %v754, 0.81
        %v757 = vrsqrt.pop %v755
        %v758 = vrsqrt.pop %v756
        %v759 = vmul.f32 %v749, %v757
        %v760 = vmul.f32 %v750, %v758
        %v761 = vmul.f32 %v751, %v751
        %v762 = vmul.f32 %v752, %v752
        %v763 = vadd.f32 %v761, 0.81
        %v764 = vadd.f32 %v762, 0.81
        %v765 = vrsqrt.pop %v763
        %v766 = vrsqrt.pop %v764
        %v767 = vmul.f32 %v751, %v765
        %v768 = vmul.f32 %v752, %v766
        %v769 = vsub.f32 %v759, %v767
        %v770 = vsub.f32 %v760, %v768
        %v771 = vmul.f32 %v769, %v769
        %v772 = vmul.f32 %v770, %v770
        %v773 = vadd.f32 %v771, 0.1
        %v774 = vadd.f32 %v772, 0.1
        %v775 = vrcp.pop %v773
        %v776 = vmul.f32 %v771, %v775
        %v777 = vrcp.pop %v774
        %v778 = vmul.f32 %v772, %v777
        %781 = vrot.lane.b32.xlu0 %v776, 122
        %v782 = vpop.permute.xlu0 %781
        %783 = vrot.lane.b32.xlu0 %v778, 122
        %v784 = vpop.permute.xlu0 %783
        %v787 = vadd.f32 %v747, %v782
        %v788 = vadd.f32 %v748, %v784
        %v789 = vld [vmem:[%s144 + $0x2] sm:$0xff]
        %v790 = vld [vmem:[%s144 + $0xa] sm:$0xff]
        %v791 = vld [vmem:[%s149 + $0x2] sm:$0xff]
        %v792 = vld [vmem:[%s149 + $0xa] sm:$0xff]
        %v793 = vsub.f32 %v789, %v168
        %v794 = vsub.f32 %v790, %v170
        %v795 = vsub.f32 %v791, %v178
        %v796 = vsub.f32 %v792, %v180
        %v797 = vmul.f32 %v793, %v793
        %v798 = vmul.f32 %v794, %v794
        %v799 = vadd.f32 %v797, 0.81
        %v800 = vadd.f32 %v798, 0.81
        %v801 = vrsqrt.pop %v799
        %v802 = vrsqrt.pop %v800
        %v803 = vmul.f32 %v793, %v801
        %v804 = vmul.f32 %v794, %v802
        %v805 = vmul.f32 %v795, %v795
        %v806 = vmul.f32 %v796, %v796
        %v807 = vadd.f32 %v805, 0.81
        %v808 = vadd.f32 %v806, 0.81
        %v809 = vrsqrt.pop %v807
        %v810 = vrsqrt.pop %v808
        %v811 = vmul.f32 %v795, %v809
        %v812 = vmul.f32 %v796, %v810
        %v813 = vsub.f32 %v803, %v811
        %v814 = vsub.f32 %v804, %v812
        %v815 = vmul.f32 %v813, %v813
        %v816 = vmul.f32 %v814, %v814
        %v817 = vadd.f32 %v815, 0.1
        %v818 = vadd.f32 %v816, 0.1
        %v819 = vrcp.pop %v817
        %v820 = vmul.f32 %v815, %v819
        %v821 = vrcp.pop %v818
        %v822 = vmul.f32 %v816, %v821
        %v823 = vadd.f32 %v787, %v820
        %v824 = vadd.f32 %v788, %v822
        %v825 = vsub.f32 %v789, %v214
        %v826 = vsub.f32 %v790, %v216
        %v827 = vsub.f32 %v791, %v222
        %v828 = vsub.f32 %v792, %v224
        %v829 = vmul.f32 %v825, %v825
        %v830 = vmul.f32 %v826, %v826
        %v831 = vadd.f32 %v829, 0.81
        %v832 = vadd.f32 %v830, 0.81
        %v833 = vrsqrt.pop %v831
        %v834 = vrsqrt.pop %v832
        %v835 = vmul.f32 %v825, %v833
        %v836 = vmul.f32 %v826, %v834
        %v837 = vmul.f32 %v827, %v827
        %v838 = vmul.f32 %v828, %v828
        %v839 = vadd.f32 %v837, 0.81
        %v840 = vadd.f32 %v838, 0.81
        %v841 = vrsqrt.pop %v839
        %v842 = vrsqrt.pop %v840
        %v843 = vmul.f32 %v827, %v841
        %v844 = vmul.f32 %v828, %v842
        %v845 = vsub.f32 %v835, %v843
        %v846 = vsub.f32 %v836, %v844
        %v847 = vmul.f32 %v845, %v845
        %v848 = vmul.f32 %v846, %v846
        %v849 = vadd.f32 %v847, 0.1
        %v850 = vadd.f32 %v848, 0.1
        %v851 = vrcp.pop %v849
        %v852 = vmul.f32 %v847, %v851
        %v853 = vrcp.pop %v850
        %v854 = vmul.f32 %v848, %v853
        %857 = vrot.lane.b32.xlu0 %v852, 127
        %v858 = vpop.permute.xlu0 %857
        %859 = vrot.lane.b32.xlu0 %v854, 127
        %v860 = vpop.permute.xlu0 %859
        %v863 = vadd.f32 %v823, %v858
        %v864 = vadd.f32 %v824, %v860
        %v865 = vsub.f32 %v789, %v266
        %v866 = vsub.f32 %v790, %v268
        %v867 = vsub.f32 %v791, %v274
        %v868 = vsub.f32 %v792, %v276
        %v869 = vmul.f32 %v865, %v865
        %v870 = vmul.f32 %v866, %v866
        %v871 = vadd.f32 %v869, 0.81
        %v872 = vadd.f32 %v870, 0.81
        %v873 = vrsqrt.pop %v871
        %v874 = vrsqrt.pop %v872
        %v875 = vmul.f32 %v865, %v873
        %v876 = vmul.f32 %v866, %v874
        %v877 = vmul.f32 %v867, %v867
        %v878 = vmul.f32 %v868, %v868
        %v879 = vadd.f32 %v877, 0.81
        %v880 = vadd.f32 %v878, 0.81
        %v881 = vrsqrt.pop %v879
        %v882 = vrsqrt.pop %v880
        %v883 = vmul.f32 %v867, %v881
        %v884 = vmul.f32 %v868, %v882
        %v885 = vsub.f32 %v875, %v883
        %v886 = vsub.f32 %v876, %v884
        %v887 = vmul.f32 %v885, %v885
        %v888 = vmul.f32 %v886, %v886
        %v889 = vadd.f32 %v887, 0.1
        %v890 = vadd.f32 %v888, 0.1
        %v891 = vrcp.pop %v889
        %v892 = vmul.f32 %v887, %v891
        %v893 = vrcp.pop %v890
        %v894 = vmul.f32 %v888, %v893
        %897 = vrot.lane.b32.xlu0 %v892, 126
        %v898 = vpop.permute.xlu0 %897
        %899 = vrot.lane.b32.xlu0 %v894, 126
        %v900 = vpop.permute.xlu0 %899
        %v903 = vadd.f32 %v863, %v898
        %v904 = vadd.f32 %v864, %v900
        %v905 = vsub.f32 %v789, %v157
        %v906 = vsub.f32 %v790, %v158
        %v907 = vsub.f32 %v791, %v159
        %v908 = vsub.f32 %v792, %v160
        %v909 = vmul.f32 %v905, %v905
        %v910 = vmul.f32 %v906, %v906
        %v911 = vadd.f32 %v909, 0.81
        %v912 = vadd.f32 %v910, 0.81
        %v913 = vrsqrt.pop %v911
        %v914 = vrsqrt.pop %v912
        %v915 = vmul.f32 %v905, %v913
        %v916 = vmul.f32 %v906, %v914
        %v917 = vmul.f32 %v907, %v907
        %v918 = vmul.f32 %v908, %v908
        %v919 = vadd.f32 %v917, 0.81
        %v920 = vadd.f32 %v918, 0.81
        %v921 = vrsqrt.pop %v919
        %v922 = vrsqrt.pop %v920
        %v923 = vmul.f32 %v907, %v921
        %v924 = vmul.f32 %v908, %v922
        %v925 = vsub.f32 %v915, %v923
        %v926 = vsub.f32 %v916, %v924
        %v927 = vmul.f32 %v925, %v925
        %v928 = vmul.f32 %v926, %v926
        %v929 = vadd.f32 %v927, 0.1
        %v930 = vadd.f32 %v928, 0.1
        %v931 = vrcp.pop %v929
        %v932 = vmul.f32 %v927, %v931
        %v933 = vrcp.pop %v930
        %v934 = vmul.f32 %v928, %v933
        %937 = vrot.lane.b32.xlu0 %v932, 125
        %v938 = vpop.permute.xlu0 %937
        %939 = vrot.lane.b32.xlu0 %v934, 125
        %v940 = vpop.permute.xlu0 %939
        %v943 = vadd.f32 %v903, %v938
        %v944 = vadd.f32 %v904, %v940
        %v945 = vsub.f32 %v789, %v358
        %v946 = vsub.f32 %v790, %v360
        %v947 = vsub.f32 %v791, %v366
        %v948 = vsub.f32 %v792, %v368
        %v949 = vmul.f32 %v945, %v945
        %v950 = vmul.f32 %v946, %v946
        %v951 = vadd.f32 %v949, 0.81
        %v952 = vadd.f32 %v950, 0.81
        %v953 = vrsqrt.pop %v951
        %v954 = vrsqrt.pop %v952
        %v955 = vmul.f32 %v945, %v953
        %v956 = vmul.f32 %v946, %v954
        %v957 = vmul.f32 %v947, %v947
        %v958 = vmul.f32 %v948, %v948
        %v959 = vadd.f32 %v957, 0.81
        %v960 = vadd.f32 %v958, 0.81
        %v961 = vrsqrt.pop %v959
        %v962 = vrsqrt.pop %v960
        %v963 = vmul.f32 %v947, %v961
        %v964 = vmul.f32 %v948, %v962
        %v965 = vsub.f32 %v955, %v963
        %v966 = vsub.f32 %v956, %v964
        %v967 = vmul.f32 %v965, %v965
        %v968 = vmul.f32 %v966, %v966
        %v969 = vadd.f32 %v967, 0.1
        %v970 = vadd.f32 %v968, 0.1
        %v971 = vrcp.pop %v969
        %v972 = vmul.f32 %v967, %v971
        %v973 = vrcp.pop %v970
        %v974 = vmul.f32 %v968, %v973
        %977 = vrot.lane.b32.xlu0 %v972, 124
        %v978 = vpop.permute.xlu0 %977
        %979 = vrot.lane.b32.xlu0 %v974, 124
        %v980 = vpop.permute.xlu0 %979
        %v983 = vadd.f32 %v943, %v978
        %v984 = vadd.f32 %v944, %v980
        %v985 = vsub.f32 %v789, %v410
        %v986 = vsub.f32 %v790, %v412
        %v987 = vsub.f32 %v791, %v418
        %v988 = vsub.f32 %v792, %v420
        %v989 = vmul.f32 %v985, %v985
        %v990 = vmul.f32 %v986, %v986
        %v991 = vadd.f32 %v989, 0.81
        %v992 = vadd.f32 %v990, 0.81
        %v993 = vrsqrt.pop %v991
        %v994 = vrsqrt.pop %v992
        %v995 = vmul.f32 %v985, %v993
        %v996 = vmul.f32 %v986, %v994
        %v997 = vmul.f32 %v987, %v987
        %v998 = vmul.f32 %v988, %v988
        %v999 = vadd.f32 %v997, 0.81
        %v1000 = vadd.f32 %v998, 0.81
        %v1001 = vrsqrt.pop %v999
        %v1002 = vrsqrt.pop %v1000
        %v1003 = vmul.f32 %v987, %v1001
        %v1004 = vmul.f32 %v988, %v1002
        %v1005 = vsub.f32 %v995, %v1003
        %v1006 = vsub.f32 %v996, %v1004
        %v1007 = vmul.f32 %v1005, %v1005
        %v1008 = vmul.f32 %v1006, %v1006
        %v1009 = vadd.f32 %v1007, 0.1
        %v1010 = vadd.f32 %v1008, 0.1
        %v1011 = vrcp.pop %v1009
        %v1012 = vmul.f32 %v1007, %v1011
        %v1013 = vrcp.pop %v1010
        %v1014 = vmul.f32 %v1008, %v1013
        %1017 = vrot.lane.b32.xlu0 %v1012, 123
        %v1018 = vpop.permute.xlu0 %1017
        %1019 = vrot.lane.b32.xlu0 %v1014, 123
        %v1020 = vpop.permute.xlu0 %1019
        %v1023 = vadd.f32 %v983, %v1018
        %v1024 = vadd.f32 %v984, %v1020
        %v1025 = vsub.f32 %v789, %v462
        %v1026 = vsub.f32 %v790, %v464
        %v1027 = vsub.f32 %v791, %v470
        %v1028 = vsub.f32 %v792, %v472
        %v1029 = vmul.f32 %v1025, %v1025
        %v1030 = vmul.f32 %v1026, %v1026
        %v1031 = vadd.f32 %v1029, 0.81
        %v1032 = vadd.f32 %v1030, 0.81
        %v1033 = vrsqrt.pop %v1031
        %v1034 = vrsqrt.pop %v1032
        %v1035 = vmul.f32 %v1025, %v1033
        %v1036 = vmul.f32 %v1026, %v1034
        %v1037 = vmul.f32 %v1027, %v1027
        %v1038 = vmul.f32 %v1028, %v1028
        %v1039 = vadd.f32 %v1037, 0.81
        %v1040 = vadd.f32 %v1038, 0.81
        %v1041 = vrsqrt.pop %v1039
        %v1042 = vrsqrt.pop %v1040
        %v1043 = vmul.f32 %v1027, %v1041
        %v1044 = vmul.f32 %v1028, %v1042
        %v1045 = vsub.f32 %v1035, %v1043
        %v1046 = vsub.f32 %v1036, %v1044
        %v1047 = vmul.f32 %v1045, %v1045
        %v1048 = vmul.f32 %v1046, %v1046
        %v1049 = vadd.f32 %v1047, 0.1
        %v1050 = vadd.f32 %v1048, 0.1
        %v1051 = vrcp.pop %v1049
        %v1052 = vmul.f32 %v1047, %v1051
        %v1053 = vrcp.pop %v1050
        %v1054 = vmul.f32 %v1048, %v1053
        %1057 = vrot.lane.b32.xlu0 %v1052, 122
        %v1058 = vpop.permute.xlu0 %1057
        %1059 = vrot.lane.b32.xlu0 %v1054, 122
        %v1060 = vpop.permute.xlu0 %1059
        %v1063 = vadd.f32 %v1023, %v1058
        %v1064 = vadd.f32 %v1024, %v1060
        %v1065 = vsub.f32 %v157, %v168
        %v1066 = vsub.f32 %v158, %v170
        %v1067 = vsub.f32 %v159, %v178
        %v1068 = vsub.f32 %v160, %v180
        %v1069 = vmul.f32 %v1065, %v1065
        %v1070 = vmul.f32 %v1066, %v1066
        %v1071 = vadd.f32 %v1069, 0.81
        %v1072 = vadd.f32 %v1070, 0.81
        %v1073 = vrsqrt.pop %v1071
        %v1074 = vrsqrt.pop %v1072
        %v1075 = vmul.f32 %v1065, %v1073
        %v1076 = vmul.f32 %v1066, %v1074
        %v1077 = vmul.f32 %v1067, %v1067
        %v1078 = vmul.f32 %v1068, %v1068
        %v1079 = vadd.f32 %v1077, 0.81
        %v1080 = vadd.f32 %v1078, 0.81
        %v1081 = vrsqrt.pop %v1079
        %v1082 = vrsqrt.pop %v1080
        %v1083 = vmul.f32 %v1067, %v1081
        %v1084 = vmul.f32 %v1068, %v1082
        %v1085 = vsub.f32 %v1075, %v1083
        %v1086 = vsub.f32 %v1076, %v1084
        %v1087 = vmul.f32 %v1085, %v1085
        %v1088 = vmul.f32 %v1086, %v1086
        %v1089 = vadd.f32 %v1087, 0.1
        %v1090 = vadd.f32 %v1088, 0.1
        %v1091 = vrcp.pop %v1089
        %v1092 = vmul.f32 %v1087, %v1091
        %v1093 = vrcp.pop %v1090
        %v1094 = vmul.f32 %v1088, %v1093
        %v1095 = vadd.f32 %v1063, %v1092
        %v1096 = vadd.f32 %v1064, %v1094
        %v1097 = vsub.f32 %v157, %v214
        %v1098 = vsub.f32 %v158, %v216
        %v1099 = vsub.f32 %v159, %v222
        %v1100 = vsub.f32 %v160, %v224
        %v1101 = vmul.f32 %v1097, %v1097
        %v1102 = vmul.f32 %v1098, %v1098
        %v1103 = vadd.f32 %v1101, 0.81
        %v1104 = vadd.f32 %v1102, 0.81
        %v1105 = vrsqrt.pop %v1103
        %v1106 = vrsqrt.pop %v1104
        %v1107 = vmul.f32 %v1097, %v1105
        %v1108 = vmul.f32 %v1098, %v1106
        %v1109 = vmul.f32 %v1099, %v1099
        %v1110 = vmul.f32 %v1100, %v1100
        %v1111 = vadd.f32 %v1109, 0.81
        %v1112 = vadd.f32 %v1110, 0.81
        %v1113 = vrsqrt.pop %v1111
        %v1114 = vrsqrt.pop %v1112
        %v1115 = vmul.f32 %v1099, %v1113
        %v1116 = vmul.f32 %v1100, %v1114
        %v1117 = vsub.f32 %v1107, %v1115
        %v1118 = vsub.f32 %v1108, %v1116
        %v1119 = vmul.f32 %v1117, %v1117
        %v1120 = vmul.f32 %v1118, %v1118
        %v1121 = vadd.f32 %v1119, 0.1
        %v1122 = vadd.f32 %v1120, 0.1
        %v1123 = vrcp.pop %v1121
        %v1124 = vmul.f32 %v1119, %v1123
        %v1125 = vrcp.pop %v1122
        %v1126 = vmul.f32 %v1120, %v1125
        %1129 = vrot.lane.b32.xlu0 %v1124, 127
        %v1130 = vpop.permute.xlu0 %1129
        %1131 = vrot.lane.b32.xlu0 %v1126, 127
        %v1132 = vpop.permute.xlu0 %1131
        %v1135 = vadd.f32 %v1095, %v1130
        %v1136 = vadd.f32 %v1096, %v1132
        %v1137 = vsub.f32 %v157, %v266
        %v1138 = vsub.f32 %v158, %v268
        %v1139 = vsub.f32 %v159, %v274
        %v1140 = vsub.f32 %v160, %v276
        %v1141 = vmul.f32 %v1137, %v1137
        %v1142 = vmul.f32 %v1138, %v1138
        %v1143 = vadd.f32 %v1141, 0.81
        %v1144 = vadd.f32 %v1142, 0.81
        %v1145 = vrsqrt.pop %v1143
        %v1146 = vrsqrt.pop %v1144
        %v1147 = vmul.f32 %v1137, %v1145
        %v1148 = vmul.f32 %v1138, %v1146
        %v1149 = vmul.f32 %v1139, %v1139
        %v1150 = vmul.f32 %v1140, %v1140
        %v1151 = vadd.f32 %v1149, 0.81
        %v1152 = vadd.f32 %v1150, 0.81
        %v1153 = vrsqrt.pop %v1151
        %v1154 = vrsqrt.pop %v1152
        %v1155 = vmul.f32 %v1139, %v1153
        %v1156 = vmul.f32 %v1140, %v1154
        %v1157 = vsub.f32 %v1147, %v1155
        %v1158 = vsub.f32 %v1148, %v1156
        %v1159 = vmul.f32 %v1157, %v1157
        %v1160 = vmul.f32 %v1158, %v1158
        %v1161 = vadd.f32 %v1159, 0.1
        %v1162 = vadd.f32 %v1160, 0.1
        %v1163 = vrcp.pop %v1161
        %v1164 = vmul.f32 %v1159, %v1163
        %v1165 = vrcp.pop %v1162
        %v1166 = vmul.f32 %v1160, %v1165
        %1169 = vrot.lane.b32.xlu0 %v1164, 126
        %v1170 = vpop.permute.xlu0 %1169
        %1171 = vrot.lane.b32.xlu0 %v1166, 126
        %v1172 = vpop.permute.xlu0 %1171
        %v1175 = vadd.f32 %v1135, %v1170
        %v1176 = vadd.f32 %v1136, %v1172
        %v1177 = vsub.f32 %v157, %v157
        %v1178 = vsub.f32 %v158, %v158
        %v1179 = vsub.f32 %v159, %v159
        %v1180 = vsub.f32 %v160, %v160
        %v1181 = vmul.f32 %v1177, %v1177
        %v1182 = vmul.f32 %v1178, %v1178
        %v1183 = vadd.f32 %v1181, 0.81
        %v1184 = vadd.f32 %v1182, 0.81
        %v1185 = vrsqrt.pop %v1183
        %v1186 = vrsqrt.pop %v1184
        %v1187 = vmul.f32 %v1177, %v1185
        %v1188 = vmul.f32 %v1178, %v1186
        %v1189 = vmul.f32 %v1179, %v1179
        %v1190 = vmul.f32 %v1180, %v1180
        %v1191 = vadd.f32 %v1189, 0.81
        %v1192 = vadd.f32 %v1190, 0.81
        %v1193 = vrsqrt.pop %v1191
        %v1194 = vrsqrt.pop %v1192
        %v1195 = vmul.f32 %v1179, %v1193
        %v1196 = vmul.f32 %v1180, %v1194
        %v1197 = vsub.f32 %v1187, %v1195
        %v1198 = vsub.f32 %v1188, %v1196
        %v1199 = vmul.f32 %v1197, %v1197
        %v1200 = vmul.f32 %v1198, %v1198
        %v1201 = vadd.f32 %v1199, 0.1
        %v1202 = vadd.f32 %v1200, 0.1
        %v1203 = vrcp.pop %v1201
        %v1204 = vmul.f32 %v1199, %v1203
        %v1205 = vrcp.pop %v1202
        %v1206 = vmul.f32 %v1200, %v1205
        %1209 = vrot.lane.b32.xlu0 %v1204, 125
        %v1210 = vpop.permute.xlu0 %1209
        %1211 = vrot.lane.b32.xlu0 %v1206, 125
        %v1212 = vpop.permute.xlu0 %1211
        %v1215 = vadd.f32 %v1175, %v1210
        %v1216 = vadd.f32 %v1176, %v1212
        %v1217 = vsub.f32 %v157, %v358
        %v1218 = vsub.f32 %v158, %v360
        %v1219 = vsub.f32 %v159, %v366
        %v1220 = vsub.f32 %v160, %v368
        %v1221 = vmul.f32 %v1217, %v1217
        %v1222 = vmul.f32 %v1218, %v1218
        %v1223 = vadd.f32 %v1221, 0.81
        %v1224 = vadd.f32 %v1222, 0.81
        %v1225 = vrsqrt.pop %v1223
        %v1226 = vrsqrt.pop %v1224
        %v1227 = vmul.f32 %v1217, %v1225
        %v1228 = vmul.f32 %v1218, %v1226
        %v1229 = vmul.f32 %v1219, %v1219
        %v1230 = vmul.f32 %v1220, %v1220
        %v1231 = vadd.f32 %v1229, 0.81
        %v1232 = vadd.f32 %v1230, 0.81
        %v1233 = vrsqrt.pop %v1231
        %v1234 = vrsqrt.pop %v1232
        %v1235 = vmul.f32 %v1219, %v1233
        %v1236 = vmul.f32 %v1220, %v1234
        %v1237 = vsub.f32 %v1227, %v1235
        %v1238 = vsub.f32 %v1228, %v1236
        %v1239 = vmul.f32 %v1237, %v1237
        %v1240 = vmul.f32 %v1238, %v1238
        %v1241 = vadd.f32 %v1239, 0.1
        %v1242 = vadd.f32 %v1240, 0.1
        %v1243 = vrcp.pop %v1241
        %v1244 = vmul.f32 %v1239, %v1243
        %v1245 = vrcp.pop %v1242
        %v1246 = vmul.f32 %v1240, %v1245
        %1249 = vrot.lane.b32.xlu0 %v1244, 124
        %v1250 = vpop.permute.xlu0 %1249
        %1251 = vrot.lane.b32.xlu0 %v1246, 124
        %v1252 = vpop.permute.xlu0 %1251
        %v1255 = vadd.f32 %v1215, %v1250
        %v1256 = vadd.f32 %v1216, %v1252
        %v1257 = vsub.f32 %v157, %v410
        %v1258 = vsub.f32 %v158, %v412
        %v1259 = vsub.f32 %v159, %v418
        %v1260 = vsub.f32 %v160, %v420
        %v1261 = vmul.f32 %v1257, %v1257
        %v1262 = vmul.f32 %v1258, %v1258
        %v1263 = vadd.f32 %v1261, 0.81
        %v1264 = vadd.f32 %v1262, 0.81
        %v1265 = vrsqrt.pop %v1263
        %v1266 = vrsqrt.pop %v1264
        %v1267 = vmul.f32 %v1257, %v1265
        %v1268 = vmul.f32 %v1258, %v1266
        %v1269 = vmul.f32 %v1259, %v1259
        %v1270 = vmul.f32 %v1260, %v1260
        %v1271 = vadd.f32 %v1269, 0.81
        %v1272 = vadd.f32 %v1270, 0.81
        %v1273 = vrsqrt.pop %v1271
        %v1274 = vrsqrt.pop %v1272
        %v1275 = vmul.f32 %v1259, %v1273
        %v1276 = vmul.f32 %v1260, %v1274
        %v1277 = vsub.f32 %v1267, %v1275
        %v1278 = vsub.f32 %v1268, %v1276
        %v1279 = vmul.f32 %v1277, %v1277
        %v1280 = vmul.f32 %v1278, %v1278
        %v1281 = vadd.f32 %v1279, 0.1
        %v1282 = vadd.f32 %v1280, 0.1
        %v1283 = vrcp.pop %v1281
        %v1284 = vmul.f32 %v1279, %v1283
        %v1285 = vrcp.pop %v1282
        %v1286 = vmul.f32 %v1280, %v1285
        %1289 = vrot.lane.b32.xlu0 %v1284, 123
        %v1290 = vpop.permute.xlu0 %1289
        %1291 = vrot.lane.b32.xlu0 %v1286, 123
        %v1292 = vpop.permute.xlu0 %1291
        %v1295 = vadd.f32 %v1255, %v1290
        %v1296 = vadd.f32 %v1256, %v1292
        %v1297 = vsub.f32 %v157, %v462
        %v1298 = vsub.f32 %v158, %v464
        %v1299 = vsub.f32 %v159, %v470
        %v1300 = vsub.f32 %v160, %v472
        %v1301 = vmul.f32 %v1297, %v1297
        %v1302 = vmul.f32 %v1298, %v1298
        %v1303 = vadd.f32 %v1301, 0.81
        %v1304 = vadd.f32 %v1302, 0.81
        %v1305 = vrsqrt.pop %v1303
        %v1306 = vrsqrt.pop %v1304
        %v1307 = vmul.f32 %v1297, %v1305
        %v1308 = vmul.f32 %v1298, %v1306
        %v1309 = vmul.f32 %v1299, %v1299
        %v1310 = vmul.f32 %v1300, %v1300
        %v1311 = vadd.f32 %v1309, 0.81
        %v1312 = vadd.f32 %v1310, 0.81
        %v1313 = vrsqrt.pop %v1311
        %v1314 = vrsqrt.pop %v1312
        %v1315 = vmul.f32 %v1299, %v1313
        %v1316 = vmul.f32 %v1300, %v1314
        %v1317 = vsub.f32 %v1307, %v1315
        %v1318 = vsub.f32 %v1308, %v1316
        %v1319 = vmul.f32 %v1317, %v1317
        %v1320 = vmul.f32 %v1318, %v1318
        %v1321 = vadd.f32 %v1319, 0.1
        %v1322 = vadd.f32 %v1320, 0.1
        %v1323 = vrcp.pop %v1321
        %v1324 = vmul.f32 %v1319, %v1323
        %v1325 = vrcp.pop %v1322
        %v1326 = vmul.f32 %v1320, %v1325
        %1329 = vrot.lane.b32.xlu0 %v1324, 122
        %v1330 = vpop.permute.xlu0 %1329
        %1331 = vrot.lane.b32.xlu0 %v1326, 122
        %v1332 = vpop.permute.xlu0 %1331
        %v1335 = vadd.f32 %v1295, %v1330
        %v1336 = vadd.f32 %v1296, %v1332
        %v1337 = vld [vmem:[%s144 + $0x4] sm:$0xff]
        %v1338 = vld [vmem:[%s144 + $0xc] sm:$0xff]
        %v1339 = vld [vmem:[%s149 + $0x4] sm:$0xff]
        %v1340 = vld [vmem:[%s149 + $0xc] sm:$0xff]
        %v1341 = vsub.f32 %v1337, %v168
        %v1342 = vsub.f32 %v1338, %v170
        %v1343 = vsub.f32 %v1339, %v178
        %v1344 = vsub.f32 %v1340, %v180
        %v1345 = vmul.f32 %v1341, %v1341
        %v1346 = vmul.f32 %v1342, %v1342
        %v1347 = vadd.f32 %v1345, 0.81
        %v1348 = vadd.f32 %v1346, 0.81
        %v1349 = vrsqrt.pop %v1347
        %v1350 = vrsqrt.pop %v1348
        %v1351 = vmul.f32 %v1341, %v1349
        %v1352 = vmul.f32 %v1342, %v1350
        %v1353 = vmul.f32 %v1343, %v1343
        %v1354 = vmul.f32 %v1344, %v1344
        %v1355 = vadd.f32 %v1353, 0.81
        %v1356 = vadd.f32 %v1354, 0.81
        %v1357 = vrsqrt.pop %v1355
        %v1358 = vrsqrt.pop %v1356
        %v1359 = vmul.f32 %v1343, %v1357
        %v1360 = vmul.f32 %v1344, %v1358
        %v1361 = vsub.f32 %v1351, %v1359
        %v1362 = vsub.f32 %v1352, %v1360
        %v1363 = vmul.f32 %v1361, %v1361
        %v1364 = vmul.f32 %v1362, %v1362
        %v1365 = vadd.f32 %v1363, 0.1
        %v1366 = vadd.f32 %v1364, 0.1
        %v1367 = vrcp.pop %v1365
        %v1368 = vmul.f32 %v1363, %v1367
        %v1369 = vrcp.pop %v1366
        %v1370 = vmul.f32 %v1364, %v1369
        %v1371 = vadd.f32 %v1335, %v1368
        %v1372 = vadd.f32 %v1336, %v1370
        %v1373 = vsub.f32 %v1337, %v214
        %v1374 = vsub.f32 %v1338, %v216
        %v1375 = vsub.f32 %v1339, %v222
        %v1376 = vsub.f32 %v1340, %v224
        %v1377 = vmul.f32 %v1373, %v1373
        %v1378 = vmul.f32 %v1374, %v1374
        %v1379 = vadd.f32 %v1377, 0.81
        %v1380 = vadd.f32 %v1378, 0.81
        %v1381 = vrsqrt.pop %v1379
        %v1382 = vrsqrt.pop %v1380
        %v1383 = vmul.f32 %v1373, %v1381
        %v1384 = vmul.f32 %v1374, %v1382
        %v1385 = vmul.f32 %v1375, %v1375
        %v1386 = vmul.f32 %v1376, %v1376
        %v1387 = vadd.f32 %v1385, 0.81
        %v1388 = vadd.f32 %v1386, 0.81
        %v1389 = vrsqrt.pop %v1387
        %v1390 = vrsqrt.pop %v1388
        %v1391 = vmul.f32 %v1375, %v1389
        %v1392 = vmul.f32 %v1376, %v1390
        %v1393 = vsub.f32 %v1383, %v1391
        %v1394 = vsub.f32 %v1384, %v1392
        %v1395 = vmul.f32 %v1393, %v1393
        %v1396 = vmul.f32 %v1394, %v1394
        %v1397 = vadd.f32 %v1395, 0.1
        %v1398 = vadd.f32 %v1396, 0.1
        %v1399 = vrcp.pop %v1397
        %v1400 = vmul.f32 %v1395, %v1399
        %v1401 = vrcp.pop %v1398
        %v1402 = vmul.f32 %v1396, %v1401
        %1405 = vrot.lane.b32.xlu0 %v1400, 127
        %v1406 = vpop.permute.xlu0 %1405
        %1407 = vrot.lane.b32.xlu0 %v1402, 127
        %v1408 = vpop.permute.xlu0 %1407
        %v1411 = vadd.f32 %v1371, %v1406
        %v1412 = vadd.f32 %v1372, %v1408
        %v1413 = vsub.f32 %v1337, %v266
        %v1414 = vsub.f32 %v1338, %v268
        %v1415 = vsub.f32 %v1339, %v274
        %v1416 = vsub.f32 %v1340, %v276
        %v1417 = vmul.f32 %v1413, %v1413
        %v1418 = vmul.f32 %v1414, %v1414
        %v1419 = vadd.f32 %v1417, 0.81
        %v1420 = vadd.f32 %v1418, 0.81
        %v1421 = vrsqrt.pop %v1419
        %v1422 = vrsqrt.pop %v1420
        %v1423 = vmul.f32 %v1413, %v1421
        %v1424 = vmul.f32 %v1414, %v1422
        %v1425 = vmul.f32 %v1415, %v1415
        %v1426 = vmul.f32 %v1416, %v1416
        %v1427 = vadd.f32 %v1425, 0.81
        %v1428 = vadd.f32 %v1426, 0.81
        %v1429 = vrsqrt.pop %v1427
        %v1430 = vrsqrt.pop %v1428
        %v1431 = vmul.f32 %v1415, %v1429
        %v1432 = vmul.f32 %v1416, %v1430
        %v1433 = vsub.f32 %v1423, %v1431
        %v1434 = vsub.f32 %v1424, %v1432
        %v1435 = vmul.f32 %v1433, %v1433
        %v1436 = vmul.f32 %v1434, %v1434
        %v1437 = vadd.f32 %v1435, 0.1
        %v1438 = vadd.f32 %v1436, 0.1
        %v1439 = vrcp.pop %v1437
        %v1440 = vmul.f32 %v1435, %v1439
        %v1441 = vrcp.pop %v1438
        %v1442 = vmul.f32 %v1436, %v1441
        %1445 = vrot.lane.b32.xlu0 %v1440, 126
        %v1446 = vpop.permute.xlu0 %1445
        %1447 = vrot.lane.b32.xlu0 %v1442, 126
        %v1448 = vpop.permute.xlu0 %1447
        %v1451 = vadd.f32 %v1411, %v1446
        %v1452 = vadd.f32 %v1412, %v1448
        %v1453 = vsub.f32 %v1337, %v157
        %v1454 = vsub.f32 %v1338, %v158
        %v1455 = vsub.f32 %v1339, %v159
        %v1456 = vsub.f32 %v1340, %v160
        %v1457 = vmul.f32 %v1453, %v1453
        %v1458 = vmul.f32 %v1454, %v1454
        %v1459 = vadd.f32 %v1457, 0.81
        %v1460 = vadd.f32 %v1458, 0.81
        %v1461 = vrsqrt.pop %v1459
        %v1462 = vrsqrt.pop %v1460
        %v1463 = vmul.f32 %v1453, %v1461
        %v1464 = vmul.f32 %v1454, %v1462
        %v1465 = vmul.f32 %v1455, %v1455
        %v1466 = vmul.f32 %v1456, %v1456
        %v1467 = vadd.f32 %v1465, 0.81
        %v1468 = vadd.f32 %v1466, 0.81
        %v1469 = vrsqrt.pop %v1467
        %v1470 = vrsqrt.pop %v1468
        %v1471 = vmul.f32 %v1455, %v1469
        %v1472 = vmul.f32 %v1456, %v1470
        %v1473 = vsub.f32 %v1463, %v1471
        %v1474 = vsub.f32 %v1464, %v1472
        %v1475 = vmul.f32 %v1473, %v1473
        %v1476 = vmul.f32 %v1474, %v1474
        %v1477 = vadd.f32 %v1475, 0.1
        %v1478 = vadd.f32 %v1476, 0.1
        %v1479 = vrcp.pop %v1477
        %v1480 = vmul.f32 %v1475, %v1479
        %v1481 = vrcp.pop %v1478
        %v1482 = vmul.f32 %v1476, %v1481
        %1485 = vrot.lane.b32.xlu0 %v1480, 125
        %v1486 = vpop.permute.xlu0 %1485
        %1487 = vrot.lane.b32.xlu0 %v1482, 125
        %v1488 = vpop.permute.xlu0 %1487
        %v1491 = vadd.f32 %v1451, %v1486
        %v1492 = vadd.f32 %v1452, %v1488
        %v1493 = vsub.f32 %v1337, %v358
        %v1494 = vsub.f32 %v1338, %v360
        %v1495 = vsub.f32 %v1339, %v366
        %v1496 = vsub.f32 %v1340, %v368
        %v1497 = vmul.f32 %v1493, %v1493
        %v1498 = vmul.f32 %v1494, %v1494
        %v1499 = vadd.f32 %v1497, 0.81
        %v1500 = vadd.f32 %v1498, 0.81
        %v1501 = vrsqrt.pop %v1499
        %v1502 = vrsqrt.pop %v1500
        %v1503 = vmul.f32 %v1493, %v1501
        %v1504 = vmul.f32 %v1494, %v1502
        %v1505 = vmul.f32 %v1495, %v1495
        %v1506 = vmul.f32 %v1496, %v1496
        %v1507 = vadd.f32 %v1505, 0.81
        %v1508 = vadd.f32 %v1506, 0.81
        %v1509 = vrsqrt.pop %v1507
        %v1510 = vrsqrt.pop %v1508
        %v1511 = vmul.f32 %v1495, %v1509
        %v1512 = vmul.f32 %v1496, %v1510
        %v1513 = vsub.f32 %v1503, %v1511
        %v1514 = vsub.f32 %v1504, %v1512
        %v1515 = vmul.f32 %v1513, %v1513
        %v1516 = vmul.f32 %v1514, %v1514
        %v1517 = vadd.f32 %v1515, 0.1
        %v1518 = vadd.f32 %v1516, 0.1
        %v1519 = vrcp.pop %v1517
        %v1520 = vmul.f32 %v1515, %v1519
        %v1521 = vrcp.pop %v1518
        %v1522 = vmul.f32 %v1516, %v1521
        %1525 = vrot.lane.b32.xlu0 %v1520, 124
        %v1526 = vpop.permute.xlu0 %1525
        %1527 = vrot.lane.b32.xlu0 %v1522, 124
        %v1528 = vpop.permute.xlu0 %1527
        %v1531 = vadd.f32 %v1491, %v1526
        %v1532 = vadd.f32 %v1492, %v1528
        %v1533 = vsub.f32 %v1337, %v410
        %v1534 = vsub.f32 %v1338, %v412
        %v1535 = vsub.f32 %v1339, %v418
        %v1536 = vsub.f32 %v1340, %v420
        %v1537 = vmul.f32 %v1533, %v1533
        %v1538 = vmul.f32 %v1534, %v1534
        %v1539 = vadd.f32 %v1537, 0.81
        %v1540 = vadd.f32 %v1538, 0.81
        %v1541 = vrsqrt.pop %v1539
        %v1542 = vrsqrt.pop %v1540
        %v1543 = vmul.f32 %v1533, %v1541
        %v1544 = vmul.f32 %v1534, %v1542
        %v1545 = vmul.f32 %v1535, %v1535
        %v1546 = vmul.f32 %v1536, %v1536
        %v1547 = vadd.f32 %v1545, 0.81
        %v1548 = vadd.f32 %v1546, 0.81
        %v1549 = vrsqrt.pop %v1547
        %v1550 = vrsqrt.pop %v1548
        %v1551 = vmul.f32 %v1535, %v1549
        %v1552 = vmul.f32 %v1536, %v1550
        %v1553 = vsub.f32 %v1543, %v1551
        %v1554 = vsub.f32 %v1544, %v1552
        %v1555 = vmul.f32 %v1553, %v1553
        %v1556 = vmul.f32 %v1554, %v1554
        %v1557 = vadd.f32 %v1555, 0.1
        %v1558 = vadd.f32 %v1556, 0.1
        %v1559 = vrcp.pop %v1557
        %v1560 = vmul.f32 %v1555, %v1559
        %v1561 = vrcp.pop %v1558
        %v1562 = vmul.f32 %v1556, %v1561
        %1565 = vrot.lane.b32.xlu0 %v1560, 123
        %v1566 = vpop.permute.xlu0 %1565
        %1567 = vrot.lane.b32.xlu0 %v1562, 123
        %v1568 = vpop.permute.xlu0 %1567
        %v1571 = vadd.f32 %v1531, %v1566
        %v1572 = vadd.f32 %v1532, %v1568
        %v1573 = vsub.f32 %v1337, %v462
        %v1574 = vsub.f32 %v1338, %v464
        %v1575 = vsub.f32 %v1339, %v470
        %v1576 = vsub.f32 %v1340, %v472
        %v1577 = vmul.f32 %v1573, %v1573
        %v1578 = vmul.f32 %v1574, %v1574
        %v1579 = vadd.f32 %v1577, 0.81
        %v1580 = vadd.f32 %v1578, 0.81
        %v1581 = vrsqrt.pop %v1579
        %v1582 = vrsqrt.pop %v1580
        %v1583 = vmul.f32 %v1573, %v1581
        %v1584 = vmul.f32 %v1574, %v1582
        %v1585 = vmul.f32 %v1575, %v1575
        %v1586 = vmul.f32 %v1576, %v1576
        %v1587 = vadd.f32 %v1585, 0.81
        %v1588 = vadd.f32 %v1586, 0.81
        %v1589 = vrsqrt.pop %v1587
        %v1590 = vrsqrt.pop %v1588
        %v1591 = vmul.f32 %v1575, %v1589
        %v1592 = vmul.f32 %v1576, %v1590
        %v1593 = vsub.f32 %v1583, %v1591
        %v1594 = vsub.f32 %v1584, %v1592
        %v1595 = vmul.f32 %v1593, %v1593
        %v1596 = vmul.f32 %v1594, %v1594
        %v1597 = vadd.f32 %v1595, 0.1
        %v1598 = vadd.f32 %v1596, 0.1
        %v1599 = vrcp.pop %v1597
        %v1600 = vmul.f32 %v1595, %v1599
        %v1601 = vrcp.pop %v1598
        %v1602 = vmul.f32 %v1596, %v1601
        %1605 = vrot.lane.b32.xlu0 %v1600, 122
        %v1606 = vpop.permute.xlu0 %1605
        %1607 = vrot.lane.b32.xlu0 %v1602, 122
        %v1608 = vpop.permute.xlu0 %1607
        %v1611 = vadd.f32 %v1571, %v1606
        %v1612 = vadd.f32 %v1572, %v1608
        %v1613 = vld [vmem:[%s144 + $0x5] sm:$0xff]
        %v1614 = vld [vmem:[%s144 + $0xd] sm:$0xff]
        %v1615 = vld [vmem:[%s149 + $0x5] sm:$0xff]
        %v1616 = vld [vmem:[%s149 + $0xd] sm:$0xff]
        %v1617 = vsub.f32 %v1613, %v168
        %v1618 = vsub.f32 %v1614, %v170
        %v1619 = vsub.f32 %v1615, %v178
        %v1620 = vsub.f32 %v1616, %v180
        %v1621 = vmul.f32 %v1617, %v1617
        %v1622 = vmul.f32 %v1618, %v1618
        %v1623 = vadd.f32 %v1621, 0.81
        %v1624 = vadd.f32 %v1622, 0.81
        %v1625 = vrsqrt.pop %v1623
        %v1626 = vrsqrt.pop %v1624
        %v1627 = vmul.f32 %v1617, %v1625
        %v1628 = vmul.f32 %v1618, %v1626
        %v1629 = vmul.f32 %v1619, %v1619
        %v1630 = vmul.f32 %v1620, %v1620
        %v1631 = vadd.f32 %v1629, 0.81
        %v1632 = vadd.f32 %v1630, 0.81
        %v1633 = vrsqrt.pop %v1631
        %v1634 = vrsqrt.pop %v1632
        %v1635 = vmul.f32 %v1619, %v1633
        %v1636 = vmul.f32 %v1620, %v1634
        %v1637 = vsub.f32 %v1627, %v1635
        %v1638 = vsub.f32 %v1628, %v1636
        %v1639 = vmul.f32 %v1637, %v1637
        %v1640 = vmul.f32 %v1638, %v1638
        %v1641 = vadd.f32 %v1639, 0.1
        %v1642 = vadd.f32 %v1640, 0.1
        %v1643 = vrcp.pop %v1641
        %v1644 = vmul.f32 %v1639, %v1643
        %v1645 = vrcp.pop %v1642
        %v1646 = vmul.f32 %v1640, %v1645
        %v1647 = vadd.f32 %v1611, %v1644
        %v1648 = vadd.f32 %v1612, %v1646
        %v1649 = vsub.f32 %v1613, %v214
        %v1650 = vsub.f32 %v1614, %v216
        %v1651 = vsub.f32 %v1615, %v222
        %v1652 = vsub.f32 %v1616, %v224
        %v1653 = vmul.f32 %v1649, %v1649
        %v1654 = vmul.f32 %v1650, %v1650
        %v1655 = vadd.f32 %v1653, 0.81
        %v1656 = vadd.f32 %v1654, 0.81
        %v1657 = vrsqrt.pop %v1655
        %v1658 = vrsqrt.pop %v1656
        %v1659 = vmul.f32 %v1649, %v1657
        %v1660 = vmul.f32 %v1650, %v1658
        %v1661 = vmul.f32 %v1651, %v1651
        %v1662 = vmul.f32 %v1652, %v1652
        %v1663 = vadd.f32 %v1661, 0.81
        %v1664 = vadd.f32 %v1662, 0.81
        %v1665 = vrsqrt.pop %v1663
        %v1666 = vrsqrt.pop %v1664
        %v1667 = vmul.f32 %v1651, %v1665
        %v1668 = vmul.f32 %v1652, %v1666
        %v1669 = vsub.f32 %v1659, %v1667
        %v1670 = vsub.f32 %v1660, %v1668
        %v1671 = vmul.f32 %v1669, %v1669
        %v1672 = vmul.f32 %v1670, %v1670
        %v1673 = vadd.f32 %v1671, 0.1
        %v1674 = vadd.f32 %v1672, 0.1
        %v1675 = vrcp.pop %v1673
        %v1676 = vmul.f32 %v1671, %v1675
        %v1677 = vrcp.pop %v1674
        %v1678 = vmul.f32 %v1672, %v1677
        %1681 = vrot.lane.b32.xlu0 %v1676, 127
        %v1682 = vpop.permute.xlu0 %1681
        %1683 = vrot.lane.b32.xlu0 %v1678, 127
        %v1684 = vpop.permute.xlu0 %1683
        %v1687 = vadd.f32 %v1647, %v1682
        %v1688 = vadd.f32 %v1648, %v1684
        %v1689 = vsub.f32 %v1613, %v266
        %v1690 = vsub.f32 %v1614, %v268
        %v1691 = vsub.f32 %v1615, %v274
        %v1692 = vsub.f32 %v1616, %v276
        %v1693 = vmul.f32 %v1689, %v1689
        %v1694 = vmul.f32 %v1690, %v1690
        %v1695 = vadd.f32 %v1693, 0.81
        %v1696 = vadd.f32 %v1694, 0.81
        %v1697 = vrsqrt.pop %v1695
        %v1698 = vrsqrt.pop %v1696
        %v1699 = vmul.f32 %v1689, %v1697
        %v1700 = vmul.f32 %v1690, %v1698
        %v1701 = vmul.f32 %v1691, %v1691
        %v1702 = vmul.f32 %v1692, %v1692
        %v1703 = vadd.f32 %v1701, 0.81
        %v1704 = vadd.f32 %v1702, 0.81
        %v1705 = vrsqrt.pop %v1703
        %v1706 = vrsqrt.pop %v1704
        %v1707 = vmul.f32 %v1691, %v1705
        %v1708 = vmul.f32 %v1692, %v1706
        %v1709 = vsub.f32 %v1699, %v1707
        %v1710 = vsub.f32 %v1700, %v1708
        %v1711 = vmul.f32 %v1709, %v1709
        %v1712 = vmul.f32 %v1710, %v1710
        %v1713 = vadd.f32 %v1711, 0.1
        %v1714 = vadd.f32 %v1712, 0.1
        %v1715 = vrcp.pop %v1713
        %v1716 = vmul.f32 %v1711, %v1715
        %v1717 = vrcp.pop %v1714
        %v1718 = vmul.f32 %v1712, %v1717
        %1721 = vrot.lane.b32.xlu0 %v1716, 126
        %v1722 = vpop.permute.xlu0 %1721
        %1723 = vrot.lane.b32.xlu0 %v1718, 126
        %v1724 = vpop.permute.xlu0 %1723
        %v1727 = vadd.f32 %v1687, %v1722
        %v1728 = vadd.f32 %v1688, %v1724
        %v1729 = vsub.f32 %v1613, %v157
        %v1730 = vsub.f32 %v1614, %v158
        %v1731 = vsub.f32 %v1615, %v159
        %v1732 = vsub.f32 %v1616, %v160
        %v1733 = vmul.f32 %v1729, %v1729
        %v1734 = vmul.f32 %v1730, %v1730
        %v1735 = vadd.f32 %v1733, 0.81
        %v1736 = vadd.f32 %v1734, 0.81
        %v1737 = vrsqrt.pop %v1735
        %v1738 = vrsqrt.pop %v1736
        %v1739 = vmul.f32 %v1729, %v1737
        %v1740 = vmul.f32 %v1730, %v1738
        %v1741 = vmul.f32 %v1731, %v1731
        %v1742 = vmul.f32 %v1732, %v1732
        %v1743 = vadd.f32 %v1741, 0.81
        %v1744 = vadd.f32 %v1742, 0.81
        %v1745 = vrsqrt.pop %v1743
        %v1746 = vrsqrt.pop %v1744
        %v1747 = vmul.f32 %v1731, %v1745
        %v1748 = vmul.f32 %v1732, %v1746
        %v1749 = vsub.f32 %v1739, %v1747
        %v1750 = vsub.f32 %v1740, %v1748
        %v1751 = vmul.f32 %v1749, %v1749
        %v1752 = vmul.f32 %v1750, %v1750
        %v1753 = vadd.f32 %v1751, 0.1
        %v1754 = vadd.f32 %v1752, 0.1
        %v1755 = vrcp.pop %v1753
        %v1756 = vmul.f32 %v1751, %v1755
        %v1757 = vrcp.pop %v1754
        %v1758 = vmul.f32 %v1752, %v1757
        %1761 = vrot.lane.b32.xlu0 %v1756, 125
        %v1762 = vpop.permute.xlu0 %1761
        %1763 = vrot.lane.b32.xlu0 %v1758, 125
        %v1764 = vpop.permute.xlu0 %1763
        %v1767 = vadd.f32 %v1727, %v1762
        %v1768 = vadd.f32 %v1728, %v1764
        %v1769 = vsub.f32 %v1613, %v358
        %v1770 = vsub.f32 %v1614, %v360
        %v1771 = vsub.f32 %v1615, %v366
        %v1772 = vsub.f32 %v1616, %v368
        %v1773 = vmul.f32 %v1769, %v1769
        %v1774 = vmul.f32 %v1770, %v1770
        %v1775 = vadd.f32 %v1773, 0.81
        %v1776 = vadd.f32 %v1774, 0.81
        %v1777 = vrsqrt.pop %v1775
        %v1778 = vrsqrt.pop %v1776
        %v1779 = vmul.f32 %v1769, %v1777
        %v1780 = vmul.f32 %v1770, %v1778
        %v1781 = vmul.f32 %v1771, %v1771
        %v1782 = vmul.f32 %v1772, %v1772
        %v1783 = vadd.f32 %v1781, 0.81
        %v1784 = vadd.f32 %v1782, 0.81
        %v1785 = vrsqrt.pop %v1783
        %v1786 = vrsqrt.pop %v1784
        %v1787 = vmul.f32 %v1771, %v1785
        %v1788 = vmul.f32 %v1772, %v1786
        %v1789 = vsub.f32 %v1779, %v1787
        %v1790 = vsub.f32 %v1780, %v1788
        %v1791 = vmul.f32 %v1789, %v1789
        %v1792 = vmul.f32 %v1790, %v1790
        %v1793 = vadd.f32 %v1791, 0.1
        %v1794 = vadd.f32 %v1792, 0.1
        %v1795 = vrcp.pop %v1793
        %v1796 = vmul.f32 %v1791, %v1795
        %v1797 = vrcp.pop %v1794
        %v1798 = vmul.f32 %v1792, %v1797
        %1801 = vrot.lane.b32.xlu0 %v1796, 124
        %v1802 = vpop.permute.xlu0 %1801
        %1803 = vrot.lane.b32.xlu0 %v1798, 124
        %v1804 = vpop.permute.xlu0 %1803
        %v1807 = vadd.f32 %v1767, %v1802
        %v1808 = vadd.f32 %v1768, %v1804
        %v1809 = vsub.f32 %v1613, %v410
        %v1810 = vsub.f32 %v1614, %v412
        %v1811 = vsub.f32 %v1615, %v418
        %v1812 = vsub.f32 %v1616, %v420
        %v1813 = vmul.f32 %v1809, %v1809
        %v1814 = vmul.f32 %v1810, %v1810
        %v1815 = vadd.f32 %v1813, 0.81
        %v1816 = vadd.f32 %v1814, 0.81
        %v1817 = vrsqrt.pop %v1815
        %v1818 = vrsqrt.pop %v1816
        %v1819 = vmul.f32 %v1809, %v1817
        %v1820 = vmul.f32 %v1810, %v1818
        %v1821 = vmul.f32 %v1811, %v1811
        %v1822 = vmul.f32 %v1812, %v1812
        %v1823 = vadd.f32 %v1821, 0.81
        %v1824 = vadd.f32 %v1822, 0.81
        %v1825 = vrsqrt.pop %v1823
        %v1826 = vrsqrt.pop %v1824
        %v1827 = vmul.f32 %v1811, %v1825
        %v1828 = vmul.f32 %v1812, %v1826
        %v1829 = vsub.f32 %v1819, %v1827
        %v1830 = vsub.f32 %v1820, %v1828
        %v1831 = vmul.f32 %v1829, %v1829
        %v1832 = vmul.f32 %v1830, %v1830
        %v1833 = vadd.f32 %v1831, 0.1
        %v1834 = vadd.f32 %v1832, 0.1
        %v1835 = vrcp.pop %v1833
        %v1836 = vmul.f32 %v1831, %v1835
        %v1837 = vrcp.pop %v1834
        %v1838 = vmul.f32 %v1832, %v1837
        %1841 = vrot.lane.b32.xlu0 %v1836, 123
        %v1842 = vpop.permute.xlu0 %1841
        %1843 = vrot.lane.b32.xlu0 %v1838, 123
        %v1844 = vpop.permute.xlu0 %1843
        %v1847 = vadd.f32 %v1807, %v1842
        %v1848 = vadd.f32 %v1808, %v1844
        %v1849 = vsub.f32 %v1613, %v462
        %v1850 = vsub.f32 %v1614, %v464
        %v1851 = vsub.f32 %v1615, %v470
        %v1852 = vsub.f32 %v1616, %v472
        %v1853 = vmul.f32 %v1849, %v1849
        %v1854 = vmul.f32 %v1850, %v1850
        %v1855 = vadd.f32 %v1853, 0.81
        %v1856 = vadd.f32 %v1854, 0.81
        %v1857 = vrsqrt.pop %v1855
        %v1858 = vrsqrt.pop %v1856
        %v1859 = vmul.f32 %v1849, %v1857
        %v1860 = vmul.f32 %v1850, %v1858
        %v1861 = vmul.f32 %v1851, %v1851
        %v1862 = vmul.f32 %v1852, %v1852
        %v1863 = vadd.f32 %v1861, 0.81
        %v1864 = vadd.f32 %v1862, 0.81
        %v1865 = vrsqrt.pop %v1863
        %v1866 = vrsqrt.pop %v1864
        %v1867 = vmul.f32 %v1851, %v1865
        %v1868 = vmul.f32 %v1852, %v1866
        %v1869 = vsub.f32 %v1859, %v1867
        %v1870 = vsub.f32 %v1860, %v1868
        %v1871 = vmul.f32 %v1869, %v1869
        %v1872 = vmul.f32 %v1870, %v1870
        %v1873 = vadd.f32 %v1871, 0.1
        %v1874 = vadd.f32 %v1872, 0.1
        %v1875 = vrcp.pop %v1873
        %v1876 = vmul.f32 %v1871, %v1875
        %v1877 = vrcp.pop %v1874
        %v1878 = vmul.f32 %v1872, %v1877
        %1881 = vrot.lane.b32.xlu0 %v1876, 122
        %v1882 = vpop.permute.xlu0 %1881
        %1883 = vrot.lane.b32.xlu0 %v1878, 122
        %v1884 = vpop.permute.xlu0 %1883
        %v1887 = vadd.f32 %v1847, %v1882
        %v1888 = vadd.f32 %v1848, %v1884
        %v1889 = vld [vmem:[%s144 + $0x6] sm:$0xff]
        %v1890 = vld [vmem:[%s144 + $0xe] sm:$0xff]
        %v1891 = vld [vmem:[%s149 + $0x6] sm:$0xff]
        %v1892 = vld [vmem:[%s149 + $0xe] sm:$0xff]
        %v1893 = vsub.f32 %v1889, %v168
        %v1894 = vsub.f32 %v1890, %v170
        %v1895 = vsub.f32 %v1891, %v178
        %v1896 = vsub.f32 %v1892, %v180
        %v1897 = vmul.f32 %v1893, %v1893
        %v1898 = vmul.f32 %v1894, %v1894
        %v1899 = vadd.f32 %v1897, 0.81
        %v1900 = vadd.f32 %v1898, 0.81
        %v1901 = vrsqrt.pop %v1899
        %v1902 = vrsqrt.pop %v1900
        %v1903 = vmul.f32 %v1893, %v1901
        %v1904 = vmul.f32 %v1894, %v1902
        %v1905 = vmul.f32 %v1895, %v1895
        %v1906 = vmul.f32 %v1896, %v1896
        %v1907 = vadd.f32 %v1905, 0.81
        %v1908 = vadd.f32 %v1906, 0.81
        %v1909 = vrsqrt.pop %v1907
        %v1910 = vrsqrt.pop %v1908
        %v1911 = vmul.f32 %v1895, %v1909
        %v1912 = vmul.f32 %v1896, %v1910
        %v1913 = vsub.f32 %v1903, %v1911
        %v1914 = vsub.f32 %v1904, %v1912
        %v1915 = vmul.f32 %v1913, %v1913
        %v1916 = vmul.f32 %v1914, %v1914
        %v1917 = vadd.f32 %v1915, 0.1
        %v1918 = vadd.f32 %v1916, 0.1
        %v1919 = vrcp.pop %v1917
        %v1920 = vmul.f32 %v1915, %v1919
        %v1921 = vrcp.pop %v1918
        %v1922 = vmul.f32 %v1916, %v1921
        %v1923 = vadd.f32 %v1887, %v1920
        %v1924 = vadd.f32 %v1888, %v1922
        %v1925 = vsub.f32 %v1889, %v214
        %v1926 = vsub.f32 %v1890, %v216
        %v1927 = vsub.f32 %v1891, %v222
        %v1928 = vsub.f32 %v1892, %v224
        %v1929 = vmul.f32 %v1925, %v1925
        %v1930 = vmul.f32 %v1926, %v1926
        %v1931 = vadd.f32 %v1929, 0.81
        %v1932 = vadd.f32 %v1930, 0.81
        %v1933 = vrsqrt.pop %v1931
        %v1934 = vrsqrt.pop %v1932
        %v1935 = vmul.f32 %v1925, %v1933
        %v1936 = vmul.f32 %v1926, %v1934
        %v1937 = vmul.f32 %v1927, %v1927
        %v1938 = vmul.f32 %v1928, %v1928
        %v1939 = vadd.f32 %v1937, 0.81
        %v1940 = vadd.f32 %v1938, 0.81
        %v1941 = vrsqrt.pop %v1939
        %v1942 = vrsqrt.pop %v1940
        %v1943 = vmul.f32 %v1927, %v1941
        %v1944 = vmul.f32 %v1928, %v1942
        %v1945 = vsub.f32 %v1935, %v1943
        %v1946 = vsub.f32 %v1936, %v1944
        %v1947 = vmul.f32 %v1945, %v1945
        %v1948 = vmul.f32 %v1946, %v1946
        %v1949 = vadd.f32 %v1947, 0.1
        %v1950 = vadd.f32 %v1948, 0.1
        %v1951 = vrcp.pop %v1949
        %v1952 = vmul.f32 %v1947, %v1951
        %v1953 = vrcp.pop %v1950
        %v1954 = vmul.f32 %v1948, %v1953
        %1957 = vrot.lane.b32.xlu0 %v1952, 127
        %v1958 = vpop.permute.xlu0 %1957
        %1959 = vrot.lane.b32.xlu0 %v1954, 127
        %v1960 = vpop.permute.xlu0 %1959
        %v1963 = vadd.f32 %v1923, %v1958
        %v1964 = vadd.f32 %v1924, %v1960
        %v1965 = vsub.f32 %v1889, %v266
        %v1966 = vsub.f32 %v1890, %v268
        %v1967 = vsub.f32 %v1891, %v274
        %v1968 = vsub.f32 %v1892, %v276
        %v1969 = vmul.f32 %v1965, %v1965
        %v1970 = vmul.f32 %v1966, %v1966
        %v1971 = vadd.f32 %v1969, 0.81
        %v1972 = vadd.f32 %v1970, 0.81
        %v1973 = vrsqrt.pop %v1971
        %v1974 = vrsqrt.pop %v1972
        %v1975 = vmul.f32 %v1965, %v1973
        %v1976 = vmul.f32 %v1966, %v1974
        %v1977 = vmul.f32 %v1967, %v1967
        %v1978 = vmul.f32 %v1968, %v1968
        %v1979 = vadd.f32 %v1977, 0.81
        %v1980 = vadd.f32 %v1978, 0.81
        %v1981 = vrsqrt.pop %v1979
        %v1982 = vrsqrt.pop %v1980
        %v1983 = vmul.f32 %v1967, %v1981
        %v1984 = vmul.f32 %v1968, %v1982
        %v1985 = vsub.f32 %v1975, %v1983
        %v1986 = vsub.f32 %v1976, %v1984
        %v1987 = vmul.f32 %v1985, %v1985
        %v1988 = vmul.f32 %v1986, %v1986
        %v1989 = vadd.f32 %v1987, 0.1
        %v1990 = vadd.f32 %v1988, 0.1
        %v1991 = vrcp.pop %v1989
        %v1992 = vmul.f32 %v1987, %v1991
        %v1993 = vrcp.pop %v1990
        %v1994 = vmul.f32 %v1988, %v1993
        %1997 = vrot.lane.b32.xlu0 %v1992, 126
        %v1998 = vpop.permute.xlu0 %1997
        %1999 = vrot.lane.b32.xlu0 %v1994, 126
        %v2000 = vpop.permute.xlu0 %1999
        %v2003 = vadd.f32 %v1963, %v1998
        %v2004 = vadd.f32 %v1964, %v2000
        %v2005 = vsub.f32 %v1889, %v157
        %v2006 = vsub.f32 %v1890, %v158
        %v2007 = vsub.f32 %v1891, %v159
        %v2008 = vsub.f32 %v1892, %v160
        %v2009 = vmul.f32 %v2005, %v2005
        %v2010 = vmul.f32 %v2006, %v2006
        %v2011 = vadd.f32 %v2009, 0.81
        %v2012 = vadd.f32 %v2010, 0.81
        %v2013 = vrsqrt.pop %v2011
        %v2014 = vrsqrt.pop %v2012
        %v2015 = vmul.f32 %v2005, %v2013
        %v2016 = vmul.f32 %v2006, %v2014
        %v2017 = vmul.f32 %v2007, %v2007
        %v2018 = vmul.f32 %v2008, %v2008
        %v2019 = vadd.f32 %v2017, 0.81
        %v2020 = vadd.f32 %v2018, 0.81
        %v2021 = vrsqrt.pop %v2019
        %v2022 = vrsqrt.pop %v2020
        %v2023 = vmul.f32 %v2007, %v2021
        %v2024 = vmul.f32 %v2008, %v2022
        %v2025 = vsub.f32 %v2015, %v2023
        %v2026 = vsub.f32 %v2016, %v2024
        %v2027 = vmul.f32 %v2025, %v2025
        %v2028 = vmul.f32 %v2026, %v2026
        %v2029 = vadd.f32 %v2027, 0.1
        %v2030 = vadd.f32 %v2028, 0.1
        %v2031 = vrcp.pop %v2029
        %v2032 = vmul.f32 %v2027, %v2031
        %v2033 = vrcp.pop %v2030
        %v2034 = vmul.f32 %v2028, %v2033
        %2037 = vrot.lane.b32.xlu0 %v2032, 125
        %v2038 = vpop.permute.xlu0 %2037
        %2039 = vrot.lane.b32.xlu0 %v2034, 125
        %v2040 = vpop.permute.xlu0 %2039
        %v2043 = vadd.f32 %v2003, %v2038
        %v2044 = vadd.f32 %v2004, %v2040
        %v2045 = vsub.f32 %v1889, %v358
        %v2046 = vsub.f32 %v1890, %v360
        %v2047 = vsub.f32 %v1891, %v366
        %v2048 = vsub.f32 %v1892, %v368
        %v2049 = vmul.f32 %v2045, %v2045
        %v2050 = vmul.f32 %v2046, %v2046
        %v2051 = vadd.f32 %v2049, 0.81
        %v2052 = vadd.f32 %v2050, 0.81
        %v2053 = vrsqrt.pop %v2051
        %v2054 = vrsqrt.pop %v2052
        %v2055 = vmul.f32 %v2045, %v2053
        %v2056 = vmul.f32 %v2046, %v2054
        %v2057 = vmul.f32 %v2047, %v2047
        %v2058 = vmul.f32 %v2048, %v2048
        %v2059 = vadd.f32 %v2057, 0.81
        %v2060 = vadd.f32 %v2058, 0.81
        %v2061 = vrsqrt.pop %v2059
        %v2062 = vrsqrt.pop %v2060
        %v2063 = vmul.f32 %v2047, %v2061
        %v2064 = vmul.f32 %v2048, %v2062
        %v2065 = vsub.f32 %v2055, %v2063
        %v2066 = vsub.f32 %v2056, %v2064
        %v2067 = vmul.f32 %v2065, %v2065
        %v2068 = vmul.f32 %v2066, %v2066
        %v2069 = vadd.f32 %v2067, 0.1
        %v2070 = vadd.f32 %v2068, 0.1
        %v2071 = vrcp.pop %v2069
        %v2072 = vmul.f32 %v2067, %v2071
        %v2073 = vrcp.pop %v2070
        %v2074 = vmul.f32 %v2068, %v2073
        %2077 = vrot.lane.b32.xlu0 %v2072, 124
        %v2078 = vpop.permute.xlu0 %2077
        %2079 = vrot.lane.b32.xlu0 %v2074, 124
        %v2080 = vpop.permute.xlu0 %2079
        %v2083 = vadd.f32 %v2043, %v2078
        %v2084 = vadd.f32 %v2044, %v2080
        %v2085 = vsub.f32 %v1889, %v410
        %v2086 = vsub.f32 %v1890, %v412
        %v2087 = vsub.f32 %v1891, %v418
        %v2088 = vsub.f32 %v1892, %v420
        %v2089 = vmul.f32 %v2085, %v2085
        %v2090 = vmul.f32 %v2086, %v2086
        %v2091 = vadd.f32 %v2089, 0.81
        %v2092 = vadd.f32 %v2090, 0.81
        %v2093 = vrsqrt.pop %v2091
        %v2094 = vrsqrt.pop %v2092
        %v2095 = vmul.f32 %v2085, %v2093
        %v2096 = vmul.f32 %v2086, %v2094
        %v2097 = vmul.f32 %v2087, %v2087
        %v2098 = vmul.f32 %v2088, %v2088
        %v2099 = vadd.f32 %v2097, 0.81
        %v2100 = vadd.f32 %v2098, 0.81
        %v2101 = vrsqrt.pop %v2099
        %v2102 = vrsqrt.pop %v2100
        %v2103 = vmul.f32 %v2087, %v2101
        %v2104 = vmul.f32 %v2088, %v2102
        %v2105 = vsub.f32 %v2095, %v2103
        %v2106 = vsub.f32 %v2096, %v2104
        %v2107 = vmul.f32 %v2105, %v2105
        %v2108 = vmul.f32 %v2106, %v2106
        %v2109 = vadd.f32 %v2107, 0.1
        %v2110 = vadd.f32 %v2108, 0.1
        %v2111 = vrcp.pop %v2109
        %v2112 = vmul.f32 %v2107, %v2111
        %v2113 = vrcp.pop %v2110
        %v2114 = vmul.f32 %v2108, %v2113
        %2117 = vrot.lane.b32.xlu0 %v2112, 123
        %v2118 = vpop.permute.xlu0 %2117
        %2119 = vrot.lane.b32.xlu0 %v2114, 123
        %v2120 = vpop.permute.xlu0 %2119
        %v2123 = vadd.f32 %v2083, %v2118
        %v2124 = vadd.f32 %v2084, %v2120
        %v2125 = vsub.f32 %v1889, %v462
        %v2126 = vsub.f32 %v1890, %v464
        %v2127 = vsub.f32 %v1891, %v470
        %v2128 = vsub.f32 %v1892, %v472
        %v2129 = vmul.f32 %v2125, %v2125
        %v2130 = vmul.f32 %v2126, %v2126
        %v2131 = vadd.f32 %v2129, 0.81
        %v2132 = vadd.f32 %v2130, 0.81
        %v2133 = vrsqrt.pop %v2131
        %v2134 = vrsqrt.pop %v2132
        %v2135 = vmul.f32 %v2125, %v2133
        %v2136 = vmul.f32 %v2126, %v2134
        %v2137 = vmul.f32 %v2127, %v2127
        %v2138 = vmul.f32 %v2128, %v2128
        %v2139 = vadd.f32 %v2137, 0.81
        %v2140 = vadd.f32 %v2138, 0.81
        %v2141 = vrsqrt.pop %v2139
        %v2142 = vrsqrt.pop %v2140
        %v2143 = vmul.f32 %v2127, %v2141
        %v2144 = vmul.f32 %v2128, %v2142
        %v2145 = vsub.f32 %v2135, %v2143
        %v2146 = vsub.f32 %v2136, %v2144
        %v2147 = vmul.f32 %v2145, %v2145
        %v2148 = vmul.f32 %v2146, %v2146
        %v2149 = vadd.f32 %v2147, 0.1
        %v2150 = vadd.f32 %v2148, 0.1
        %v2151 = vrcp.pop %v2149
        %v2152 = vmul.f32 %v2147, %v2151
        %v2153 = vrcp.pop %v2150
        %v2154 = vmul.f32 %v2148, %v2153
        %2157 = vrot.lane.b32.xlu0 %v2152, 122
        %v2158 = vpop.permute.xlu0 %2157
        %2159 = vrot.lane.b32.xlu0 %v2154, 122
        %v2160 = vpop.permute.xlu0 %2159
        %v2163 = vadd.f32 %v2123, %v2158
        %v2164 = vadd.f32 %v2124, %v2160
        %v2165 = vld [vmem:[#allocation2] sm:$0xff]
        %v2166 = vld [vmem:[#allocation2 + $0x8] sm:$0xff]
        %v2167 = vadd.f32 %v2165, %v2163
        %v2168 = vadd.f32 %v2166, %v2164
        %vm2169 = vcmask 130048
        %2170 = vst.msk [vmem:[#allocation2] sm:$0xff] %vm2169, %v2167
        %2171 = vst.msk [vmem:[#allocation2 + $0x8] sm:$0xff] %vm2169, %v2168
        %p2172 = scmp.eq.s32.totalorder %s14, 1
        // Predicated region
        $region33: #{tpu_custom_call.1} parent=27 // pred_check
          %p2173 = pneg %p2172
        $region34: #{tpu_custom_call.1} parent=27 // pred_check_branch
          %2175 = sbr.rel (%p2173) target = $region36
        $region35: #{tpu_custom_call.1} parent=27 // pred_region
          %v2176 = vld [vmem:[#allocation2 + $0x1] sm:$0xff]
          %v2177 = vld [vmem:[#allocation2 + $0x9] sm:$0x3f]
          %2180 = vrot.lane.b32.xlu0 %v2176, 127
          %v2181 = vpop.permute.xlu0 %2180
          %2182 = vrot.lane.b32.xlu0 %v2177, 127
          %v2183 = vpop.permute.xlu0 %2182
          %vm2186 = vcmask 113664
          %v2187 = vsel %vm2186, %v2181, 0.0
          %vm2188 = vcmask 111616
          %v2189 = vsel %vm2188, %v2183, 0.0
          %v2190 = vadd.f32 %v2187, %v2189
          %2191 = vadd.xlane.f32.xlu0 %v2190
          %v2192 = vpop.xlane.xlu0 %2191
          %v2193 = vrot.slane %v2192, 4
          %v2194 = vadd.f32 %v2192, %v2193
          %v2195 = vrot.slane %v2194, 2
          %v2196 = vadd.f32 %v2194, %v2195
          %v2197 = vrot.slane %v2196, 1
          %v2198 = vadd.f32 %v2196, %v2197
          %s2199 = vtos %v2198
          %v2200 = vstv %s2199
          %v2201 = vmul.f32 %v2200, 3.9859693e-05
          %vm2202 = vcmask 0
          %2203 = vst.msk [vmem:[#allocation3] sm:$0x1] %vm2202, %v2201
        $region36: #{tpu_custom_call.1} parent=27 // pred_fallthru
          _
        // Predicated region
        $region37: #{tpu_custom_call.1} parent=27 // pred_check
          %p2204 = pneg %p79
        $region38: #{tpu_custom_call.1} parent=27 // pred_check_branch
          %2206 = sbr.rel (%p2204) target = $region40
        $region39: #{tpu_custom_call.1} parent=27 // pred_region
          %s2208 = ssub.s32 16, 16
          %2209 = vsyncadd [#allocation4], %s2208
          %s2211 = sshll.u32 [#allocation3], 4
          %s2212 = int_to_ptr.vmem [resolvable:$true] %s2211
          %2214 = dma.vmem_to_hbm [thread:$0]  %s2212, 16, %s2, [#allocation4]
        $region40: #{tpu_custom_call.1} parent=27 // pred_fallthru
          _
        // Predicated region
        $region41: #{tpu_custom_call.1} parent=27 // pred_check
          %p2215 = pneg %p79
        $region42: #{tpu_custom_call.1} parent=27 // pred_check_branch
          %2217 = sbr.rel (%p2215) target = $region44
        $region43: #{tpu_custom_call.1} parent=27 // pred_region
          %2218 = dma.done [#allocation4], 16
        $region44: #{tpu_custom_call.1} parent=27 // pred_fallthru
          _
      $region28: #{tpu_custom_call.1} parent=5 // pred_fallthru
        _
      %p2219 = scmp.le.s32.totalorder 2, %s9
      // Predicated region
      $region45: #{tpu_custom_call.1} parent=5 // pred_check
        %p2220 = pneg %p2219
      $region46: #{tpu_custom_call.1} parent=5 // pred_check_branch
        %2222 = sbr.rel (%p2220) target = $region48
      $region47: #{tpu_custom_call.1} parent=5 // pred_region
        %s2223 = ssub.s32 %s9, 2
      $region48: #{tpu_custom_call.1} parent=5 // pred_fallthru
        _
    $region6: #{tpu_custom_call.1} parent=1 // loop_footer
      %s13 = sadd.s32 1, %s9
    $region7: #{tpu_custom_call.1} parent=1 // loop_footer_branch
      %8 = sbr.rel target = $region3
    $region8: #{tpu_custom_call.1} parent=1 // loop_exit
      _
    %2224 = vsyncpa [#allocation4], 1
    %s2225 = scalar_lea.sflag [#allocation4], 1
    %2226 = vsyncpa %s2225, 1

</llo_original>
